<compile_context>
chip_gen: v6e
topology: v6e:2x2x1
jax: 0.10.0
libtpu: 0.0.40
codegen_flags: <defaults>
</compile_context>

<pallas_src>
import math
from functools import partial

import jax
import jax.numpy as jnp
from jax.experimental import pallas as pl
from jax.experimental.pallas import tpu as pltpu


# ----------------------------- Pallas kernel ------------------------------ #
def _block_collection_kernel(
    x_ref,            # (Bt, S, D)   input activations (read only at l == 0)
    wqkv_ref,         # (1, D, 3D)   bf16 fused q|k|v (1/sqrt(Dh) folded into q)
    bqkv_ref,         # (1, 1, 3D)   f32
    wo_ref,           # (1, D, D)    bf16 output projection
    w1_ref,           # (1, D, M)    bf16
    b1_ref,           # (1, 1, M)    f32
    w2_ref,           # (1, M, D)    bf16
    vecs_ref,         # (1, 8, D)    f32 [ln1_g, ln1_b, ln2_g, ln2_b, bo, b2, 0, 0]
    out_ref,          # (1, Bt, S, D) hidden state of this layer
    x_sc,             # VMEM (Bt*S, D) f32 activation carried across the layer axis
    *, num_heads: int, eps: float,
):
    l = pl.program_id(1)
    Bt, S, D = x_ref.shape
    H = num_heads
    Dh = D // H
    R = Bt * S
    f32, bf16 = jnp.float32, jnp.bfloat16

    @pl.when(l == 0)
    def _():
        x_sc[...] = x_ref[...].reshape(R, D).astype(f32)

    x = x_sc[...]                               # (R, D) f32

    # Load the packed per-layer vectors once (hoisted; no re-broadcast later).
    vecs = vecs_ref[0]                          # (8, D) f32
    ln1_g, ln1_b = vecs[0:1, :], vecs[1:2, :]
    ln2_g, ln2_b = vecs[2:3, :], vecs[3:4, :]
    bo, b2 = vecs[4:5, :], vecs[5:6, :]

    def layernorm(v, g, b):
        mu = jnp.mean(v, axis=-1, keepdims=True)
        c = v - mu
        var = jnp.mean(c * c, axis=-1, keepdims=True)
        return c * jax.lax.rsqrt(var + eps) * g + b

    # ---- attention branch -------------------------------------------------
    h = layernorm(x, ln1_g, ln1_b)                               # f32
    qkv = jnp.dot(h.astype(bf16), wqkv_ref[0],
                  preferred_element_type=f32) + bqkv_ref[0]      # (R, 3D) f32

    def to_heads(m):                            # (S, D) -> (H, S, Dh) bf16
        return jnp.transpose(m.reshape(S, H, Dh), (1, 0, 2)).astype(bf16)

    # Attention is per batch element (no key leakage across batch); Bt is a
    # small static count so this loop fully unrolls.
    o_rows = []
    for b in range(Bt):
        qkv_b = qkv[b * S:(b + 1) * S]           # (S, 3D) sublane slice
        qh = to_heads(qkv_b[:, :D])
        kh = to_heads(qkv_b[:, D:2 * D])
        vh = to_heads(qkv_b[:, 2 * D:])

        s = jnp.einsum("hqd,hkd->hqk", qh, kh,
                       preferred_element_type=f32)               # (H, S, S) f32
        mx = jnp.max(s, axis=-1, keepdims=True)
        p = jnp.exp(s - mx)
        # approx reciprocal goes to the otherwise-idle EUP slot.
        p = p * pl.reciprocal(jnp.sum(p, axis=-1, keepdims=True), approx=True)
        o = jnp.einsum("hqk,hkd->hqd", p.astype(bf16), vh,
                       preferred_element_type=f32)               # (H, S, Dh) f32
        # back to token-major rows, head-major channels (matches wo's row order)
        o_rows.append(jnp.transpose(o, (1, 0, 2)).reshape(S, D))
    o_flat = o_rows[0] if Bt == 1 else jnp.concatenate(o_rows, axis=0)  # (R, D)

    # Single K=D output projection (no (H,S,D) intermediate, no per-head sum).
    attn = jnp.dot(o_flat.astype(bf16), wo_ref[0],
                   preferred_element_type=f32) + bo              # (R, D) f32
    x1 = x + attn

    # ---- MLP branch (QuickGELU) --------------------------------------------
    h2 = layernorm(x1, ln2_g, ln2_b)
    g = jnp.dot(h2.astype(bf16), w1_ref[0],
                preferred_element_type=f32) + b1_ref[0]          # (R, M) f32
    g = g * jax.nn.sigmoid(1.702 * g)                            # QuickGELU, f32
    y = x1 + jnp.dot(g.astype(bf16), w2_ref[0],
                     preferred_element_type=f32) + b2

    x_sc[...] = y
    out_ref[0] = y.reshape(Bt, S, D).astype(out_ref.dtype)


# ------------------------------- wrapper ----------------------------------- #
def block_collection(x, layer_params, *, num_heads, eps=1e-5,
                     batch_tile=None, vmem_limit_bytes=48 * 1024 * 1024):
    """BlockCollection.forward: returns list of per-layer hidden states.

    batch_tile: rows of the batch processed per grid step (default: whole
    batch -> per-layer weights DMA'd once per layer).  On v7x set
    batch_tile = B // 2 so the leading 'parallel' axis spans both TensorCores.
    """
    B, S, D = x.shape
    L = len(layer_params)
    Dh = D // num_heads
    M = layer_params[0]["w1"].shape[-1]
    Bt = B if batch_tile is None else batch_tile
    assert B % Bt == 0, "batch must be divisible by batch_tile"
    NB = B // Bt

    scale = 1.0 / math.sqrt(Dh)
    f32, bf16 = jnp.float32, jnp.bfloat16

    # Pack per-layer params: fused QKV (scale folded into q), bf16 weights,
    # one (8, D) f32 vector slab for the LN/bias vectors.
    def pack(p):
        wqkv = jnp.concatenate(
            [p["wq"].astype(f32) * scale, p["wk"], p["wv"]], axis=-1).astype(bf16)
        bqkv = jnp.concatenate(
            [p["bq"].astype(f32) * scale, p["bk"], p["bv"]], axis=-1).astype(f32)
        vecs = jnp.concatenate(
            [p["ln1_g"], p["ln1_b"], p["ln2_g"], p["ln2_b"], p["bo"], p["b2"],
             jnp.zeros((2, D), f32)], axis=0).astype(f32)          # (8, D)
        return (wqkv, bqkv, p["wo"].astype(bf16),
                p["w1"].astype(bf16), p["b1"].astype(f32),
                p["w2"].astype(bf16), vecs)

    wqkv, bqkv, wo, w1, b1, w2, vecs = (
        jnp.stack(a) for a in zip(*(pack(p) for p in layer_params)))

    in_specs = [
        pl.BlockSpec((Bt, S, D),     lambda nb, l: (nb, 0, 0)),      # x
        pl.BlockSpec((1, D, 3 * D),  lambda nb, l: (l, 0, 0)),       # wqkv
        pl.BlockSpec((1, 1, 3 * D),  lambda nb, l: (l, 0, 0)),       # bqkv
        pl.BlockSpec((1, D, D),      lambda nb, l: (l, 0, 0)),       # wo
        pl.BlockSpec((1, D, M),      lambda nb, l: (l, 0, 0)),       # w1
        pl.BlockSpec((1, 1, M),      lambda nb, l: (l, 0, 0)),       # b1
        pl.BlockSpec((1, M, D),      lambda nb, l: (l, 0, 0)),       # w2
        pl.BlockSpec((1, 8, D),      lambda nb, l: (l, 0, 0)),       # vecs
    ]
    out_spec = pl.BlockSpec((1, Bt, S, D), lambda nb, l: (l, nb, 0, 0))

    kernel = partial(_block_collection_kernel, num_heads=num_heads, eps=eps)
    out = pl.pallas_call(
        kernel,
        # Hidden states could be emitted in bf16 (halves the L*B*S*D HBM
        # writeback) if downstream consumers tolerate it.
        out_shape=jax.ShapeDtypeStruct((L, B, S, D), x.dtype),
        grid_spec=pltpu.PrefetchScalarGridSpec(
            num_scalar_prefetch=0,
            grid=(NB, L),                      # layer axis last: activation carry
            in_specs=in_specs,
            out_specs=out_spec,
            scratch_shapes=[pltpu.VMEM((Bt * S, D), jnp.float32)],
        ),
        compiler_params=pltpu.CompilerParams(
            dimension_semantics=("parallel", "arbitrary"),
            vmem_limit_bytes=vmem_limit_bytes,
        ),
    )(x, wqkv, bqkv, wo, w1, b1, w2, vecs)

    return [out[l] for l in range(L)]


# --------------------------- reference (pure JAX) -------------------------- #
def _ref_block(x, p, num_heads, eps=1e-5):
    D = x.shape[-1]
    hd = D // num_heads

    def ln(v, g, b):
        mu = v.mean(-1, keepdims=True)
        var = ((v - mu) ** 2).mean(-1, keepdims=True)
        return (v - mu) / jnp.sqrt(var + eps) * g + b

    h = ln(x, p["ln1_g"], p["ln1_b"])
    q = h @ p["wq"] + p["bq"]
    k = h @ p["wk"] + p["bk"]
    v = h @ p["wv"] + p["bv"]
    B, S, _ = x.shape
    q = q.reshape(B, S, num_heads, hd).transpose(0, 2, 1, 3)
    k = k.reshape(B, S, num_heads, hd).transpose(0, 2, 1, 3)
    v = v.reshape(B, S, num_heads, hd).transpose(0, 2, 1, 3)
    s = jnp.einsum("bhqd,bhkd->bhqk", q, k) / math.sqrt(hd)
    a = jax.nn.softmax(s, axis=-1)
    o = jnp.einsum("bhqk,bhkd->bhqd", a, v).transpose(0, 2, 1, 3).reshape(B, S, D)
    x1 = x + (o @ p["wo"] + p["bo"])
    h2 = ln(x1, p["ln2_g"], p["ln2_b"])
    g = h2 @ p["w1"] + p["b1"]
    g = g * jax.nn.sigmoid(1.702 * g)
    return x1 + (g @ p["w2"] + p["b2"])


# --------------------------------- main ------------------------------------ #
def _init_layer_params(key, D, M):
    ks = jax.random.split(key, 8)
    sc = 0.02
    return {
        "ln1_g": jnp.ones((1, D), jnp.float32),
        "ln1_b": jnp.zeros((1, D), jnp.float32),
        "wq": sc * jax.random.normal(ks[0], (D, D), jnp.float32),
        "bq": sc * jax.random.normal(ks[1], (1, D), jnp.float32),
        "wk": sc * jax.random.normal(ks[2], (D, D), jnp.float32),
        "bk": jnp.zeros((1, D), jnp.float32),
        "wv": sc * jax.random.normal(ks[3], (D, D), jnp.float32),
        "bv": jnp.zeros((1, D), jnp.float32),
        "wo": sc * jax.random.normal(ks[4], (D, D), jnp.float32),
        "bo": jnp.zeros((1, D), jnp.float32),
        "ln2_g": jnp.ones((1, D), jnp.float32),
        "ln2_b": jnp.zeros((1, D), jnp.float32),
        "w1": sc * jax.random.normal(ks[5], (D, M), jnp.float32),
        "b1": sc * jax.random.normal(ks[6], (1, M), jnp.float32),
        "w2": sc * jax.random.normal(ks[7], (M, D), jnp.float32),
        "b2": jnp.zeros((1, D), jnp.float32),
    }


if __name__ == "__main__":
    # Small synthetic config (scaled-down VisionBackboneConfig). D=128 keeps the
    # output last dim lane-dense; S=16 keeps sublane extents 8-aligned.
    B, S, D, H, M, L = 2, 16, 128, 4, 256, 3
    eps = 1e-5

    root = jax.random.PRNGKey(0)
    x_key, *layer_keys = jax.random.split(root, L + 1)
    x = jax.random.normal(x_key, (B, S, D), jnp.float32)
    layer_params = [_init_layer_params(k, D, M) for k in layer_keys]

    hidden_states = block_collection(x, layer_params, num_heads=H, eps=eps)
    for hs in hidden_states:
        jax.block_until_ready(hs)

    # Sanity check vs a pure-f32 reference (tolerance accommodates bf16 MXU
    # operands and the approx EUP reciprocal in the softmax denominator).
    xr = x
    for p, hs in zip(layer_params, hidden_states):
        xr = _ref_block(xr, p, H, eps)
        assert jnp.allclose(xr, hs, atol=2e-2, rtol=2e-2), "mismatch vs reference"

    print("KERNEL_OK")
</pallas_src>

<mosaic_0001>
module attributes {stable_mosaic.version = 11 : i64} {
  func.func @_block_collection_kernel(%arg0: i32, %arg1: i32, %arg2: memref<2x16x128xf32, #tpu.memory_space<vmem>>, %arg3: memref<1x128x384xbf16, #tpu.memory_space<vmem>>, %arg4: memref<1x1x384xf32, #tpu.memory_space<vmem>>, %arg5: memref<1x128x128xbf16, #tpu.memory_space<vmem>>, %arg6: memref<1x128x256xbf16, #tpu.memory_space<vmem>>, %arg7: memref<1x1x256xf32, #tpu.memory_space<vmem>>, %arg8: memref<1x256x128xbf16, #tpu.memory_space<vmem>>, %arg9: memref<1x8x128xf32, #tpu.memory_space<vmem>>, %arg10: memref<1x2x16x128xf32, #tpu.memory_space<vmem>>, %arg11: memref<32x128xf32, #tpu.memory_space<vmem>>) attributes {dimension_semantics = [#tpu.dimension_semantics<parallel>, #tpu.dimension_semantics<arbitrary>], iteration_bounds = array<i64: 1, 3>, scalar_prefetch = 0 : i64, scratch_operands = 1 : i64, tpu.core_type = #tpu.core_type<tc>, window_params = [{transform_indices = @transform_0, window_bounds = array<i64: 2, 16, 128>}, {transform_indices = @transform_1, window_bounds = array<i64: 1, 128, 384>}, {transform_indices = @transform_2, window_bounds = array<i64: 1, 1, 384>}, {transform_indices = @transform_3, window_bounds = array<i64: 1, 128, 128>}, {transform_indices = @transform_4, window_bounds = array<i64: 1, 128, 256>}, {transform_indices = @transform_5, window_bounds = array<i64: 1, 1, 256>}, {transform_indices = @transform_6, window_bounds = array<i64: 1, 256, 128>}, {transform_indices = @transform_7, window_bounds = array<i64: 1, 8, 128>}, {transform_indices = @transform_8, window_bounds = array<i64: 1, 2, 16, 128>}]} {
    %c0_i32 = arith.constant 0 : i32
    %0 = arith.cmpi eq, %arg1, %c0_i32 : i32
    %1 = arith.extui %0 : i1 to i32
    %c0_i32_0 = arith.constant 0 : i32
    %2 = arith.cmpi ne, %1, %c0_i32_0 : i32
    scf.if %2 {
      %c0_52 = arith.constant 0 : index
      %c0_53 = arith.constant 0 : index
      %c0_54 = arith.constant 0 : index
      %152 = vector.load %arg2[%c0_52, %c0_53, %c0_54] : memref<2x16x128xf32, #tpu.memory_space<vmem>>, vector<2x16x128xf32>
      %153 = vector.shape_cast %152 : vector<2x16x128xf32> to vector<32x128xf32>
      %c0_55 = arith.constant 0 : index
      %c0_56 = arith.constant 0 : index
      %154 = vector.load %arg11[%c0_55, %c0_56] : memref<32x128xf32, #tpu.memory_space<vmem>>, vector<32x128xf32>
      tpu.vector_store %arg11[%c0_55, %c0_56], %153 {strides = array<i32>} : memref<32x128xf32, #tpu.memory_space<vmem>>, vector<32x128xf32>,
    } else {
    }
    %c0 = arith.constant 0 : index
    %c0_1 = arith.constant 0 : index
    %3 = vector.load %arg11[%c0, %c0_1] : memref<32x128xf32, #tpu.memory_space<vmem>>, vector<32x128xf32>
    %c0_2 = arith.constant 0 : index
    %c0_3 = arith.constant 0 : index
    %c0_4 = arith.constant 0 : index
    %4 = vector.load %arg9[%c0_2, %c0_3, %c0_4] : memref<1x8x128xf32, #tpu.memory_space<vmem>>, vector<1x8x128xf32>
    %5 = vector.shape_cast %4 : vector<1x8x128xf32> to vector<8x128xf32>
    %6 = vector.extract_strided_slice %5 {offsets = [0, 0], sizes = [1, 128], strides = [1, 1]} : vector<8x128xf32> to vector<1x128xf32>
    %7 = vector.extract_strided_slice %5 {offsets = [1, 0], sizes = [1, 128], strides = [1, 1]} : vector<8x128xf32> to vector<1x128xf32>
    %8 = vector.extract_strided_slice %5 {offsets = [2, 0], sizes = [1, 128], strides = [1, 1]} : vector<8x128xf32> to vector<1x128xf32>
    %9 = vector.extract_strided_slice %5 {offsets = [3, 0], sizes = [1, 128], strides = [1, 1]} : vector<8x128xf32> to vector<1x128xf32>
    %10 = vector.extract_strided_slice %5 {offsets = [4, 0], sizes = [1, 128], strides = [1, 1]} : vector<8x128xf32> to vector<1x128xf32>
    %11 = vector.extract_strided_slice %5 {offsets = [5, 0], sizes = [1, 128], strides = [1, 1]} : vector<8x128xf32> to vector<1x128xf32>
    %cst = arith.constant dense<0.000000e+00> : vector<32xf32>
    %12 = vector.multi_reduction <add>, %3, %cst [1] : vector<32x128xf32> to vector<32xf32>
    %13 = vector.shape_cast %12 : vector<32xf32> to vector<32x1xf32>
    %cst_5 = arith.constant 1.280000e+02 : f32
    %14 = vector.broadcast %cst_5 : f32 to vector<32x1xf32>
    %15 = arith.divf %13, %14 : vector<32x1xf32>
    %16 = vector.broadcast %15 : vector<32x1xf32> to vector<32x128xf32>
    %17 = arith.subf %3, %16 : vector<32x128xf32>
    %18 = arith.mulf %17, %17 : vector<32x128xf32>
    %cst_6 = arith.constant dense<0.000000e+00> : vector<32xf32>
    %19 = vector.multi_reduction <add>, %18, %cst_6 [1] : vector<32x128xf32> to vector<32xf32>
    %20 = vector.shape_cast %19 : vector<32xf32> to vector<32x1xf32>
    %cst_7 = arith.constant 1.280000e+02 : f32
    %21 = vector.broadcast %cst_7 : f32 to vector<32x1xf32>
    %22 = arith.divf %20, %21 : vector<32x1xf32>
    %cst_8 = arith.constant 9.99999974E-6 : f32
    %23 = vector.broadcast %cst_8 : f32 to vector<32x1xf32>
    %24 = arith.addf %22, %23 : vector<32x1xf32>
    %25 = math.rsqrt %24 : vector<32x1xf32>
    %26 = vector.broadcast %25 : vector<32x1xf32> to vector<32x128xf32>
    %27 = arith.mulf %17, %26 : vector<32x128xf32>
    %28 = vector.broadcast %6 : vector<1x128xf32> to vector<32x128xf32>
    %29 = arith.mulf %27, %28 : vector<32x128xf32>
    %30 = vector.broadcast %7 : vector<1x128xf32> to vector<32x128xf32>
    %31 = arith.addf %29, %30 : vector<32x128xf32>
    %32 = arith.truncf %31 : vector<32x128xf32> to vector<32x128xbf16>
    %c0_9 = arith.constant 0 : index
    %c0_10 = arith.constant 0 : index
    %c0_11 = arith.constant 0 : index
    %33 = vector.load %arg3[%c0_9, %c0_10, %c0_11] : memref<1x128x384xbf16, #tpu.memory_space<vmem>>, vector<1x128x384xbf16>
    %34 = vector.shape_cast %33 : vector<1x128x384xbf16> to vector<128x384xbf16>
    %cst_12 = arith.constant dense<0.000000e+00> : vector<32x384xf32>
    %35 = tpu.matmul %32, %34, %cst_12 {dimension_numbers = #tpu.dot_dimension_numbers<[1], [0], [0], [1], [0, 0, 1, 1], [], []>} : vector<32x128xbf16>, vector<128x384xbf16>, vector<32x384xf32> -> vector<32x384xf32>
    %c0_13 = arith.constant 0 : index
    %c0_14 = arith.constant 0 : index
    %c0_15 = arith.constant 0 : index
    %36 = vector.load %arg4[%c0_13, %c0_14, %c0_15] : memref<1x1x384xf32, #tpu.memory_space<vmem>>, vector<1x1x384xf32>
    %37 = vector.shape_cast %36 : vector<1x1x384xf32> to vector<1x384xf32>
    %38 = vector.broadcast %37 : vector<1x384xf32> to vector<32x384xf32>
    %39 = arith.addf %35, %38 : vector<32x384xf32>
    %40 = vector.extract_strided_slice %39 {offsets = [0, 0], sizes = [16, 384], strides = [1, 1]} : vector<32x384xf32> to vector<16x384xf32>
    %41 = vector.extract_strided_slice %40 {offsets = [0, 0], sizes = [16, 128], strides = [1, 1]} : vector<16x384xf32> to vector<16x128xf32>
    %42 = vector.shape_cast %41 : vector<16x128xf32> to vector<16x4x32xf32>
    %43 = tpu.transpose %42, [1, 0, 2] : vector<16x4x32xf32> -> vector<4x16x32xf32>
    %44 = arith.truncf %43 : vector<4x16x32xf32> to vector<4x16x32xbf16>
    %45 = vector.extract_strided_slice %40 {offsets = [0, 128], sizes = [16, 128], strides = [1, 1]} : vector<16x384xf32> to vector<16x128xf32>
    %46 = vector.shape_cast %45 : vector<16x128xf32> to vector<16x4x32xf32>
    %47 = tpu.transpose %46, [1, 0, 2] : vector<16x4x32xf32> -> vector<4x16x32xf32>
    %48 = arith.truncf %47 : vector<4x16x32xf32> to vector<4x16x32xbf16>
    %49 = vector.extract_strided_slice %40 {offsets = [0, 256], sizes = [16, 128], strides = [1, 1]} : vector<16x384xf32> to vector<16x128xf32>
    %50 = vector.shape_cast %49 : vector<16x128xf32> to vector<16x4x32xf32>
    %51 = tpu.transpose %50, [1, 0, 2] : vector<16x4x32xf32> -> vector<4x16x32xf32>
    %52 = arith.truncf %51 : vector<4x16x32xf32> to vector<4x16x32xbf16>
    "tpu.trace_start"() <{level = 10 : i32, message = "hqd,hkd->hqk"}> : () -> ()
    %cst_16 = arith.constant dense<0.000000e+00> : vector<4x16x16xf32>
    %53 = tpu.matmul %44, %48, %cst_16 {dimension_numbers = #tpu.dot_dimension_numbers<[2], [2], [1], [1], [0, 0, 0, 1, 1, 1], [0], [0]>} : vector<4x16x32xbf16>, vector<4x16x32xbf16>, vector<4x16x16xf32> -> vector<4x16x16xf32>
    "tpu.trace_stop"() : () -> ()
    %cst_17 = arith.constant dense<0xFF800000> : vector<4x16xf32>
    %54 = vector.multi_reduction <maximumf>, %53, %cst_17 [2] : vector<4x16x16xf32> to vector<4x16xf32>
    %55 = vector.shape_cast %54 : vector<4x16xf32> to vector<4x16x1xf32>
    %56 = vector.broadcast %55 : vector<4x16x1xf32> to vector<4x16x16xf32>
    %57 = arith.subf %53, %56 : vector<4x16x16xf32>
    %58 = math.exp %57 : vector<4x16x16xf32>
    %cst_18 = arith.constant dense<0.000000e+00> : vector<4x16xf32>
    %59 = vector.multi_reduction <add>, %58, %cst_18 [2] : vector<4x16x16xf32> to vector<4x16xf32>
    %60 = vector.shape_cast %59 : vector<4x16xf32> to vector<4x16x1xf32>
    %61 = tpu.reciprocal %60 {approx = true} : vector<4x16x1xf32> -> vector<4x16x1xf32>
    %62 = vector.broadcast %61 : vector<4x16x1xf32> to vector<4x16x16xf32>
    %63 = arith.mulf %58, %62 : vector<4x16x16xf32>
    %64 = arith.truncf %63 : vector<4x16x16xf32> to vector<4x16x16xbf16>
    "tpu.trace_start"() <{level = 10 : i32, message = "hqk,hkd->hqd"}> : () -> ()
    %cst_19 = arith.constant dense<0.000000e+00> : vector<4x16x32xf32>
    %65 = tpu.matmul %64, %52, %cst_19 {dimension_numbers = #tpu.dot_dimension_numbers<[2], [1], [1], [2], [0, 0, 0, 1, 1, 2], [0], [0]>} : vector<4x16x16xbf16>, vector<4x16x32xbf16>, vector<4x16x32xf32> -> vector<4x16x32xf32>
    "tpu.trace_stop"() : () -> ()
    %66 = tpu.transpose %65, [1, 0, 2] : vector<4x16x32xf32> -> vector<16x4x32xf32>
    %67 = vector.shape_cast %66 : vector<16x4x32xf32> to vector<16x128xf32>
    %68 = vector.extract_strided_slice %39 {offsets = [16, 0], sizes = [16, 384], strides = [1, 1]} : vector<32x384xf32> to vector<16x384xf32>
    %69 = vector.extract_strided_slice %68 {offsets = [0, 0], sizes = [16, 128], strides = [1, 1]} : vector<16x384xf32> to vector<16x128xf32>
    %70 = vector.shape_cast %69 : vector<16x128xf32> to vector<16x4x32xf32>
    %71 = tpu.transpose %70, [1, 0, 2] : vector<16x4x32xf32> -> vector<4x16x32xf32>
    %72 = arith.truncf %71 : vector<4x16x32xf32> to vector<4x16x32xbf16>
    %73 = vector.extract_strided_slice %68 {offsets = [0, 128], sizes = [16, 128], strides = [1, 1]} : vector<16x384xf32> to vector<16x128xf32>
    %74 = vector.shape_cast %73 : vector<16x128xf32> to vector<16x4x32xf32>
    %75 = tpu.transpose %74, [1, 0, 2] : vector<16x4x32xf32> -> vector<4x16x32xf32>
    %76 = arith.truncf %75 : vector<4x16x32xf32> to vector<4x16x32xbf16>
    %77 = vector.extract_strided_slice %68 {offsets = [0, 256], sizes = [16, 128], strides = [1, 1]} : vector<16x384xf32> to vector<16x128xf32>
    %78 = vector.shape_cast %77 : vector<16x128xf32> to vector<16x4x32xf32>
    %79 = tpu.transpose %78, [1, 0, 2] : vector<16x4x32xf32> -> vector<4x16x32xf32>
    %80 = arith.truncf %79 : vector<4x16x32xf32> to vector<4x16x32xbf16>
    "tpu.trace_start"() <{level = 10 : i32, message = "hqd,hkd->hqk"}> : () -> ()
    %cst_20 = arith.constant dense<0.000000e+00> : vector<4x16x16xf32>
    %81 = tpu.matmul %72, %76, %cst_20 {dimension_numbers = #tpu.dot_dimension_numbers<[2], [2], [1], [1], [0, 0, 0, 1, 1, 1], [0], [0]>} : vector<4x16x32xbf16>, vector<4x16x32xbf16>, vector<4x16x16xf32> -> vector<4x16x16xf32>
    "tpu.trace_stop"() : () -> ()
    %cst_21 = arith.constant dense<0xFF800000> : vector<4x16xf32>
    %82 = vector.multi_reduction <maximumf>, %81, %cst_21 [2] : vector<4x16x16xf32> to vector<4x16xf32>
    %83 = vector.shape_cast %82 : vector<4x16xf32> to vector<4x16x1xf32>
    %84 = vector.broadcast %83 : vector<4x16x1xf32> to vector<4x16x16xf32>
    %85 = arith.subf %81, %84 : vector<4x16x16xf32>
    %86 = math.exp %85 : vector<4x16x16xf32>
    %cst_22 = arith.constant dense<0.000000e+00> : vector<4x16xf32>
    %87 = vector.multi_reduction <add>, %86, %cst_22 [2] : vector<4x16x16xf32> to vector<4x16xf32>
    %88 = vector.shape_cast %87 : vector<4x16xf32> to vector<4x16x1xf32>
    %89 = tpu.reciprocal %88 {approx = true} : vector<4x16x1xf32> -> vector<4x16x1xf32>
    %90 = vector.broadcast %89 : vector<4x16x1xf32> to vector<4x16x16xf32>
    %91 = arith.mulf %86, %90 : vector<4x16x16xf32>
    %92 = arith.truncf %91 : vector<4x16x16xf32> to vector<4x16x16xbf16>
    "tpu.trace_start"() <{level = 10 : i32, message = "hqk,hkd->hqd"}> : () -> ()
    %cst_23 = arith.constant dense<0.000000e+00> : vector<4x16x32xf32>
    %93 = tpu.matmul %92, %80, %cst_23 {dimension_numbers = #tpu.dot_dimension_numbers<[2], [1], [1], [2], [0, 0, 0, 1, 1, 2], [0], [0]>} : vector<4x16x16xbf16>, vector<4x16x32xbf16>, vector<4x16x32xf32> -> vector<4x16x32xf32>
    "tpu.trace_stop"() : () -> ()
    %94 = tpu.transpose %93, [1, 0, 2] : vector<4x16x32xf32> -> vector<16x4x32xf32>
    %95 = vector.shape_cast %94 : vector<16x4x32xf32> to vector<16x128xf32>
    %96 = tpu.concatenate %67, %95 in 0 : vector<16x128xf32>, vector<16x128xf32> -> vector<32x128xf32>
    %97 = arith.truncf %96 : vector<32x128xf32> to vector<32x128xbf16>
    %c0_24 = arith.constant 0 : index
    %c0_25 = arith.constant 0 : index
    %c0_26 = arith.constant 0 : index
    %98 = vector.load %arg5[%c0_24, %c0_25, %c0_26] : memref<1x128x128xbf16, #tpu.memory_space<vmem>>, vector<1x128x128xbf16>
    %99 = vector.shape_cast %98 : vector<1x128x128xbf16> to vector<128x128xbf16>
    %cst_27 = arith.constant dense<0.000000e+00> : vector<32x128xf32>
    %100 = tpu.matmul %97, %99, %cst_27 {dimension_numbers = #tpu.dot_dimension_numbers<[1], [0], [0], [1], [0, 0, 1, 1], [], []>} : vector<32x128xbf16>, vector<128x128xbf16>, vector<32x128xf32> -> vector<32x128xf32>
    %101 = vector.broadcast %10 : vector<1x128xf32> to vector<32x128xf32>
    %102 = arith.addf %100, %101 : vector<32x128xf32>
    %103 = arith.addf %3, %102 : vector<32x128xf32>
    %cst_28 = arith.constant dense<0.000000e+00> : vector<32xf32>
    %104 = vector.multi_reduction <add>, %103, %cst_28 [1] : vector<32x128xf32> to vector<32xf32>
    %105 = vector.shape_cast %104 : vector<32xf32> to vector<32x1xf32>
    %cst_29 = arith.constant 1.280000e+02 : f32
    %106 = vector.broadcast %cst_29 : f32 to vector<32x1xf32>
    %107 = arith.divf %105, %106 : vector<32x1xf32>
    %108 = vector.broadcast %107 : vector<32x1xf32> to vector<32x128xf32>
    %109 = arith.subf %103, %108 : vector<32x128xf32>
    %110 = arith.mulf %109, %109 : vector<32x128xf32>
    %cst_30 = arith.constant dense<0.000000e+00> : vector<32xf32>
    %111 = vector.multi_reduction <add>, %110, %cst_30 [1] : vector<32x128xf32> to vector<32xf32>
    %112 = vector.shape_cast %111 : vector<32xf32> to vector<32x1xf32>
    %cst_31 = arith.constant 1.280000e+02 : f32
    %113 = vector.broadcast %cst_31 : f32 to vector<32x1xf32>
    %114 = arith.divf %112, %113 : vector<32x1xf32>
    %cst_32 = arith.constant 9.99999974E-6 : f32
    %115 = vector.broadcast %cst_32 : f32 to vector<32x1xf32>
    %116 = arith.addf %114, %115 : vector<32x1xf32>
    %117 = math.rsqrt %116 : vector<32x1xf32>
    %118 = vector.broadcast %117 : vector<32x1xf32> to vector<32x128xf32>
    %119 = arith.mulf %109, %118 : vector<32x128xf32>
    %120 = vector.broadcast %8 : vector<1x128xf32> to vector<32x128xf32>
    %121 = arith.mulf %119, %120 : vector<32x128xf32>
    %122 = vector.broadcast %9 : vector<1x128xf32> to vector<32x128xf32>
    %123 = arith.addf %121, %122 : vector<32x128xf32>
    %124 = arith.truncf %123 : vector<32x128xf32> to vector<32x128xbf16>
    %c0_33 = arith.constant 0 : index
    %c0_34 = arith.constant 0 : index
    %c0_35 = arith.constant 0 : index
    %125 = vector.load %arg6[%c0_33, %c0_34, %c0_35] : memref<1x128x256xbf16, #tpu.memory_space<vmem>>, vector<1x128x256xbf16>
    %126 = vector.shape_cast %125 : vector<1x128x256xbf16> to vector<128x256xbf16>
    %cst_36 = arith.constant dense<0.000000e+00> : vector<32x256xf32>
    %127 = tpu.matmul %124, %126, %cst_36 {dimension_numbers = #tpu.dot_dimension_numbers<[1], [0], [0], [1], [0, 0, 1, 1], [], []>} : vector<32x128xbf16>, vector<128x256xbf16>, vector<32x256xf32> -> vector<32x256xf32>
    %c0_37 = arith.constant 0 : index
    %c0_38 = arith.constant 0 : index
    %c0_39 = arith.constant 0 : index
    %128 = vector.load %arg7[%c0_37, %c0_38, %c0_39] : memref<1x1x256xf32, #tpu.memory_space<vmem>>, vector<1x1x256xf32>
    %129 = vector.shape_cast %128 : vector<1x1x256xf32> to vector<1x256xf32>
    %130 = vector.broadcast %129 : vector<1x256xf32> to vector<32x256xf32>
    %131 = arith.addf %127, %130 : vector<32x256xf32>
    %cst_40 = arith.constant 1.702000e+00 : f32
    %132 = vector.broadcast %cst_40 : f32 to vector<32x256xf32>
    %133 = arith.mulf %132, %131 : vector<32x256xf32>
    %134 = arith.negf %133 : vector<32x256xf32>
    %135 = math.exp %134 : vector<32x256xf32>
    %cst_41 = arith.constant 1.000000e+00 : f32
    %136 = vector.broadcast %cst_41 : f32 to vector<32x256xf32>
    %137 = arith.addf %136, %135 : vector<32x256xf32>
    %138 = arith.divf %136, %137 : vector<32x256xf32>
    %139 = arith.mulf %131, %138 : vector<32x256xf32>
    %140 = arith.truncf %139 : vector<32x256xf32> to vector<32x256xbf16>
    %c0_42 = arith.constant 0 : index
    %c0_43 = arith.constant 0 : index
    %c0_44 = arith.constant 0 : index
    %141 = vector.load %arg8[%c0_42, %c0_43, %c0_44] : memref<1x256x128xbf16, #tpu.memory_space<vmem>>, vector<1x256x128xbf16>
    %142 = vector.shape_cast %141 : vector<1x256x128xbf16> to vector<256x128xbf16>
    %cst_45 = arith.constant dense<0.000000e+00> : vector<32x128xf32>
    %143 = tpu.matmul %140, %142, %cst_45 {dimension_numbers = #tpu.dot_dimension_numbers<[1], [0], [0], [1], [0, 0, 1, 1], [], []>} : vector<32x256xbf16>, vector<256x128xbf16>, vector<32x128xf32> -> vector<32x128xf32>
    %144 = arith.addf %103, %143 : vector<32x128xf32>
    %145 = vector.broadcast %11 : vector<1x128xf32> to vector<32x128xf32>
    %146 = arith.addf %144, %145 : vector<32x128xf32>
    %c0_46 = arith.constant 0 : index
    %c0_47 = arith.constant 0 : index
    %147 = vector.load %arg11[%c0_46, %c0_47] : memref<32x128xf32, #tpu.memory_space<vmem>>, vector<32x128xf32>
    tpu.vector_store %arg11[%c0_46, %c0_47], %146 {strides = array<i32>} : memref<32x128xf32, #tpu.memory_space<vmem>>, vector<32x128xf32>,
    %148 = vector.shape_cast %146 : vector<32x128xf32> to vector<2x16x128xf32>
    %c0_48 = arith.constant 0 : index
    %c0_49 = arith.constant 0 : index
    %c0_50 = arith.constant 0 : index
    %c0_51 = arith.constant 0 : index
    %149 = vector.load %arg10[%c0_48, %c0_49, %c0_50, %c0_51] : memref<1x2x16x128xf32, #tpu.memory_space<vmem>>, vector<1x2x16x128xf32>
    %150 = vector.shape_cast %149 : vector<1x2x16x128xf32> to vector<2x16x128xf32>
    %151 = vector.shape_cast %148 : vector<2x16x128xf32> to vector<1x2x16x128xf32>
    tpu.vector_store %arg10[%c0_48, %c0_49, %c0_50, %c0_51], %151 {strides = array<i32>} : memref<1x2x16x128xf32, #tpu.memory_space<vmem>>, vector<1x2x16x128xf32>,
    return
  }
  func.func @transform_0(%arg0: i32, %arg1: i32) -> (i32, i32, i32) {
    %c0_i32 = arith.constant 0 : i32
    %c0_i32_0 = arith.constant 0 : i32
    %c0_i32_1 = arith.constant 0 : i32
    return %arg0, %c0_i32, %c0_i32_0 : i32, i32, i32
  }
  func.func @transform_1(%arg0: i32, %arg1: i32) -> (i32, i32, i32) {
    %c0_i32 = arith.constant 0 : i32
    %c0_i32_0 = arith.constant 0 : i32
    %c0_i32_1 = arith.constant 0 : i32
    return %arg1, %c0_i32, %c0_i32_0 : i32, i32, i32
  }
  func.func @transform_2(%arg0: i32, %arg1: i32) -> (i32, i32, i32) {
    %c0_i32 = arith.constant 0 : i32
    %c0_i32_0 = arith.constant 0 : i32
    %c0_i32_1 = arith.constant 0 : i32
    return %arg1, %c0_i32, %c0_i32_0 : i32, i32, i32
  }
  func.func @transform_3(%arg0: i32, %arg1: i32) -> (i32, i32, i32) {
    %c0_i32 = arith.constant 0 : i32
    %c0_i32_0 = arith.constant 0 : i32
    %c0_i32_1 = arith.constant 0 : i32
    return %arg1, %c0_i32, %c0_i32_0 : i32, i32, i32
  }
  func.func @transform_4(%arg0: i32, %arg1: i32) -> (i32, i32, i32) {
    %c0_i32 = arith.constant 0 : i32
    %c0_i32_0 = arith.constant 0 : i32
    %c0_i32_1 = arith.constant 0 : i32
    return %arg1, %c0_i32, %c0_i32_0 : i32, i32, i32
  }
  func.func @transform_5(%arg0: i32, %arg1: i32) -> (i32, i32, i32) {
    %c0_i32 = arith.constant 0 : i32
    %c0_i32_0 = arith.constant 0 : i32
    %c0_i32_1 = arith.constant 0 : i32
    return %arg1, %c0_i32, %c0_i32_0 : i32, i32, i32
  }
  func.func @transform_6(%arg0: i32, %arg1: i32) -> (i32, i32, i32) {
    %c0_i32 = arith.constant 0 : i32
    %c0_i32_0 = arith.constant 0 : i32
    %c0_i32_1 = arith.constant 0 : i32
    return %arg1, %c0_i32, %c0_i32_0 : i32, i32, i32
  }
  func.func @transform_7(%arg0: i32, %arg1: i32) -> (i32, i32, i32) {
    %c0_i32 = arith.constant 0 : i32
    %c0_i32_0 = arith.constant 0 : i32
    %c0_i32_1 = arith.constant 0 : i32
    return %arg1, %c0_i32, %c0_i32_0 : i32, i32, i32
  }
  func.func @transform_8(%arg0: i32, %arg1: i32) -> (i32, i32, i32, i32) {
    %c0_i32 = arith.constant 0 : i32
    %c0_i32_0 = arith.constant 0 : i32
    %c0_i32_1 = arith.constant 0 : i32
    return %arg1, %arg0, %c0_i32, %c0_i32_0 : i32, i32, i32, i32
  }
}

</mosaic_0001>

<llo_original>
// kernel: tpu_custom_call.1
$region0: #{tpu_custom_call.1}
  #allocation0 [shape = 'u32[]', space=smem, size = 0x4, offset = 0x4, fixed_abs, tag = 'smem constant byte address 0x4 - core index']
  #allocation1 [shape = 'u32[144,128]{1,0:T(1,128)}', space=vmem, size = 0x12000, scoped, tag = 'internal scratch']
  #allocation2 [shape = 'f32[32,128]{1,0:T(8,128)}', space=vmem, size = 0x4000, scoped, tag = 'scratch operand']
  %s0 = inlined_call_operand.hbm [shape: f32[2,16,128], index: 0, kind: input, shape index: {}]
  %s1 = inlined_call_operand.hbm [shape: bf16[3,128,384], index: 1, kind: input, shape index: {}]
  %s2 = inlined_call_operand.hbm [shape: f32[3,1,384], index: 2, kind: input, shape index: {}]
  %s3 = inlined_call_operand.hbm [shape: bf16[3,128,128], index: 3, kind: input, shape index: {}]
  %s4 = inlined_call_operand.hbm [shape: bf16[3,128,256], index: 4, kind: input, shape index: {}]
  %s5 = inlined_call_operand.vmem [shape: f32[3,1,256], index: 5, kind: input, shape index: {}]
  %s6 = inlined_call_operand.hbm [shape: bf16[3,256,128], index: 6, kind: input, shape index: {}]
  %s7 = inlined_call_operand.hbm [shape: f32[3,8,128], index: 7, kind: input, shape index: {}]
  %s8 = inlined_call_operand.hbm [shape: f32[3,2,16,128], index: 8, kind: output, shape index: {}]
  %s9 = sld [smem:[#allocation0]]
  $region97: #{tpu_custom_call.1} parent=0
    _
  %s11 = ssub.s32 1, %s9
  %s12 = scalar_select 0, %s11, %s9
  $region1: #{tpu_custom_call.1} parent=0
    #allocation3 [shape = 'u8[16384]{0}', space=vmem, size = 0x4000, scoped, tag = 'input window, operand 0, single buffered']
    #allocation4 [shape = 's32[2]{0}', space=sflag, size = 0x8, scoped, tag = 'scoped memory for tpu_custom_call.1']
    #allocation5 [shape = 's32[2]{0}', space=sflag, size = 0x8, scoped, tag = 'scoped memory for tpu_custom_call.1']
    #allocation6 [shape = 'u8[196608]{0}', space=vmem, size = 0x30000, scoped, tag = 'input window, operand 1']
    #allocation7 [shape = 's32[2]{0}', space=sflag, size = 0x8, scoped, tag = 'scoped memory for tpu_custom_call.1']
    #allocation8 [shape = 'u8[3072]{0}', space=vmem, size = 0xc00, scoped, tag = 'input window, operand 2']
    #allocation9 [shape = 'u8[65536]{0}', space=vmem, size = 0x10000, scoped, tag = 'input window, operand 3']
    #allocation10 [shape = 's32[2]{0}', space=sflag, size = 0x8, scoped, tag = 'scoped memory for tpu_custom_call.1']
    #allocation11 [shape = 'u8[131072]{0}', space=vmem, size = 0x20000, scoped, tag = 'input window, operand 4']
    #allocation12 [shape = 'u8[131072]{0}', space=vmem, size = 0x20000, scoped, tag = 'input window, operand 6']
    #allocation13 [shape = 's32[2]{0}', space=sflag, size = 0x8, scoped, tag = 'scoped memory for tpu_custom_call.1']
    #allocation14 [shape = 'u8[8192]{0}', space=vmem, size = 0x2000, scoped, tag = 'input window, operand 7']
    #allocation15 [shape = 'u8[32768]{0}', space=vmem, size = 0x8000, scoped, tag = 'output window, operand 0']
    %13 = vsyncpa [#allocation4], 0
    %14 = vsyncpa [#allocation7], 0
    %s15 = scalar_lea.sflag [#allocation7], 1
    %16 = vsyncpa %s15, 0
    %17 = vsyncpa [#allocation10], 0
    %s18 = scalar_lea.sflag [#allocation10], 1
    %19 = vsyncpa %s18, 0
    %20 = vsyncpa [#allocation13], 0
    %s21 = scalar_lea.sflag [#allocation13], 1
    %22 = vsyncpa %s21, 0
    %23 = vsyncpa [#allocation5], 0
    %s24 = scalar_lea.sflag [#allocation5], 1
    %25 = vsyncpa %s24, 0
    loop: start=0, step=1, limit=5
    $region2: #{tpu_custom_call.1} parent=1 // loop_pre_header
      _
    $region3: #{tpu_custom_call.1} parent=1 // loop_header
      %s27 = sphi 0, %s31
      %p28 = scmp.ge.s32.totalorder %s27, 5
      %s34 = sphi 0, %s46
      %s35 = sphi 0, %s42
      %s36 = sphi 0, %s34
      %s37 = sphi 0, %s35
      %s38 = sphi 0, %s36
      %s39 = sphi 0, %s37
      %s49 = sphi 0, %s51
      %s52 = sphi 0, %s49
      %s53 = sphi 0, %s52
      %s69 = sphi 0, %s53
      %s75 = sphi 0, %s77
      %s78 = sphi 0, %s75
      %s79 = sphi 0, %s78
      %s95 = sphi 0, %s79
      %s101 = sphi 0, %s103
      %s104 = sphi 0, %s101
      %s105 = sphi 0, %s104
      %s121 = sphi 0, %s105
      %s127 = sphi 0, %s129
      %s130 = sphi 0, %s127
      %s131 = sphi 0, %s130
      %s147 = sphi 0, %s131
      %s153 = sphi 0, %s155
      %s156 = sphi 0, %s153
      %s157 = sphi 0, %s156
      %s173 = sphi 0, %s157
      %s179 = sphi 0, %s181
      %s182 = sphi 0, %s179
      %s183 = sphi 0, %s182
      %s199 = sphi 0, %s183
      %s205 = sphi 0, %s207
      %s208 = sphi 0, %s205
      %s209 = sphi 0, %s208
      %s225 = sphi 0, %s209
      %s231 = sphi 0, %s233
      %s234 = sphi 0, %s231
      %s235 = sphi 0, %s234
      %s251 = sphi 0, %s235
      %s259 = sphi 0, %s261
      %s262 = sphi 0, %s259
      %s263 = sphi 0, %s262
      %s279 = sphi 0, %s263
    $region4: #{tpu_custom_call.1} parent=1 // loop_header_branch
      %30 = sbr.rel (%p28) target = $region8
    $region5: #{tpu_custom_call.1} parent=1 // loop_body
      %s32 = ssub.s32 %s27, 1
      %s33 = ssub.s32 %s27, 2
      %s40 = sadd.s32 1, %s35
      %p41 = scmp.ge.s32.totalorder %s40, 3
      %s42 = scalar_select %p41, 0, %s40
      %s43 = sadd.s32 1, %s34
      %s44 = scalar_select %p41, %s43, %s34
      %p45 = scmp.ge.s32.totalorder %s44, 1
      %s46 = scalar_select %p45, 0, %s44
      %s47 = ssub.s32 %s34, %s46
      %p48 = scmp.eq.s32.totalorder %s47, 0
      %s50 = sadd.s32 %s49, 1
      %s51 = scalar_select %p48, %s49, %s50
      %p54 = pneg %p48
      %p55 = scmp.eq.s32.totalorder %s27, 2
      %p56 = por %p54, %p55
      %p57 = scmp.ne.s32.totalorder %s49, %s52
      %p58 = scmp.eq.s32.totalorder %s27, 0
      %p59 = por %p57, %p58
      %p60 = scmp.ne.s32.totalorder %s49, %s52
      %p61 = scmp.eq.s32.totalorder %s32, 2
      %p62 = por %p60, %p61
      %p63 = scmp.ne.s32.totalorder %s52, %s53
      %p64 = scmp.eq.s32.totalorder %s32, 0
      %p65 = por %p63, %p64
      %p66 = scmp.ne.s32.totalorder %s52, %s53
      %p67 = scmp.eq.s32.totalorder %s33, 2
      %p68 = por %p66, %p67
      %p70 = scmp.ne.s32.totalorder %s53, %s69
      %p71 = scmp.eq.s32.totalorder %s33, 0
      %p72 = por %p70, %p71
      %s73 = ssub.s32 %s35, %s42
      %p74 = scmp.eq.s32.totalorder %s73, 0
      %s76 = sadd.s32 %s75, 1
      %s77 = scalar_select %p74, %s75, %s76
      %p80 = pneg %p74
      %p81 = scmp.eq.s32.totalorder %s27, 2
      %p82 = por %p80, %p81
      %p83 = scmp.ne.s32.totalorder %s75, %s78
      %p84 = scmp.eq.s32.totalorder %s27, 0
      %p85 = por %p83, %p84
      %p86 = scmp.ne.s32.totalorder %s75, %s78
      %p87 = scmp.eq.s32.totalorder %s32, 2
      %p88 = por %p86, %p87
      %p89 = scmp.ne.s32.totalorder %s78, %s79
      %p90 = scmp.eq.s32.totalorder %s32, 0
      %p91 = por %p89, %p90
      %p92 = scmp.ne.s32.totalorder %s78, %s79
      %p93 = scmp.eq.s32.totalorder %s33, 2
      %p94 = por %p92, %p93
      %p96 = scmp.ne.s32.totalorder %s79, %s95
      %p97 = scmp.eq.s32.totalorder %s33, 0
      %p98 = por %p96, %p97
      %s99 = ssub.s32 %s35, %s42
      %p100 = scmp.eq.s32.totalorder %s99, 0
      %s102 = sadd.s32 %s101, 1
      %s103 = scalar_select %p100, %s101, %s102
      %p106 = pneg %p100
      %p107 = scmp.eq.s32.totalorder %s27, 2
      %p108 = por %p106, %p107
      %p109 = scmp.ne.s32.totalorder %s101, %s104
      %p110 = scmp.eq.s32.totalorder %s27, 0
      %p111 = por %p109, %p110
      %p112 = scmp.ne.s32.totalorder %s101, %s104
      %p113 = scmp.eq.s32.totalorder %s32, 2
      %p114 = por %p112, %p113
      %p115 = scmp.ne.s32.totalorder %s104, %s105
      %p116 = scmp.eq.s32.totalorder %s32, 0
      %p117 = por %p115, %p116
      %p118 = scmp.ne.s32.totalorder %s104, %s105
      %p119 = scmp.eq.s32.totalorder %s33, 2
      %p120 = por %p118, %p119
      %p122 = scmp.ne.s32.totalorder %s105, %s121
      %p123 = scmp.eq.s32.totalorder %s33, 0
      %p124 = por %p122, %p123
      %s125 = ssub.s32 %s35, %s42
      %p126 = scmp.eq.s32.totalorder %s125, 0
      %s128 = sadd.s32 %s127, 1
      %s129 = scalar_select %p126, %s127, %s128
      %p132 = pneg %p126
      %p133 = scmp.eq.s32.totalorder %s27, 2
      %p134 = por %p132, %p133
      %p135 = scmp.ne.s32.totalorder %s127, %s130
      %p136 = scmp.eq.s32.totalorder %s27, 0
      %p137 = por %p135, %p136
      %p138 = scmp.ne.s32.totalorder %s127, %s130
      %p139 = scmp.eq.s32.totalorder %s32, 2
      %p140 = por %p138, %p139
      %p141 = scmp.ne.s32.totalorder %s130, %s131
      %p142 = scmp.eq.s32.totalorder %s32, 0
      %p143 = por %p141, %p142
      %p144 = scmp.ne.s32.totalorder %s130, %s131
      %p145 = scmp.eq.s32.totalorder %s33, 2
      %p146 = por %p144, %p145
      %p148 = scmp.ne.s32.totalorder %s131, %s147
      %p149 = scmp.eq.s32.totalorder %s33, 0
      %p150 = por %p148, %p149
      %s151 = ssub.s32 %s35, %s42
      %p152 = scmp.eq.s32.totalorder %s151, 0
      %s154 = sadd.s32 %s153, 1
      %s155 = scalar_select %p152, %s153, %s154
      %p158 = pneg %p152
      %p159 = scmp.eq.s32.totalorder %s27, 2
      %p160 = por %p158, %p159
      %p161 = scmp.ne.s32.totalorder %s153, %s156
      %p162 = scmp.eq.s32.totalorder %s27, 0
      %p163 = por %p161, %p162
      %p164 = scmp.ne.s32.totalorder %s153, %s156
      %p165 = scmp.eq.s32.totalorder %s32, 2
      %p166 = por %p164, %p165
      %p167 = scmp.ne.s32.totalorder %s156, %s157
      %p168 = scmp.eq.s32.totalorder %s32, 0
      %p169 = por %p167, %p168
      %p170 = scmp.ne.s32.totalorder %s156, %s157
      %p171 = scmp.eq.s32.totalorder %s33, 2
      %p172 = por %p170, %p171
      %p174 = scmp.ne.s32.totalorder %s157, %s173
      %p175 = scmp.eq.s32.totalorder %s33, 0
      %p176 = por %p174, %p175
      %s177 = ssub.s32 %s35, %s42
      %p178 = scmp.eq.s32.totalorder %s177, 0
      %s180 = sadd.s32 %s179, 1
      %s181 = scalar_select %p178, %s179, %s180
      %p184 = pneg %p178
      %p185 = scmp.eq.s32.totalorder %s27, 2
      %p186 = por %p184, %p185
      %p187 = scmp.ne.s32.totalorder %s179, %s182
      %p188 = scmp.eq.s32.totalorder %s27, 0
      %p189 = por %p187, %p188
      %p190 = scmp.ne.s32.totalorder %s179, %s182
      %p191 = scmp.eq.s32.totalorder %s32, 2
      %p192 = por %p190, %p191
      %p193 = scmp.ne.s32.totalorder %s182, %s183
      %p194 = scmp.eq.s32.totalorder %s32, 0
      %p195 = por %p193, %p194
      %p196 = scmp.ne.s32.totalorder %s182, %s183
      %p197 = scmp.eq.s32.totalorder %s33, 2
      %p198 = por %p196, %p197
      %p200 = scmp.ne.s32.totalorder %s183, %s199
      %p201 = scmp.eq.s32.totalorder %s33, 0
      %p202 = por %p200, %p201
      %s203 = ssub.s32 %s35, %s42
      %p204 = scmp.eq.s32.totalorder %s203, 0
      %s206 = sadd.s32 %s205, 1
      %s207 = scalar_select %p204, %s205, %s206
      %p210 = pneg %p204
      %p211 = scmp.eq.s32.totalorder %s27, 2
      %p212 = por %p210, %p211
      %p213 = scmp.ne.s32.totalorder %s205, %s208
      %p214 = scmp.eq.s32.totalorder %s27, 0
      %p215 = por %p213, %p214
      %p216 = scmp.ne.s32.totalorder %s205, %s208
      %p217 = scmp.eq.s32.totalorder %s32, 2
      %p218 = por %p216, %p217
      %p219 = scmp.ne.s32.totalorder %s208, %s209
      %p220 = scmp.eq.s32.totalorder %s32, 0
      %p221 = por %p219, %p220
      %p222 = scmp.ne.s32.totalorder %s208, %s209
      %p223 = scmp.eq.s32.totalorder %s33, 2
      %p224 = por %p222, %p223
      %p226 = scmp.ne.s32.totalorder %s209, %s225
      %p227 = scmp.eq.s32.totalorder %s33, 0
      %p228 = por %p226, %p227
      %s229 = ssub.s32 %s35, %s42
      %p230 = scmp.eq.s32.totalorder %s229, 0
      %s232 = sadd.s32 %s231, 1
      %s233 = scalar_select %p230, %s231, %s232
      %p236 = pneg %p230
      %p237 = scmp.eq.s32.totalorder %s27, 2
      %p238 = por %p236, %p237
      %p239 = scmp.ne.s32.totalorder %s231, %s234
      %p240 = scmp.eq.s32.totalorder %s27, 0
      %p241 = por %p239, %p240
      %p242 = scmp.ne.s32.totalorder %s231, %s234
      %p243 = scmp.eq.s32.totalorder %s32, 2
      %p244 = por %p242, %p243
      %p245 = scmp.ne.s32.totalorder %s234, %s235
      %p246 = scmp.eq.s32.totalorder %s32, 0
      %p247 = por %p245, %p246
      %p248 = scmp.ne.s32.totalorder %s234, %s235
      %p249 = scmp.eq.s32.totalorder %s33, 2
      %p250 = por %p248, %p249
      %p252 = scmp.ne.s32.totalorder %s235, %s251
      %p253 = scmp.eq.s32.totalorder %s33, 0
      %p254 = por %p252, %p253
      %s255 = ssub.s32 %s35, %s42
      %s256 = ssub.s32 %s34, %s46
      %s257 = sor.u32 %s255, %s256
      %p258 = scmp.eq.s32.totalorder %s257, 0
      %s260 = sadd.s32 %s259, 1
      %s261 = scalar_select %p258, %s259, %s260
      %p264 = pneg %p258
      %p265 = scmp.eq.s32.totalorder %s27, 2
      %p266 = por %p264, %p265
      %p267 = scmp.ne.s32.totalorder %s259, %s262
      %p268 = scmp.eq.s32.totalorder %s27, 0
      %p269 = por %p267, %p268
      %p270 = scmp.ne.s32.totalorder %s259, %s262
      %p271 = scmp.eq.s32.totalorder %s32, 2
      %p272 = por %p270, %p271
      %p273 = scmp.ne.s32.totalorder %s262, %s263
      %p274 = scmp.eq.s32.totalorder %s32, 0
      %p275 = por %p273, %p274
      %p276 = scmp.ne.s32.totalorder %s262, %s263
      %p277 = scmp.eq.s32.totalorder %s33, 2
      %p278 = por %p276, %p277
      %p280 = scmp.ne.s32.totalorder %s263, %s279
      %p281 = scmp.eq.s32.totalorder %s33, 0
      %p282 = por %p280, %p281
      %p283 = scmp.le.s32.totalorder 1, %s27
      %p284 = scmp.lt.s32.totalorder %s27, 4
      %p285 = pnand %p283, %p284
      %p286 = pneg %p285
      // Predicated region
      $region9: #{tpu_custom_call.1} parent=5 // pred_check
        _
      $region10: #{tpu_custom_call.1} parent=5 // pred_check_branch
        %288 = sbr.rel (%p285) target = $region12
      $region11: #{tpu_custom_call.1} parent=5 // pred_region
        %s289 = ssub.s32 %s27, 1
        // Predicated region
        $region13: #{tpu_custom_call.1} parent=11 // pred_check
          %p290 = pneg %p65
        $region14: #{tpu_custom_call.1} parent=11 // pred_check_branch
          %292 = sbr.rel (%p290) target = $region16
        $region15: #{tpu_custom_call.1} parent=11 // pred_region
          %s293 = smul.u32 2, %s36
          %s295 = ssub.s32 512, 512
          %296 = vsyncadd [#allocation4], %s295
          %s297 = smul.addr %s293, 2
          %s298 = smul.addr %s297, 128
          %s299 = scalar_lea.hbm %s0, %s298
          %s300 = sshll.u32 [#allocation3], 4
          %s301 = int_to_ptr.vmem [resolvable:$true] %s300
          %306 = dma.hbm_to_vmem [thread:$0]  %s299, 512, %s301, [#allocation4], 128, 128, 8
        $region16: #{tpu_custom_call.1} parent=11 // pred_fallthru
          _
      $region12: #{tpu_custom_call.1} parent=5 // pred_fallthru
        _
      %p307 = scmp.lt.s32.totalorder %s27, 3
      // Predicated region
      $region17: #{tpu_custom_call.1} parent=5 // pred_check
        %p308 = pneg %p307
      $region18: #{tpu_custom_call.1} parent=5 // pred_check_branch
        %310 = sbr.rel (%p308) target = $region20
      $region19: #{tpu_custom_call.1} parent=5 // pred_region
        // Predicated region
        $region21: #{tpu_custom_call.1} parent=19 // pred_check
          %p311 = pneg %p85
        $region22: #{tpu_custom_call.1} parent=19 // pred_check_branch
          %313 = sbr.rel (%p311) target = $region24
        $region23: #{tpu_custom_call.1} parent=19 // pred_region
          %s314 = sand.u32 %s27, 1
          %s315 = scalar_lea.sflag [#allocation7], %s314
          %s316 = sand.u32 %s75, 1
          %s317 = smul.addr %s316, 192
          %s318 = scalar_lea.vmem [#allocation6], %s317
          %s320 = ssub.s32 3072, 3072
          %321 = vsyncadd %s315, %s320
          %s322 = smul.addr %s35, 48
          %s323 = smul.addr %s322, 64
          %s324 = scalar_lea.hbm %s1, %s323
          %s325 = sshll.u32 %s318, 4
          %s326 = int_to_ptr.vmem [resolvable:$true] %s325
          %331 = dma.hbm_to_vmem [thread:$0]  %s324, 3072, %s326, %s315, 192, 192, 12
        $region24: #{tpu_custom_call.1} parent=19 // pred_fallthru
          _
        // Predicated region
        $region25: #{tpu_custom_call.1} parent=19 // pred_check
          %p332 = pneg %p111
        $region26: #{tpu_custom_call.1} parent=19 // pred_check_branch
          %334 = sbr.rel (%p332) target = $region28
        $region27: #{tpu_custom_call.1} parent=19 // pred_region
          %s335 = sand.u32 %s27, 1
          %s336 = scalar_lea.sflag [#allocation7], %s335
          %s337 = sand.u32 %s101, 1
          %s338 = smul.addr %s337, 3
          %s339 = scalar_lea.vmem [#allocation8], %s338
          %s341 = ssub.s32 48, 48
          %342 = vsyncadd %s336, %s341
          %s343 = smul.addr %s35, 3
          %s344 = smul.addr %s343, 16
          %s345 = scalar_lea.hbm %s2, %s344
          %s347 = sshll.u32 %s339, 4
          %s348 = int_to_ptr.vmem [resolvable:$true] %s347
          %350 = dma.hbm_to_vmem [thread:$0]  %s345, 48, %s348, %s336
        $region28: #{tpu_custom_call.1} parent=19 // pred_fallthru
          _
        // Predicated region
        $region29: #{tpu_custom_call.1} parent=19 // pred_check
          %p351 = pneg %p137
        $region30: #{tpu_custom_call.1} parent=19 // pred_check_branch
          %353 = sbr.rel (%p351) target = $region32
        $region31: #{tpu_custom_call.1} parent=19 // pred_region
          %s354 = sand.u32 %s27, 1
          %s355 = scalar_lea.sflag [#allocation10], %s354
          %s356 = sand.u32 %s127, 1
          %s357 = smul.addr %s356, 64
          %s358 = scalar_lea.vmem [#allocation9], %s357
          %s360 = ssub.s32 1024, 1024
          %361 = vsyncadd %s355, %s360
          %s362 = smul.addr %s35, 16
          %s363 = smul.addr %s362, 64
          %s364 = scalar_lea.hbm %s3, %s363
          %s365 = sshll.u32 %s358, 4
          %s366 = int_to_ptr.vmem [resolvable:$true] %s365
          %371 = dma.hbm_to_vmem [thread:$0]  %s364, 1024, %s366, %s355, 64, 64, 4
        $region32: #{tpu_custom_call.1} parent=19 // pred_fallthru
          _
        // Predicated region
        $region33: #{tpu_custom_call.1} parent=19 // pred_check
          %p372 = pneg %p163
        $region34: #{tpu_custom_call.1} parent=19 // pred_check_branch
          %374 = sbr.rel (%p372) target = $region36
        $region35: #{tpu_custom_call.1} parent=19 // pred_region
          %s375 = sand.u32 %s27, 1
          %s376 = scalar_lea.sflag [#allocation10], %s375
          %s377 = sand.u32 %s153, 1
          %s378 = smul.addr %s377, 128
          %s379 = scalar_lea.vmem [#allocation11], %s378
          %s381 = ssub.s32 2048, 2048
          %382 = vsyncadd %s376, %s381
          %s383 = smul.addr %s35, 32
          %s384 = smul.addr %s383, 64
          %s385 = scalar_lea.hbm %s4, %s384
          %s386 = sshll.u32 %s379, 4
          %s387 = int_to_ptr.vmem [resolvable:$true] %s386
          %392 = dma.hbm_to_vmem [thread:$0]  %s385, 2048, %s387, %s376, 128, 128, 8
        $region36: #{tpu_custom_call.1} parent=19 // pred_fallthru
          _
        // Predicated region
        $region37: #{tpu_custom_call.1} parent=19 // pred_check
          %p393 = pneg %p189
        $region38: #{tpu_custom_call.1} parent=19 // pred_check_branch
          %395 = sbr.rel (%p393) target = $region40
        $region39: #{tpu_custom_call.1} parent=19 // pred_region
          %p396 = scmp.lt.s32.totalorder %s35, 2
          %s397 = scalar_select %p396, %s35, 2
          %s398 = smul.addr %s397, 2
          %s399 = scalar_lea.vmem %s5, %s398
        $region40: #{tpu_custom_call.1} parent=19 // pred_fallthru
          _
        // Predicated region
        $region41: #{tpu_custom_call.1} parent=19 // pred_check
          %p400 = pneg %p215
        $region42: #{tpu_custom_call.1} parent=19 // pred_check_branch
          %402 = sbr.rel (%p400) target = $region44
        $region43: #{tpu_custom_call.1} parent=19 // pred_region
          %s403 = sand.u32 %s27, 1
          %s404 = scalar_lea.sflag [#allocation13], %s403
          %s405 = sand.u32 %s205, 1
          %s406 = smul.addr %s405, 128
          %s407 = scalar_lea.vmem [#allocation12], %s406
          %s409 = ssub.s32 2048, 2048
          %410 = vsyncadd %s404, %s409
          %s411 = smul.addr %s35, 32
          %s412 = smul.addr %s411, 64
          %s413 = scalar_lea.hbm %s6, %s412
          %s414 = sshll.u32 %s407, 4
          %s415 = int_to_ptr.vmem [resolvable:$true] %s414
          %420 = dma.hbm_to_vmem [thread:$0]  %s413, 2048, %s415, %s404, 64, 64, 4
        $region44: #{tpu_custom_call.1} parent=19 // pred_fallthru
          _
        // Predicated region
        $region45: #{tpu_custom_call.1} parent=19 // pred_check
          %p421 = pneg %p241
        $region46: #{tpu_custom_call.1} parent=19 // pred_check_branch
          %423 = sbr.rel (%p421) target = $region48
        $region47: #{tpu_custom_call.1} parent=19 // pred_region
          %s424 = sand.u32 %s27, 1
          %s425 = scalar_lea.sflag [#allocation13], %s424
          %s426 = sand.u32 %s231, 1
          %s427 = smul.addr %s426, 8
          %s428 = scalar_lea.vmem [#allocation14], %s427
          %s430 = ssub.s32 128, 128
          %431 = vsyncadd %s425, %s430
          %s432 = smul.addr %s35, 128
          %s433 = scalar_lea.hbm %s7, %s432
          %s435 = sshll.u32 %s428, 4
          %s436 = int_to_ptr.vmem [resolvable:$true] %s435
          %438 = dma.hbm_to_vmem [thread:$0]  %s433, 128, %s436, %s425
        $region48: #{tpu_custom_call.1} parent=19 // pred_fallthru
          _
      $region20: #{tpu_custom_call.1} parent=5 // pred_fallthru
        _
      %p439 = scmp.le.s32.totalorder 1, %s27
      %p440 = scmp.lt.s32.totalorder %s27, 4
      %p441 = pnand %p439, %p440
      %p442 = pneg %p441
      // Predicated region
      $region49: #{tpu_custom_call.1} parent=5 // pred_check
        _
      $region50: #{tpu_custom_call.1} parent=5 // pred_check_branch
        %444 = sbr.rel (%p441) target = $region52
      $region51: #{tpu_custom_call.1} parent=5 // pred_region
        %s445 = ssub.s32 %s27, 1
        // Predicated region
        $region53: #{tpu_custom_call.1} parent=51 // pred_check
          %p446 = pneg %p65
        $region54: #{tpu_custom_call.1} parent=51 // pred_check_branch
          %448 = sbr.rel (%p446) target = $region56
        $region55: #{tpu_custom_call.1} parent=51 // pred_region
          %449 = dma.done [#allocation4], 512
        $region56: #{tpu_custom_call.1} parent=51 // pred_fallthru
          _
        %s450 = sand.u32 %s32, 1
        %s451 = scalar_lea.sflag [#allocation7], %s450
        %s452 = sand.u32 %s78, 1
        %s453 = smul.addr %s452, 192
        %s454 = scalar_lea.vmem [#allocation6], %s453
        // Predicated region
        $region57: #{tpu_custom_call.1} parent=51 // pred_check
          %p455 = pneg %p91
        $region58: #{tpu_custom_call.1} parent=51 // pred_check_branch
          %457 = sbr.rel (%p455) target = $region60
        $region59: #{tpu_custom_call.1} parent=51 // pred_region
          %458 = dma.done %s451, 3072
        $region60: #{tpu_custom_call.1} parent=51 // pred_fallthru
          _
        %s459 = sand.u32 %s32, 1
        %s460 = scalar_lea.sflag [#allocation7], %s459
        %s461 = sand.u32 %s104, 1
        %s462 = smul.addr %s461, 3
        %s463 = scalar_lea.vmem [#allocation8], %s462
        // Predicated region
        $region61: #{tpu_custom_call.1} parent=51 // pred_check
          %p464 = pneg %p117
        $region62: #{tpu_custom_call.1} parent=51 // pred_check_branch
          %466 = sbr.rel (%p464) target = $region64
        $region63: #{tpu_custom_call.1} parent=51 // pred_region
          %467 = dma.done %s460, 48
        $region64: #{tpu_custom_call.1} parent=51 // pred_fallthru
          _
        %s468 = sand.u32 %s32, 1
        %s469 = scalar_lea.sflag [#allocation10], %s468
        %s470 = sand.u32 %s130, 1
        %s471 = smul.addr %s470, 64
        %s472 = scalar_lea.vmem [#allocation9], %s471
        // Predicated region
        $region65: #{tpu_custom_call.1} parent=51 // pred_check
          %p473 = pneg %p143
        $region66: #{tpu_custom_call.1} parent=51 // pred_check_branch
          %475 = sbr.rel (%p473) target = $region68
        $region67: #{tpu_custom_call.1} parent=51 // pred_region
          %476 = dma.done %s469, 1024
        $region68: #{tpu_custom_call.1} parent=51 // pred_fallthru
          _
        %s477 = sand.u32 %s32, 1
        %s478 = scalar_lea.sflag [#allocation10], %s477
        %s479 = sand.u32 %s156, 1
        %s480 = smul.addr %s479, 128
        %s481 = scalar_lea.vmem [#allocation11], %s480
        // Predicated region
        $region69: #{tpu_custom_call.1} parent=51 // pred_check
          %p482 = pneg %p169
        $region70: #{tpu_custom_call.1} parent=51 // pred_check_branch
          %484 = sbr.rel (%p482) target = $region72
        $region71: #{tpu_custom_call.1} parent=51 // pred_region
          %485 = dma.done %s478, 2048
        $region72: #{tpu_custom_call.1} parent=51 // pred_fallthru
          _
        %s486 = sand.u32 %s32, 1
        %s487 = scalar_lea.sflag [#allocation13], %s486
        %s488 = sand.u32 %s208, 1
        %s489 = smul.addr %s488, 128
        %s490 = scalar_lea.vmem [#allocation12], %s489
        // Predicated region
        $region73: #{tpu_custom_call.1} parent=51 // pred_check
          %p491 = pneg %p221
        $region74: #{tpu_custom_call.1} parent=51 // pred_check_branch
          %493 = sbr.rel (%p491) target = $region76
        $region75: #{tpu_custom_call.1} parent=51 // pred_region
          %494 = dma.done %s487, 2048
        $region76: #{tpu_custom_call.1} parent=51 // pred_fallthru
          _
        %s495 = sand.u32 %s32, 1
        %s496 = scalar_lea.sflag [#allocation13], %s495
        %s497 = sand.u32 %s234, 1
        %s498 = smul.addr %s497, 8
        %s499 = scalar_lea.vmem [#allocation14], %s498
        // Predicated region
        $region77: #{tpu_custom_call.1} parent=51 // pred_check
          %p500 = pneg %p247
        $region78: #{tpu_custom_call.1} parent=51 // pred_check_branch
          %502 = sbr.rel (%p500) target = $region80
        $region79: #{tpu_custom_call.1} parent=51 // pred_region
          %503 = dma.done %s496, 128
        $region80: #{tpu_custom_call.1} parent=51 // pred_fallthru
          _
        %p504 = pneg %p65
        %p505 = pneg %p62
        %s506 = sand.u32 %s32, 1
        %s507 = scalar_lea.sflag [#allocation7], %s506
        %s508 = sand.u32 %s78, 1
        %s509 = smul.addr %s508, 192
        %s510 = scalar_lea.vmem [#allocation6], %s509
        %p511 = pneg %p91
        %p512 = pneg %p88
        %s513 = sand.u32 %s32, 1
        %s514 = scalar_lea.sflag [#allocation7], %s513
        %s515 = sand.u32 %s104, 1
        %s516 = smul.addr %s515, 3
        %s517 = scalar_lea.vmem [#allocation8], %s516
        %p518 = pneg %p117
        %p519 = pneg %p114
        %s520 = sand.u32 %s32, 1
        %s521 = scalar_lea.sflag [#allocation10], %s520
        %s522 = sand.u32 %s130, 1
        %s523 = smul.addr %s522, 64
        %s524 = scalar_lea.vmem [#allocation9], %s523
        %p525 = pneg %p143
        %p526 = pneg %p140
        %s527 = sand.u32 %s32, 1
        %s528 = scalar_lea.sflag [#allocation10], %s527
        %s529 = sand.u32 %s156, 1
        %s530 = smul.addr %s529, 128
        %s531 = scalar_lea.vmem [#allocation11], %s530
        %p532 = pneg %p169
        %p533 = pneg %p166
        %p534 = scmp.lt.s32.totalorder %s37, 2
        %s535 = scalar_select %p534, %s37, 2
        %s536 = smul.addr %s535, 2
        %s537 = scalar_lea.vmem %s5, %s536
        %p538 = pneg %p195
        %p539 = pneg %p192
        %s540 = sand.u32 %s32, 1
        %s541 = scalar_lea.sflag [#allocation13], %s540
        %s542 = sand.u32 %s208, 1
        %s543 = smul.addr %s542, 128
        %s544 = scalar_lea.vmem [#allocation12], %s543
        %p545 = pneg %p221
        %p546 = pneg %p218
        %s547 = sand.u32 %s32, 1
        %s548 = scalar_lea.sflag [#allocation13], %s547
        %s549 = sand.u32 %s234, 1
        %s550 = smul.addr %s549, 8
        %s551 = scalar_lea.vmem [#allocation14], %s550
        %p552 = pneg %p247
        %p553 = pneg %p244
        %p554 = pneg %p275
        %p555 = pneg %p272
        %s556 = sand.u32 %s262, 1
        %s557 = scalar_lea.sflag [#allocation5], %s556
        %s558 = sand.u32 %s262, 1
        %s559 = smul.addr %s558, 32
        %s560 = scalar_lea.vmem [#allocation15], %s559
        %s561 = smul.u32 2, %s36
        %p562 = scmp.lt.s32.totalorder %s37, 2
        %s563 = scalar_select %p562, %s37, 2
        %s564 = smul.addr %s563, 2
        %s565 = scalar_lea.vmem %s5, %s564
        %s566 = smul.u32 2, %s36
        %p568 = scmp.eq.s32.totalorder %s37, 0
        // Predicated region
        $region81: #{tpu_custom_call.1} parent=51 // pred_check
          %p569 = pneg %p568
        $region82: #{tpu_custom_call.1} parent=51 // pred_check_branch
          %571 = sbr.rel (%p569) target = $region84
        $region83: #{tpu_custom_call.1} parent=51 // pred_region
          %v572 = vld [vmem:[#allocation3] sm:$0xff]
          %v573 = vld [vmem:[#allocation3 + $0x8] sm:$0xff]
          %v574 = vld [vmem:[#allocation3 + $0x10] sm:$0xff]
          %v575 = vld [vmem:[#allocation3 + $0x18] sm:$0xff]
          %576 = vst [vmem:[#allocation2] sm:$0xff] %v572
          %577 = vst [vmem:[#allocation2 + $0x8] sm:$0xff] %v573
          %578 = vst [vmem:[#allocation2 + $0x10] sm:$0xff] %v574
          %579 = vst [vmem:[#allocation2 + $0x18] sm:$0xff] %v575
        $region84: #{tpu_custom_call.1} parent=51 // pred_fallthru
          _
        %v580 = vld [vmem:[#allocation2] sm:$0xff]
        %v581 = vld [vmem:[#allocation2 + $0x8] sm:$0xff]
        %v582 = vld [vmem:[#allocation2 + $0x10] sm:$0xff]
        %v583 = vld [vmem:[#allocation2 + $0x18] sm:$0xff]
        %v584 = vld [vmem:[%s499] sm:$0xff]
        %585 = vadd.xlane.f32.xlu0 %v580
        %v586 = vpop.xlane.xlu0 %585
        %587 = vadd.xlane.f32.xlu0 %v581
        %v588 = vpop.xlane.xlu0 %587
        %589 = vadd.xlane.f32.xlu0 %v582
        %v590 = vpop.xlane.xlu0 %589
        %591 = vadd.xlane.f32.xlu0 %v583
        %v592 = vpop.xlane.xlu0 %591
        %v593 = vrcp.pop 128.0
        %v594 = vmul.f32 %v586, %v593
        %v595 = vmul.f32 %v588, %v593
        %v596 = vmul.f32 %v590, %v593
        %v597 = vmul.f32 %v592, %v593
        %v598 = vsub.f32 %v580, %v594
        %v599 = vsub.f32 %v581, %v595
        %v600 = vsub.f32 %v582, %v596
        %v601 = vsub.f32 %v583, %v597
        %v602 = vmul.f32 %v598, %v598
        %v603 = vmul.f32 %v599, %v599
        %v604 = vmul.f32 %v600, %v600
        %v605 = vmul.f32 %v601, %v601
        %606 = vadd.xlane.f32.xlu0 %v602
        %v607 = vpop.xlane.xlu0 %606
        %608 = vadd.xlane.f32.xlu0 %v603
        %v609 = vpop.xlane.xlu0 %608
        %610 = vadd.xlane.f32.xlu0 %v604
        %v611 = vpop.xlane.xlu0 %610
        %612 = vadd.xlane.f32.xlu0 %v605
        %v613 = vpop.xlane.xlu0 %612
        %v614 = vmul.f32 %v607, %v593
        %v615 = vmul.f32 %v609, %v593
        %v616 = vmul.f32 %v611, %v593
        %v617 = vmul.f32 %v613, %v593
        %v618 = vadd.f32 %v614, 1e-05
        %v619 = vadd.f32 %v615, 1e-05
        %v620 = vadd.f32 %v616, 1e-05
        %v621 = vadd.f32 %v617, 1e-05
        %v622 = vrsqrt.pop %v618
        %v623 = vrsqrt.pop %v619
        %v624 = vrsqrt.pop %v620
        %v625 = vrsqrt.pop %v621
        %v626 = vmul.f32 %v598, %v622
        %v627 = vmul.f32 %v599, %v623
        %v628 = vmul.f32 %v600, %v624
        %v629 = vmul.f32 %v601, %v625
        %v630 = vlaneseq
        %v631 = vshrl.u32 %v630, 7
        %v632 = vsub.s32 0, %v631
        %v633 = vrot.slane %v584, %v632
        %v634 = vmul.f32 %v626, %v633
        %v635 = vmul.f32 %v627, %v633
        %v636 = vmul.f32 %v628, %v633
        %v637 = vmul.f32 %v629, %v633
        %v638 = vlaneseq
        %v639 = vshrl.u32 %v638, 7
        %v640 = vsub.s32 1, %v639
        %v641 = vrot.slane %v584, %v640
        %v642 = vadd.f32 %v634, %v641
        %v643 = vadd.f32 %v635, %v641
        %v644 = vadd.f32 %v636, %v641
        %v645 = vadd.f32 %v637, %v641
        %v646 = vpack.c.bf16 %v643, %v642
        %v647 = vpack.c.bf16 %v645, %v644
        %v648 = vld [vmem:[%s454] sm:$0xff]
        %v649 = vld [vmem:[%s454 + $0x8] sm:$0xf]
        %v650 = vld [vmem:[%s454 + $0xc] sm:$0xff]
        %v651 = vld [vmem:[%s454 + $0x14] sm:$0xf]
        %v652 = vld [vmem:[%s454 + $0x18] sm:$0xff]
        %v653 = vld [vmem:[%s454 + $0x20] sm:$0xf]
        %v654 = vld [vmem:[%s454 + $0x24] sm:$0xff]
        %v655 = vld [vmem:[%s454 + $0x2c] sm:$0xf]
        %v656 = vld [vmem:[%s454 + $0x30] sm:$0xff]
        %v657 = vld [vmem:[%s454 + $0x38] sm:$0xf]
        %v658 = vld [vmem:[%s454 + $0x3c] sm:$0xff]
        %v659 = vld [vmem:[%s454 + $0x44] sm:$0xf]
        %v660 = vld [vmem:[%s454 + $0x48] sm:$0xff]
        %v661 = vld [vmem:[%s454 + $0x50] sm:$0xf]
        %v662 = vld [vmem:[%s454 + $0x54] sm:$0xff]
        %v663 = vld [vmem:[%s454 + $0x5c] sm:$0xf]
        %v664 = vld [vmem:[%s454 + $0x60] sm:$0xff]
        %v665 = vld [vmem:[%s454 + $0x68] sm:$0xf]
        %v666 = vld [vmem:[%s454 + $0x6c] sm:$0xff]
        %v667 = vld [vmem:[%s454 + $0x74] sm:$0xf]
        %v668 = vld [vmem:[%s454 + $0x78] sm:$0xff]
        %v669 = vld [vmem:[%s454 + $0x80] sm:$0xf]
        %v670 = vld [vmem:[%s454 + $0x84] sm:$0xff]
        %v671 = vld [vmem:[%s454 + $0x8c] sm:$0xf]
        %v672 = vld [vmem:[%s454 + $0x90] sm:$0xff]
        %v673 = vld [vmem:[%s454 + $0x98] sm:$0xf]
        %v674 = vld [vmem:[%s454 + $0x9c] sm:$0xff]
        %v675 = vld [vmem:[%s454 + $0xa4] sm:$0xf]
        %v676 = vld [vmem:[%s454 + $0xa8] sm:$0xff]
        %v677 = vld [vmem:[%s454 + $0xb0] sm:$0xf]
        %v678 = vld [vmem:[%s454 + $0xb4] sm:$0xff]
        %v679 = vld [vmem:[%s454 + $0xbc] sm:$0xf]
        %v680 = vld [vmem:[%s463] sm:$0x7]
        %v682 = vlaneseq
        %v683 = vshrl.u32 %v682, 7
        %v684 = vsub.s32 0, %v683
        %v685 = vrot.slane %v680, %v684
        %v686 = vlaneseq
        %v687 = vshrl.u32 %v686, 7
        %v688 = vsub.s32 1, %v687
        %v689 = vrot.slane %v680, %v688
        %v690 = vlaneseq
        %v691 = vshrl.u32 %v690, 7
        %v692 = vsub.s32 2, %v691
        %v693 = vrot.slane %v680, %v692
        %v729 = vunpack.c.l.b16 %v648
        %v730 = vunpack.c.h.b16 %v648
        %v731 = vunpack.c.l.b16 %v649
        %v732 = vunpack.c.l.b16 %v650
        %v733 = vunpack.c.h.b16 %v650
        %v734 = vunpack.c.l.b16 %v651
        %v735 = vunpack.c.l.b16 %v652
        %v736 = vunpack.c.h.b16 %v652
        %v737 = vunpack.c.l.b16 %v653
        %v738 = vunpack.c.l.b16 %v654
        %v739 = vunpack.c.h.b16 %v654
        %v740 = vunpack.c.l.b16 %v655
        %v741 = vunpack.c.l.b16 %v656
        %v742 = vunpack.c.h.b16 %v656
        %v743 = vunpack.c.l.b16 %v657
        %v744 = vunpack.c.l.b16 %v658
        %v745 = vunpack.c.h.b16 %v658
        %v746 = vunpack.c.l.b16 %v659
        %v747 = vunpack.c.l.b16 %v660
        %v748 = vunpack.c.h.b16 %v660
        %v749 = vunpack.c.l.b16 %v661
        %v750 = vunpack.c.l.b16 %v662
        %v751 = vunpack.c.h.b16 %v662
        %v752 = vunpack.c.l.b16 %v663
        %v753 = vunpack.c.l.b16 %v664
        %v754 = vunpack.c.h.b16 %v664
        %v755 = vunpack.c.l.b16 %v665
        %v756 = vunpack.c.l.b16 %v666
        %v757 = vunpack.c.h.b16 %v666
        %v758 = vunpack.c.l.b16 %v667
        %v759 = vunpack.c.l.b16 %v668
        %v760 = vunpack.c.h.b16 %v668
        %v761 = vunpack.c.l.b16 %v669
        %v762 = vunpack.c.l.b16 %v670
        %v763 = vunpack.c.h.b16 %v670
        %v764 = vunpack.c.l.b16 %v671
        %v765 = vunpack.c.l.b16 %v672
        %v766 = vunpack.c.h.b16 %v672
        %v767 = vunpack.c.l.b16 %v673
        %v768 = vunpack.c.l.b16 %v674
        %v769 = vunpack.c.h.b16 %v674
        %v770 = vunpack.c.l.b16 %v675
        %v771 = vunpack.c.l.b16 %v676
        %v772 = vunpack.c.h.b16 %v676
        %v773 = vunpack.c.l.b16 %v677
        %v774 = vunpack.c.l.b16 %v678
        %v775 = vunpack.c.h.b16 %v678
        %v776 = vunpack.c.l.b16 %v679
        %v777 = vpack.c.b16 %v732, %v729
        %v778 = vpack.c.b16 %v733, %v730
        %v779 = vpack.c.b16 %v734, %v731
        %v780 = vpack.c.b16 %v738, %v735
        %v781 = vpack.c.b16 %v739, %v736
        %v782 = vpack.c.b16 %v740, %v737
        %v783 = vpack.c.b16 %v744, %v741
        %v784 = vpack.c.b16 %v745, %v742
        %v785 = vpack.c.b16 %v746, %v743
        %v786 = vpack.c.b16 %v750, %v747
        %v787 = vpack.c.b16 %v751, %v748
        %v788 = vpack.c.b16 %v752, %v749
        %v789 = vpack.c.b16 %v756, %v753
        %v790 = vpack.c.b16 %v757, %v754
        %v791 = vpack.c.b16 %v758, %v755
        %v792 = vpack.c.b16 %v762, %v759
        %v793 = vpack.c.b16 %v763, %v760
        %v794 = vpack.c.b16 %v764, %v761
        %v795 = vpack.c.b16 %v768, %v765
        %v796 = vpack.c.b16 %v769, %v766
        %v797 = vpack.c.b16 %v770, %v767
        %v798 = vpack.c.b16 %v774, %v771
        %v799 = vpack.c.b16 %v775, %v772
        %v800 = vpack.c.b16 %v776, %v773
        %825 = vmatprep.subr.bf16.mxu0 %v799
        %826 = vmatpush1.bf16.msra.mxu0 %v798
        %827 = vmatprep.subr.bf16.mxu0 %v796
        %828 = vmatpush1.bf16.msra.mxu0 %v795
        %829 = vmatprep.subr.bf16.mxu0 %v793
        %830 = vmatpush1.bf16.msra.mxu0 %v792
        %831 = vmatprep.subr.bf16.mxu0 %v790
        %832 = vmatpush1.bf16.msra.mxu0 %v789
        %833 = vmatprep.subr.bf16.mxu0 %v787
        %834 = vmatpush1.bf16.msra.mxu0 %v786
        %835 = vmatprep.subr.bf16.mxu0 %v784
        %836 = vmatpush1.bf16.msra.mxu0 %v783
        %837 = vmatprep.subr.bf16.mxu0 %v781
        %838 = vmatpush1.bf16.msra.mxu0 %v780
        %839 = vmatprep.subr.bf16.mxu0 %v778
        %840 = vmatpush1.bf16.msra.mxu0 %v777
        %841 = vmatprep.subr.bf16.mxu0 0
        %842 = vmatpush2.bf16.msra.mxu0 0
        %843 = vmatprep.subr.bf16.mxu0 0
        %844 = vmatpush2.bf16.msra.mxu0 0
        %845 = vmatprep.subr.bf16.mxu0 0
        %846 = vmatpush2.bf16.msra.mxu0 0
        %847 = vmatprep.subr.bf16.mxu0 0
        %848 = vmatpush2.bf16.msra.mxu0 0
        %849 = vmatprep.subr.bf16.mxu0 0
        %850 = vmatpush2.bf16.msra.mxu0 0
        %851 = vmatprep.subr.bf16.mxu0 0
        %852 = vmatpush2.bf16.msra.mxu0 0
        %853 = vmatprep.subr.bf16.mxu0 0
        %854 = vmatpush2.bf16.msra.mxu0 0
        %855 = vmatprep.subr.bf16.mxu0 0
        %856 = vmatpush2.bf16.msra.mxu0 0
        %857 = vmatprep.mubr.bf16.mxu0 0
        %858 = vmatmul.mubr.bf16.gmra.mxu0 %v646
        %v859 = vpop.f32.mrf.mxu0
        %v860 = vadd.f32 %v685, %v859
        %v861 = vpop.f32.mrf.mxu0
        %v862 = vadd.f32 %v689, %v861
        %v863 = vpop.f32.mrf.mxu0
        %v864 = vadd.f32 %v685, %v863
        %v865 = vpop.f32.mrf.mxu0
        %v866 = vadd.f32 %v689, %v865
        %867 = vmatprep.mubr.bf16.mxu0 0
        %868 = vmatmul.mubr.bf16.gmra.mxu0 %v647
        %v869 = vpop.f32.mrf.mxu0
        %v870 = vadd.f32 %v685, %v869
        %v871 = vpop.f32.mrf.mxu0
        %v872 = vadd.f32 %v689, %v871
        %v873 = vpop.f32.mrf.mxu0
        %v874 = vadd.f32 %v685, %v873
        %v875 = vpop.f32.mrf.mxu0
        %v876 = vadd.f32 %v689, %v875
        %877 = vdwg.mxu0
        %878 = vmatprep.subr.bf16.mxu0 0
        %879 = vmatpush1.bf16.msra.mxu0 %v800
        %880 = vmatprep.subr.bf16.mxu0 0
        %881 = vmatpush1.bf16.msra.mxu0 %v797
        %882 = vmatprep.subr.bf16.mxu0 0
        %883 = vmatpush1.bf16.msra.mxu0 %v794
        %884 = vmatprep.subr.bf16.mxu0 0
        %885 = vmatpush1.bf16.msra.mxu0 %v791
        %886 = vmatprep.subr.bf16.mxu0 0
        %887 = vmatpush1.bf16.msra.mxu0 %v788
        %888 = vmatprep.subr.bf16.mxu0 0
        %889 = vmatpush1.bf16.msra.mxu0 %v785
        %890 = vmatprep.subr.bf16.mxu0 0
        %891 = vmatpush1.bf16.msra.mxu0 %v782
        %892 = vmatprep.subr.bf16.mxu0 0
        %893 = vmatpush1.bf16.msra.mxu0 %v779
        %894 = vmatprep.subr.bf16.mxu0 0
        %895 = vmatpush2.bf16.msra.mxu0 0
        %896 = vmatprep.subr.bf16.mxu0 0
        %897 = vmatpush2.bf16.msra.mxu0 0
        %898 = vmatprep.subr.bf16.mxu0 0
        %899 = vmatpush2.bf16.msra.mxu0 0
        %900 = vmatprep.subr.bf16.mxu0 0
        %901 = vmatpush2.bf16.msra.mxu0 0
        %902 = vmatprep.subr.bf16.mxu0 0
        %903 = vmatpush2.bf16.msra.mxu0 0
        %904 = vmatprep.subr.bf16.mxu0 0
        %905 = vmatpush2.bf16.msra.mxu0 0
        %906 = vmatprep.subr.bf16.mxu0 0
        %907 = vmatpush2.bf16.msra.mxu0 0
        %908 = vmatprep.subr.bf16.mxu0 0
        %909 = vmatpush2.bf16.msra.mxu0 0
        %910 = vmatprep.mubr.bf16.mxu0 0
        %911 = vmatmul.mubr.bf16.gmra.mxu0 %v646
        %v912 = vpop.f32.mrf.mxu0
        %v913 = vadd.f32 %v693, %v912
        %v914 = vpop.f32.mrf.mxu0
        %v915 = vpop.f32.mrf.mxu0
        %v916 = vadd.f32 %v693, %v915
        %v917 = vpop.f32.mrf.mxu0
        %918 = vmatprep.mubr.bf16.mxu0 0
        %919 = vmatmul.mubr.bf16.gmra.mxu0 %v647
        %v920 = vpop.f32.mrf.mxu0
        %v921 = vadd.f32 %v693, %v920
        %v922 = vpop.f32.mrf.mxu0
        %v923 = vpop.f32.mrf.mxu0
        %v924 = vadd.f32 %v693, %v923
        %v925 = vpop.f32.mrf.mxu0
        %926 = vdwg.mxu0
        %929 = vrot.lane.b32.xlu0 %v860, 96
        %v930 = vpop.permute.xlu0 %929
        %931 = vrot.lane.b32.xlu0 %v864, 96
        %v932 = vpop.permute.xlu0 %931
        %935 = vrot.lane.b32.xlu0 %v860, 64
        %v936 = vpop.permute.xlu0 %935
        %937 = vrot.lane.b32.xlu0 %v864, 64
        %v938 = vpop.permute.xlu0 %937
        %941 = vrot.lane.b32.xlu0 %v860, 32
        %v942 = vpop.permute.xlu0 %941
        %943 = vrot.lane.b32.xlu0 %v864, 32
        %v944 = vpop.permute.xlu0 %943
        %v947 = vcombine.low %v860, %v936
        %v948 = vcombine.high %v860, %v936
        %v950 = vunpack.c.l.s4 1983009808
        %v951 = vunpack.c.0.s8 %v950
        %v952 = vlaneseq
        %v953 = vshrl.u32 %v952, 7
        %v954 = vsub.s32 %v951, %v953
        %v955 = vrot.slane %v947, %v954
        %v957 = vunpack.c.l.s4 1983009808
        %v958 = vunpack.c.0.s8 %v957
        %v959 = vlaneseq
        %v960 = vshrl.u32 %v959, 7
        %v961 = vsub.s32 %v958, %v960
        %v962 = vrot.slane %v948, %v961
        %v963 = vcombine.low %v930, %v942
        %v964 = vcombine.high %v930, %v942
        %v966 = vunpack.c.l.s4 1983009808
        %v967 = vunpack.c.0.s8 %v966
        %v968 = vlaneseq
        %v969 = vshrl.u32 %v968, 7
        %v970 = vsub.s32 %v967, %v969
        %v971 = vrot.slane %v963, %v970
        %v973 = vunpack.c.l.s4 1983009808
        %v974 = vunpack.c.0.s8 %v973
        %v975 = vlaneseq
        %v976 = vshrl.u32 %v975, 7
        %v977 = vsub.s32 %v974, %v976
        %v978 = vrot.slane %v964, %v977
        %v979 = vcombine.low %v955, %v971
        %v980 = vcombine.high %v955, %v971
        %v982 = vunpack.c.l.s4 1934713408
        %v983 = vunpack.c.0.s8 %v982
        %v984 = vlaneseq
        %v985 = vshrl.u32 %v984, 7
        %v986 = vsub.s32 %v983, %v985
        %v987 = vrot.slane %v979, %v986
        %v989 = vunpack.c.l.s4 1934713408
        %v990 = vunpack.c.0.s8 %v989
        %v991 = vlaneseq
        %v992 = vshrl.u32 %v991, 7
        %v993 = vsub.s32 %v990, %v992
        %v994 = vrot.slane %v980, %v993
        %v995 = vcombine.low %v962, %v978
        %v996 = vcombine.high %v962, %v978
        %v998 = vunpack.c.l.s4 1934713408
        %v999 = vunpack.c.0.s8 %v998
        %v1000 = vlaneseq
        %v1001 = vshrl.u32 %v1000, 7
        %v1002 = vsub.s32 %v999, %v1001
        %v1003 = vrot.slane %v995, %v1002
        %v1005 = vunpack.c.l.s4 1934713408
        %v1006 = vunpack.c.0.s8 %v1005
        %v1007 = vlaneseq
        %v1008 = vshrl.u32 %v1007, 7
        %v1009 = vsub.s32 %v1006, %v1008
        %v1010 = vrot.slane %v996, %v1009
        %v1011 = vcombine.high %v987, 0.0
        %v1012 = vcombine.high %v994, 0.0
        %v1013 = vcombine.high %v1003, 0.0
        %v1014 = vcombine.high %v1010, 0.0
        %v1015 = vcombine.low %v864, %v938
        %v1016 = vcombine.high %v864, %v938
        %v1018 = vunpack.c.l.s4 1983009808
        %v1019 = vunpack.c.0.s8 %v1018
        %v1020 = vlaneseq
        %v1021 = vshrl.u32 %v1020, 7
        %v1022 = vsub.s32 %v1019, %v1021
        %v1023 = vrot.slane %v1015, %v1022
        %v1025 = vunpack.c.l.s4 1983009808
        %v1026 = vunpack.c.0.s8 %v1025
        %v1027 = vlaneseq
        %v1028 = vshrl.u32 %v1027, 7
        %v1029 = vsub.s32 %v1026, %v1028
        %v1030 = vrot.slane %v1016, %v1029
        %v1031 = vcombine.low %v932, %v944
        %v1032 = vcombine.high %v932, %v944
        %v1034 = vunpack.c.l.s4 1983009808
        %v1035 = vunpack.c.0.s8 %v1034
        %v1036 = vlaneseq
        %v1037 = vshrl.u32 %v1036, 7
        %v1038 = vsub.s32 %v1035, %v1037
        %v1039 = vrot.slane %v1031, %v1038
        %v1041 = vunpack.c.l.s4 1983009808
        %v1042 = vunpack.c.0.s8 %v1041
        %v1043 = vlaneseq
        %v1044 = vshrl.u32 %v1043, 7
        %v1045 = vsub.s32 %v1042, %v1044
        %v1046 = vrot.slane %v1032, %v1045
        %v1047 = vcombine.low %v1023, %v1039
        %v1048 = vcombine.high %v1023, %v1039
        %v1050 = vunpack.c.l.s4 1934713408
        %v1051 = vunpack.c.0.s8 %v1050
        %v1052 = vlaneseq
        %v1053 = vshrl.u32 %v1052, 7
        %v1054 = vsub.s32 %v1051, %v1053
        %v1055 = vrot.slane %v1047, %v1054
        %v1057 = vunpack.c.l.s4 1934713408
        %v1058 = vunpack.c.0.s8 %v1057
        %v1059 = vlaneseq
        %v1060 = vshrl.u32 %v1059, 7
        %v1061 = vsub.s32 %v1058, %v1060
        %v1062 = vrot.slane %v1048, %v1061
        %v1063 = vcombine.low %v1030, %v1046
        %v1064 = vcombine.high %v1030, %v1046
        %v1066 = vunpack.c.l.s4 1934713408
        %v1067 = vunpack.c.0.s8 %v1066
        %v1068 = vlaneseq
        %v1069 = vshrl.u32 %v1068, 7
        %v1070 = vsub.s32 %v1067, %v1069
        %v1071 = vrot.slane %v1063, %v1070
        %v1073 = vunpack.c.l.s4 1934713408
        %v1074 = vunpack.c.0.s8 %v1073
        %v1075 = vlaneseq
        %v1076 = vshrl.u32 %v1075, 7
        %v1077 = vsub.s32 %v1074, %v1076
        %v1078 = vrot.slane %v1064, %v1077
        %v1079 = vcombine.high %v1055, 0.0
        %v1080 = vcombine.high %v1062, 0.0
        %v1081 = vcombine.high %v1071, 0.0
        %v1082 = vcombine.high %v1078, 0.0
        %v1083 = vcombine.low %v987, %v994
        %v1085 = vunpack.c.l.s4 1983009808
        %v1086 = vunpack.c.0.s8 %v1085
        %v1087 = vlaneseq
        %v1088 = vshrl.u32 %v1087, 7
        %v1089 = vsub.s32 %v1086, %v1088
        %v1090 = vrot.slane %v1083, %v1089
        %v1091 = vcombine.low %v1011, %v1012
        %v1093 = vunpack.c.l.s4 1983009808
        %v1094 = vunpack.c.0.s8 %v1093
        %v1095 = vlaneseq
        %v1096 = vshrl.u32 %v1095, 7
        %v1097 = vsub.s32 %v1094, %v1096
        %v1098 = vrot.slane %v1091, %v1097
        %v1099 = vcombine.low %v1003, %v1010
        %v1101 = vunpack.c.l.s4 1983009808
        %v1102 = vunpack.c.0.s8 %v1101
        %v1103 = vlaneseq
        %v1104 = vshrl.u32 %v1103, 7
        %v1105 = vsub.s32 %v1102, %v1104
        %v1106 = vrot.slane %v1099, %v1105
        %v1107 = vcombine.low %v1013, %v1014
        %v1109 = vunpack.c.l.s4 1983009808
        %v1110 = vunpack.c.0.s8 %v1109
        %v1111 = vlaneseq
        %v1112 = vshrl.u32 %v1111, 7
        %v1113 = vsub.s32 %v1110, %v1112
        %v1114 = vrot.slane %v1107, %v1113
        %v1115 = vcombine.low %v1090, %v1098
        %v1116 = vcombine.high %v1090, %v1098
        %v1118 = vunpack.c.l.s4 1934713408
        %v1119 = vunpack.c.0.s8 %v1118
        %v1120 = vlaneseq
        %v1121 = vshrl.u32 %v1120, 7
        %v1122 = vsub.s32 %v1119, %v1121
        %v1123 = vrot.slane %v1115, %v1122
        %v1125 = vunpack.c.l.s4 1934713408
        %v1126 = vunpack.c.0.s8 %v1125
        %v1127 = vlaneseq
        %v1128 = vshrl.u32 %v1127, 7
        %v1129 = vsub.s32 %v1126, %v1128
        %v1130 = vrot.slane %v1116, %v1129
        %v1131 = vcombine.low %v1106, %v1114
        %v1132 = vcombine.high %v1106, %v1114
        %v1134 = vunpack.c.l.s4 1934713408
        %v1135 = vunpack.c.0.s8 %v1134
        %v1136 = vlaneseq
        %v1137 = vshrl.u32 %v1136, 7
        %v1138 = vsub.s32 %v1135, %v1137
        %v1139 = vrot.slane %v1131, %v1138
        %v1141 = vunpack.c.l.s4 1934713408
        %v1142 = vunpack.c.0.s8 %v1141
        %v1143 = vlaneseq
        %v1144 = vshrl.u32 %v1143, 7
        %v1145 = vsub.s32 %v1142, %v1144
        %v1146 = vrot.slane %v1132, %v1145
        %v1147 = vcombine.low %v1123, %v1139
        %v1148 = vcombine.high %v1123, %v1139
        %v1149 = vcombine.low %v1130, %v1146
        %v1150 = vcombine.high %v1130, %v1146
        %v1151 = vcombine.low %v1055, %v1062
        %v1153 = vunpack.c.l.s4 1983009808
        %v1154 = vunpack.c.0.s8 %v1153
        %v1155 = vlaneseq
        %v1156 = vshrl.u32 %v1155, 7
        %v1157 = vsub.s32 %v1154, %v1156
        %v1158 = vrot.slane %v1151, %v1157
        %v1159 = vcombine.low %v1079, %v1080
        %v1161 = vunpack.c.l.s4 1983009808
        %v1162 = vunpack.c.0.s8 %v1161
        %v1163 = vlaneseq
        %v1164 = vshrl.u32 %v1163, 7
        %v1165 = vsub.s32 %v1162, %v1164
        %v1166 = vrot.slane %v1159, %v1165
        %v1167 = vcombine.low %v1071, %v1078
        %v1169 = vunpack.c.l.s4 1983009808
        %v1170 = vunpack.c.0.s8 %v1169
        %v1171 = vlaneseq
        %v1172 = vshrl.u32 %v1171, 7
        %v1173 = vsub.s32 %v1170, %v1172
        %v1174 = vrot.slane %v1167, %v1173
        %v1175 = vcombine.low %v1081, %v1082
        %v1177 = vunpack.c.l.s4 1983009808
        %v1178 = vunpack.c.0.s8 %v1177
        %v1179 = vlaneseq
        %v1180 = vshrl.u32 %v1179, 7
        %v1181 = vsub.s32 %v1178, %v1180
        %v1182 = vrot.slane %v1175, %v1181
        %v1183 = vcombine.low %v1158, %v1166
        %v1184 = vcombine.high %v1158, %v1166
        %v1186 = vunpack.c.l.s4 1934713408
        %v1187 = vunpack.c.0.s8 %v1186
        %v1188 = vlaneseq
        %v1189 = vshrl.u32 %v1188, 7
        %v1190 = vsub.s32 %v1187, %v1189
        %v1191 = vrot.slane %v1183, %v1190
        %v1193 = vunpack.c.l.s4 1934713408
        %v1194 = vunpack.c.0.s8 %v1193
        %v1195 = vlaneseq
        %v1196 = vshrl.u32 %v1195, 7
        %v1197 = vsub.s32 %v1194, %v1196
        %v1198 = vrot.slane %v1184, %v1197
        %v1199 = vcombine.low %v1174, %v1182
        %v1200 = vcombine.high %v1174, %v1182
        %v1202 = vunpack.c.l.s4 1934713408
        %v1203 = vunpack.c.0.s8 %v1202
        %v1204 = vlaneseq
        %v1205 = vshrl.u32 %v1204, 7
        %v1206 = vsub.s32 %v1203, %v1205
        %v1207 = vrot.slane %v1199, %v1206
        %v1209 = vunpack.c.l.s4 1934713408
        %v1210 = vunpack.c.0.s8 %v1209
        %v1211 = vlaneseq
        %v1212 = vshrl.u32 %v1211, 7
        %v1213 = vsub.s32 %v1210, %v1212
        %v1214 = vrot.slane %v1200, %v1213
        %v1215 = vcombine.low %v1191, %v1207
        %v1216 = vcombine.high %v1191, %v1207
        %v1217 = vcombine.low %v1198, %v1214
        %v1218 = vcombine.high %v1198, %v1214
        %v1219 = vpack.c.bf16 %v1215, %v1147
        %v1220 = vpack.c.bf16 %v1216, %v1148
        %v1221 = vpack.c.bf16 %v1217, %v1149
        %v1222 = vpack.c.bf16 %v1218, %v1150
        %1225 = vrot.lane.b32.xlu0 %v862, 96
        %v1226 = vpop.permute.xlu0 %1225
        %1227 = vrot.lane.b32.xlu0 %v866, 96
        %v1228 = vpop.permute.xlu0 %1227
        %1231 = vrot.lane.b32.xlu0 %v862, 64
        %v1232 = vpop.permute.xlu0 %1231
        %1233 = vrot.lane.b32.xlu0 %v866, 64
        %v1234 = vpop.permute.xlu0 %1233
        %1237 = vrot.lane.b32.xlu0 %v862, 32
        %v1238 = vpop.permute.xlu0 %1237
        %1239 = vrot.lane.b32.xlu0 %v866, 32
        %v1240 = vpop.permute.xlu0 %1239
        %v1243 = vcombine.low %v862, %v1232
        %v1244 = vcombine.high %v862, %v1232
        %v1246 = vunpack.c.l.s4 1983009808
        %v1247 = vunpack.c.0.s8 %v1246
        %v1248 = vlaneseq
        %v1249 = vshrl.u32 %v1248, 7
        %v1250 = vsub.s32 %v1247, %v1249
        %v1251 = vrot.slane %v1243, %v1250
        %v1253 = vunpack.c.l.s4 1983009808
        %v1254 = vunpack.c.0.s8 %v1253
        %v1255 = vlaneseq
        %v1256 = vshrl.u32 %v1255, 7
        %v1257 = vsub.s32 %v1254, %v1256
        %v1258 = vrot.slane %v1244, %v1257
        %v1259 = vcombine.low %v1226, %v1238
        %v1260 = vcombine.high %v1226, %v1238
        %v1262 = vunpack.c.l.s4 1983009808
        %v1263 = vunpack.c.0.s8 %v1262
        %v1264 = vlaneseq
        %v1265 = vshrl.u32 %v1264, 7
        %v1266 = vsub.s32 %v1263, %v1265
        %v1267 = vrot.slane %v1259, %v1266
        %v1269 = vunpack.c.l.s4 1983009808
        %v1270 = vunpack.c.0.s8 %v1269
        %v1271 = vlaneseq
        %v1272 = vshrl.u32 %v1271, 7
        %v1273 = vsub.s32 %v1270, %v1272
        %v1274 = vrot.slane %v1260, %v1273
        %v1275 = vcombine.low %v1251, %v1267
        %v1276 = vcombine.high %v1251, %v1267
        %v1278 = vunpack.c.l.s4 1934713408
        %v1279 = vunpack.c.0.s8 %v1278
        %v1280 = vlaneseq
        %v1281 = vshrl.u32 %v1280, 7
        %v1282 = vsub.s32 %v1279, %v1281
        %v1283 = vrot.slane %v1275, %v1282
        %v1285 = vunpack.c.l.s4 1934713408
        %v1286 = vunpack.c.0.s8 %v1285
        %v1287 = vlaneseq
        %v1288 = vshrl.u32 %v1287, 7
        %v1289 = vsub.s32 %v1286, %v1288
        %v1290 = vrot.slane %v1276, %v1289
        %v1291 = vcombine.low %v1258, %v1274
        %v1292 = vcombine.high %v1258, %v1274
        %v1294 = vunpack.c.l.s4 1934713408
        %v1295 = vunpack.c.0.s8 %v1294
        %v1296 = vlaneseq
        %v1297 = vshrl.u32 %v1296, 7
        %v1298 = vsub.s32 %v1295, %v1297
        %v1299 = vrot.slane %v1291, %v1298
        %v1301 = vunpack.c.l.s4 1934713408
        %v1302 = vunpack.c.0.s8 %v1301
        %v1303 = vlaneseq
        %v1304 = vshrl.u32 %v1303, 7
        %v1305 = vsub.s32 %v1302, %v1304
        %v1306 = vrot.slane %v1292, %v1305
        %v1307 = vcombine.high %v1283, 0.0
        %v1308 = vcombine.high %v1290, 0.0
        %v1309 = vcombine.high %v1299, 0.0
        %v1310 = vcombine.high %v1306, 0.0
        %v1311 = vcombine.low %v866, %v1234
        %v1312 = vcombine.high %v866, %v1234
        %v1314 = vunpack.c.l.s4 1983009808
        %v1315 = vunpack.c.0.s8 %v1314
        %v1316 = vlaneseq
        %v1317 = vshrl.u32 %v1316, 7
        %v1318 = vsub.s32 %v1315, %v1317
        %v1319 = vrot.slane %v1311, %v1318
        %v1321 = vunpack.c.l.s4 1983009808
        %v1322 = vunpack.c.0.s8 %v1321
        %v1323 = vlaneseq
        %v1324 = vshrl.u32 %v1323, 7
        %v1325 = vsub.s32 %v1322, %v1324
        %v1326 = vrot.slane %v1312, %v1325
        %v1327 = vcombine.low %v1228, %v1240
        %v1328 = vcombine.high %v1228, %v1240
        %v1330 = vunpack.c.l.s4 1983009808
        %v1331 = vunpack.c.0.s8 %v1330
        %v1332 = vlaneseq
        %v1333 = vshrl.u32 %v1332, 7
        %v1334 = vsub.s32 %v1331, %v1333
        %v1335 = vrot.slane %v1327, %v1334
        %v1337 = vunpack.c.l.s4 1983009808
        %v1338 = vunpack.c.0.s8 %v1337
        %v1339 = vlaneseq
        %v1340 = vshrl.u32 %v1339, 7
        %v1341 = vsub.s32 %v1338, %v1340
        %v1342 = vrot.slane %v1328, %v1341
        %v1343 = vcombine.low %v1319, %v1335
        %v1344 = vcombine.high %v1319, %v1335
        %v1346 = vunpack.c.l.s4 1934713408
        %v1347 = vunpack.c.0.s8 %v1346
        %v1348 = vlaneseq
        %v1349 = vshrl.u32 %v1348, 7
        %v1350 = vsub.s32 %v1347, %v1349
        %v1351 = vrot.slane %v1343, %v1350
        %v1353 = vunpack.c.l.s4 1934713408
        %v1354 = vunpack.c.0.s8 %v1353
        %v1355 = vlaneseq
        %v1356 = vshrl.u32 %v1355, 7
        %v1357 = vsub.s32 %v1354, %v1356
        %v1358 = vrot.slane %v1344, %v1357
        %v1359 = vcombine.low %v1326, %v1342
        %v1360 = vcombine.high %v1326, %v1342
        %v1362 = vunpack.c.l.s4 1934713408
        %v1363 = vunpack.c.0.s8 %v1362
        %v1364 = vlaneseq
        %v1365 = vshrl.u32 %v1364, 7
        %v1366 = vsub.s32 %v1363, %v1365
        %v1367 = vrot.slane %v1359, %v1366
        %v1369 = vunpack.c.l.s4 1934713408
        %v1370 = vunpack.c.0.s8 %v1369
        %v1371 = vlaneseq
        %v1372 = vshrl.u32 %v1371, 7
        %v1373 = vsub.s32 %v1370, %v1372
        %v1374 = vrot.slane %v1360, %v1373
        %v1375 = vcombine.high %v1351, 0.0
        %v1376 = vcombine.high %v1358, 0.0
        %v1377 = vcombine.high %v1367, 0.0
        %v1378 = vcombine.high %v1374, 0.0
        %v1379 = vcombine.low %v1283, %v1290
        %v1381 = vunpack.c.l.s4 1983009808
        %v1382 = vunpack.c.0.s8 %v1381
        %v1383 = vlaneseq
        %v1384 = vshrl.u32 %v1383, 7
        %v1385 = vsub.s32 %v1382, %v1384
        %v1386 = vrot.slane %v1379, %v1385
        %v1387 = vcombine.low %v1307, %v1308
        %v1389 = vunpack.c.l.s4 1983009808
        %v1390 = vunpack.c.0.s8 %v1389
        %v1391 = vlaneseq
        %v1392 = vshrl.u32 %v1391, 7
        %v1393 = vsub.s32 %v1390, %v1392
        %v1394 = vrot.slane %v1387, %v1393
        %v1395 = vcombine.low %v1299, %v1306
        %v1397 = vunpack.c.l.s4 1983009808
        %v1398 = vunpack.c.0.s8 %v1397
        %v1399 = vlaneseq
        %v1400 = vshrl.u32 %v1399, 7
        %v1401 = vsub.s32 %v1398, %v1400
        %v1402 = vrot.slane %v1395, %v1401
        %v1403 = vcombine.low %v1309, %v1310
        %v1405 = vunpack.c.l.s4 1983009808
        %v1406 = vunpack.c.0.s8 %v1405
        %v1407 = vlaneseq
        %v1408 = vshrl.u32 %v1407, 7
        %v1409 = vsub.s32 %v1406, %v1408
        %v1410 = vrot.slane %v1403, %v1409
        %v1411 = vcombine.low %v1386, %v1394
        %v1412 = vcombine.high %v1386, %v1394
        %v1414 = vunpack.c.l.s4 1934713408
        %v1415 = vunpack.c.0.s8 %v1414
        %v1416 = vlaneseq
        %v1417 = vshrl.u32 %v1416, 7
        %v1418 = vsub.s32 %v1415, %v1417
        %v1419 = vrot.slane %v1411, %v1418
        %v1421 = vunpack.c.l.s4 1934713408
        %v1422 = vunpack.c.0.s8 %v1421
        %v1423 = vlaneseq
        %v1424 = vshrl.u32 %v1423, 7
        %v1425 = vsub.s32 %v1422, %v1424
        %v1426 = vrot.slane %v1412, %v1425
        %v1427 = vcombine.low %v1402, %v1410
        %v1428 = vcombine.high %v1402, %v1410
        %v1430 = vunpack.c.l.s4 1934713408
        %v1431 = vunpack.c.0.s8 %v1430
        %v1432 = vlaneseq
        %v1433 = vshrl.u32 %v1432, 7
        %v1434 = vsub.s32 %v1431, %v1433
        %v1435 = vrot.slane %v1427, %v1434
        %v1437 = vunpack.c.l.s4 1934713408
        %v1438 = vunpack.c.0.s8 %v1437
        %v1439 = vlaneseq
        %v1440 = vshrl.u32 %v1439, 7
        %v1441 = vsub.s32 %v1438, %v1440
        %v1442 = vrot.slane %v1428, %v1441
        %v1443 = vcombine.low %v1419, %v1435
        %v1444 = vcombine.high %v1419, %v1435
        %v1445 = vcombine.low %v1426, %v1442
        %v1446 = vcombine.high %v1426, %v1442
        %v1447 = vcombine.low %v1351, %v1358
        %v1449 = vunpack.c.l.s4 1983009808
        %v1450 = vunpack.c.0.s8 %v1449
        %v1451 = vlaneseq
        %v1452 = vshrl.u32 %v1451, 7
        %v1453 = vsub.s32 %v1450, %v1452
        %v1454 = vrot.slane %v1447, %v1453
        %v1455 = vcombine.low %v1375, %v1376
        %v1457 = vunpack.c.l.s4 1983009808
        %v1458 = vunpack.c.0.s8 %v1457
        %v1459 = vlaneseq
        %v1460 = vshrl.u32 %v1459, 7
        %v1461 = vsub.s32 %v1458, %v1460
        %v1462 = vrot.slane %v1455, %v1461
        %v1463 = vcombine.low %v1367, %v1374
        %v1465 = vunpack.c.l.s4 1983009808
        %v1466 = vunpack.c.0.s8 %v1465
        %v1467 = vlaneseq
        %v1468 = vshrl.u32 %v1467, 7
        %v1469 = vsub.s32 %v1466, %v1468
        %v1470 = vrot.slane %v1463, %v1469
        %v1471 = vcombine.low %v1377, %v1378
        %v1473 = vunpack.c.l.s4 1983009808
        %v1474 = vunpack.c.0.s8 %v1473
        %v1475 = vlaneseq
        %v1476 = vshrl.u32 %v1475, 7
        %v1477 = vsub.s32 %v1474, %v1476
        %v1478 = vrot.slane %v1471, %v1477
        %v1479 = vcombine.low %v1454, %v1462
        %v1480 = vcombine.high %v1454, %v1462
        %v1482 = vunpack.c.l.s4 1934713408
        %v1483 = vunpack.c.0.s8 %v1482
        %v1484 = vlaneseq
        %v1485 = vshrl.u32 %v1484, 7
        %v1486 = vsub.s32 %v1483, %v1485
        %v1487 = vrot.slane %v1479, %v1486
        %v1489 = vunpack.c.l.s4 1934713408
        %v1490 = vunpack.c.0.s8 %v1489
        %v1491 = vlaneseq
        %v1492 = vshrl.u32 %v1491, 7
        %v1493 = vsub.s32 %v1490, %v1492
        %v1494 = vrot.slane %v1480, %v1493
        %v1495 = vcombine.low %v1470, %v1478
        %v1496 = vcombine.high %v1470, %v1478
        %v1498 = vunpack.c.l.s4 1934713408
        %v1499 = vunpack.c.0.s8 %v1498
        %v1500 = vlaneseq
        %v1501 = vshrl.u32 %v1500, 7
        %v1502 = vsub.s32 %v1499, %v1501
        %v1503 = vrot.slane %v1495, %v1502
        %v1505 = vunpack.c.l.s4 1934713408
        %v1506 = vunpack.c.0.s8 %v1505
        %v1507 = vlaneseq
        %v1508 = vshrl.u32 %v1507, 7
        %v1509 = vsub.s32 %v1506, %v1508
        %v1510 = vrot.slane %v1496, %v1509
        %v1511 = vcombine.low %v1487, %v1503
        %v1512 = vcombine.high %v1487, %v1503
        %v1513 = vcombine.low %v1494, %v1510
        %v1514 = vcombine.high %v1494, %v1510
        %v1515 = vpack.c.bf16 %v1511, %v1443
        %v1516 = vpack.c.bf16 %v1512, %v1444
        %v1517 = vpack.c.bf16 %v1513, %v1445
        %v1518 = vpack.c.bf16 %v1514, %v1446
        %1521 = vrot.lane.b32.xlu0 %v913, 96
        %v1522 = vpop.permute.xlu0 %1521
        %1523 = vrot.lane.b32.xlu0 %v916, 96
        %v1524 = vpop.permute.xlu0 %1523
        %1527 = vrot.lane.b32.xlu0 %v913, 64
        %v1528 = vpop.permute.xlu0 %1527
        %1529 = vrot.lane.b32.xlu0 %v916, 64
        %v1530 = vpop.permute.xlu0 %1529
        %1533 = vrot.lane.b32.xlu0 %v913, 32
        %v1534 = vpop.permute.xlu0 %1533
        %1535 = vrot.lane.b32.xlu0 %v916, 32
        %v1536 = vpop.permute.xlu0 %1535
        %v1539 = vcombine.low %v913, %v1528
        %v1540 = vcombine.high %v913, %v1528
        %v1542 = vunpack.c.l.s4 1983009808
        %v1543 = vunpack.c.0.s8 %v1542
        %v1544 = vlaneseq
        %v1545 = vshrl.u32 %v1544, 7
        %v1546 = vsub.s32 %v1543, %v1545
        %v1547 = vrot.slane %v1539, %v1546
        %v1549 = vunpack.c.l.s4 1983009808
        %v1550 = vunpack.c.0.s8 %v1549
        %v1551 = vlaneseq
        %v1552 = vshrl.u32 %v1551, 7
        %v1553 = vsub.s32 %v1550, %v1552
        %v1554 = vrot.slane %v1540, %v1553
        %v1555 = vcombine.low %v1522, %v1534
        %v1556 = vcombine.high %v1522, %v1534
        %v1558 = vunpack.c.l.s4 1983009808
        %v1559 = vunpack.c.0.s8 %v1558
        %v1560 = vlaneseq
        %v1561 = vshrl.u32 %v1560, 7
        %v1562 = vsub.s32 %v1559, %v1561
        %v1563 = vrot.slane %v1555, %v1562
        %v1565 = vunpack.c.l.s4 1983009808
        %v1566 = vunpack.c.0.s8 %v1565
        %v1567 = vlaneseq
        %v1568 = vshrl.u32 %v1567, 7
        %v1569 = vsub.s32 %v1566, %v1568
        %v1570 = vrot.slane %v1556, %v1569
        %v1571 = vcombine.low %v1547, %v1563
        %v1572 = vcombine.high %v1547, %v1563
        %v1574 = vunpack.c.l.s4 1934713408
        %v1575 = vunpack.c.0.s8 %v1574
        %v1576 = vlaneseq
        %v1577 = vshrl.u32 %v1576, 7
        %v1578 = vsub.s32 %v1575, %v1577
        %v1579 = vrot.slane %v1571, %v1578
        %v1581 = vunpack.c.l.s4 1934713408
        %v1582 = vunpack.c.0.s8 %v1581
        %v1583 = vlaneseq
        %v1584 = vshrl.u32 %v1583, 7
        %v1585 = vsub.s32 %v1582, %v1584
        %v1586 = vrot.slane %v1572, %v1585
        %v1587 = vcombine.low %v1554, %v1570
        %v1588 = vcombine.high %v1554, %v1570
        %v1590 = vunpack.c.l.s4 1934713408
        %v1591 = vunpack.c.0.s8 %v1590
        %v1592 = vlaneseq
        %v1593 = vshrl.u32 %v1592, 7
        %v1594 = vsub.s32 %v1591, %v1593
        %v1595 = vrot.slane %v1587, %v1594
        %v1597 = vunpack.c.l.s4 1934713408
        %v1598 = vunpack.c.0.s8 %v1597
        %v1599 = vlaneseq
        %v1600 = vshrl.u32 %v1599, 7
        %v1601 = vsub.s32 %v1598, %v1600
        %v1602 = vrot.slane %v1588, %v1601
        %v1603 = vcombine.high %v1579, 0.0
        %v1604 = vcombine.high %v1586, 0.0
        %v1605 = vcombine.high %v1595, 0.0
        %v1606 = vcombine.high %v1602, 0.0
        %v1607 = vcombine.low %v916, %v1530
        %v1608 = vcombine.high %v916, %v1530
        %v1610 = vunpack.c.l.s4 1983009808
        %v1611 = vunpack.c.0.s8 %v1610
        %v1612 = vlaneseq
        %v1613 = vshrl.u32 %v1612, 7
        %v1614 = vsub.s32 %v1611, %v1613
        %v1615 = vrot.slane %v1607, %v1614
        %v1617 = vunpack.c.l.s4 1983009808
        %v1618 = vunpack.c.0.s8 %v1617
        %v1619 = vlaneseq
        %v1620 = vshrl.u32 %v1619, 7
        %v1621 = vsub.s32 %v1618, %v1620
        %v1622 = vrot.slane %v1608, %v1621
        %v1623 = vcombine.low %v1524, %v1536
        %v1624 = vcombine.high %v1524, %v1536
        %v1626 = vunpack.c.l.s4 1983009808
        %v1627 = vunpack.c.0.s8 %v1626
        %v1628 = vlaneseq
        %v1629 = vshrl.u32 %v1628, 7
        %v1630 = vsub.s32 %v1627, %v1629
        %v1631 = vrot.slane %v1623, %v1630
        %v1633 = vunpack.c.l.s4 1983009808
        %v1634 = vunpack.c.0.s8 %v1633
        %v1635 = vlaneseq
        %v1636 = vshrl.u32 %v1635, 7
        %v1637 = vsub.s32 %v1634, %v1636
        %v1638 = vrot.slane %v1624, %v1637
        %v1639 = vcombine.low %v1615, %v1631
        %v1640 = vcombine.high %v1615, %v1631
        %v1642 = vunpack.c.l.s4 1934713408
        %v1643 = vunpack.c.0.s8 %v1642
        %v1644 = vlaneseq
        %v1645 = vshrl.u32 %v1644, 7
        %v1646 = vsub.s32 %v1643, %v1645
        %v1647 = vrot.slane %v1639, %v1646
        %v1649 = vunpack.c.l.s4 1934713408
        %v1650 = vunpack.c.0.s8 %v1649
        %v1651 = vlaneseq
        %v1652 = vshrl.u32 %v1651, 7
        %v1653 = vsub.s32 %v1650, %v1652
        %v1654 = vrot.slane %v1640, %v1653
        %v1655 = vcombine.low %v1622, %v1638
        %v1656 = vcombine.high %v1622, %v1638
        %v1658 = vunpack.c.l.s4 1934713408
        %v1659 = vunpack.c.0.s8 %v1658
        %v1660 = vlaneseq
        %v1661 = vshrl.u32 %v1660, 7
        %v1662 = vsub.s32 %v1659, %v1661
        %v1663 = vrot.slane %v1655, %v1662
        %v1665 = vunpack.c.l.s4 1934713408
        %v1666 = vunpack.c.0.s8 %v1665
        %v1667 = vlaneseq
        %v1668 = vshrl.u32 %v1667, 7
        %v1669 = vsub.s32 %v1666, %v1668
        %v1670 = vrot.slane %v1656, %v1669
        %v1671 = vcombine.high %v1647, 0.0
        %v1672 = vcombine.high %v1654, 0.0
        %v1673 = vcombine.high %v1663, 0.0
        %v1674 = vcombine.high %v1670, 0.0
        %v1675 = vcombine.low %v1579, %v1586
        %v1677 = vunpack.c.l.s4 1983009808
        %v1678 = vunpack.c.0.s8 %v1677
        %v1679 = vlaneseq
        %v1680 = vshrl.u32 %v1679, 7
        %v1681 = vsub.s32 %v1678, %v1680
        %v1682 = vrot.slane %v1675, %v1681
        %v1683 = vcombine.low %v1603, %v1604
        %v1685 = vunpack.c.l.s4 1983009808
        %v1686 = vunpack.c.0.s8 %v1685
        %v1687 = vlaneseq
        %v1688 = vshrl.u32 %v1687, 7
        %v1689 = vsub.s32 %v1686, %v1688
        %v1690 = vrot.slane %v1683, %v1689
        %v1691 = vcombine.low %v1595, %v1602
        %v1693 = vunpack.c.l.s4 1983009808
        %v1694 = vunpack.c.0.s8 %v1693
        %v1695 = vlaneseq
        %v1696 = vshrl.u32 %v1695, 7
        %v1697 = vsub.s32 %v1694, %v1696
        %v1698 = vrot.slane %v1691, %v1697
        %v1699 = vcombine.low %v1605, %v1606
        %v1701 = vunpack.c.l.s4 1983009808
        %v1702 = vunpack.c.0.s8 %v1701
        %v1703 = vlaneseq
        %v1704 = vshrl.u32 %v1703, 7
        %v1705 = vsub.s32 %v1702, %v1704
        %v1706 = vrot.slane %v1699, %v1705
        %v1707 = vcombine.low %v1682, %v1690
        %v1708 = vcombine.high %v1682, %v1690
        %v1710 = vunpack.c.l.s4 1934713408
        %v1711 = vunpack.c.0.s8 %v1710
        %v1712 = vlaneseq
        %v1713 = vshrl.u32 %v1712, 7
        %v1714 = vsub.s32 %v1711, %v1713
        %v1715 = vrot.slane %v1707, %v1714
        %v1717 = vunpack.c.l.s4 1934713408
        %v1718 = vunpack.c.0.s8 %v1717
        %v1719 = vlaneseq
        %v1720 = vshrl.u32 %v1719, 7
        %v1721 = vsub.s32 %v1718, %v1720
        %v1722 = vrot.slane %v1708, %v1721
        %v1723 = vcombine.low %v1698, %v1706
        %v1724 = vcombine.high %v1698, %v1706
        %v1726 = vunpack.c.l.s4 1934713408
        %v1727 = vunpack.c.0.s8 %v1726
        %v1728 = vlaneseq
        %v1729 = vshrl.u32 %v1728, 7
        %v1730 = vsub.s32 %v1727, %v1729
        %v1731 = vrot.slane %v1723, %v1730
        %v1733 = vunpack.c.l.s4 1934713408
        %v1734 = vunpack.c.0.s8 %v1733
        %v1735 = vlaneseq
        %v1736 = vshrl.u32 %v1735, 7
        %v1737 = vsub.s32 %v1734, %v1736
        %v1738 = vrot.slane %v1724, %v1737
        %v1739 = vcombine.low %v1715, %v1731
        %v1740 = vcombine.high %v1715, %v1731
        %v1741 = vcombine.low %v1722, %v1738
        %v1742 = vcombine.high %v1722, %v1738
        %v1743 = vcombine.low %v1647, %v1654
        %v1745 = vunpack.c.l.s4 1983009808
        %v1746 = vunpack.c.0.s8 %v1745
        %v1747 = vlaneseq
        %v1748 = vshrl.u32 %v1747, 7
        %v1749 = vsub.s32 %v1746, %v1748
        %v1750 = vrot.slane %v1743, %v1749
        %v1751 = vcombine.low %v1671, %v1672
        %v1753 = vunpack.c.l.s4 1983009808
        %v1754 = vunpack.c.0.s8 %v1753
        %v1755 = vlaneseq
        %v1756 = vshrl.u32 %v1755, 7
        %v1757 = vsub.s32 %v1754, %v1756
        %v1758 = vrot.slane %v1751, %v1757
        %v1759 = vcombine.low %v1663, %v1670
        %v1761 = vunpack.c.l.s4 1983009808
        %v1762 = vunpack.c.0.s8 %v1761
        %v1763 = vlaneseq
        %v1764 = vshrl.u32 %v1763, 7
        %v1765 = vsub.s32 %v1762, %v1764
        %v1766 = vrot.slane %v1759, %v1765
        %v1767 = vcombine.low %v1673, %v1674
        %v1769 = vunpack.c.l.s4 1983009808
        %v1770 = vunpack.c.0.s8 %v1769
        %v1771 = vlaneseq
        %v1772 = vshrl.u32 %v1771, 7
        %v1773 = vsub.s32 %v1770, %v1772
        %v1774 = vrot.slane %v1767, %v1773
        %v1775 = vcombine.low %v1750, %v1758
        %v1776 = vcombine.high %v1750, %v1758
        %v1778 = vunpack.c.l.s4 1934713408
        %v1779 = vunpack.c.0.s8 %v1778
        %v1780 = vlaneseq
        %v1781 = vshrl.u32 %v1780, 7
        %v1782 = vsub.s32 %v1779, %v1781
        %v1783 = vrot.slane %v1775, %v1782
        %v1785 = vunpack.c.l.s4 1934713408
        %v1786 = vunpack.c.0.s8 %v1785
        %v1787 = vlaneseq
        %v1788 = vshrl.u32 %v1787, 7
        %v1789 = vsub.s32 %v1786, %v1788
        %v1790 = vrot.slane %v1776, %v1789
        %v1791 = vcombine.low %v1766, %v1774
        %v1792 = vcombine.high %v1766, %v1774
        %v1794 = vunpack.c.l.s4 1934713408
        %v1795 = vunpack.c.0.s8 %v1794
        %v1796 = vlaneseq
        %v1797 = vshrl.u32 %v1796, 7
        %v1798 = vsub.s32 %v1795, %v1797
        %v1799 = vrot.slane %v1791, %v1798
        %v1801 = vunpack.c.l.s4 1934713408
        %v1802 = vunpack.c.0.s8 %v1801
        %v1803 = vlaneseq
        %v1804 = vshrl.u32 %v1803, 7
        %v1805 = vsub.s32 %v1802, %v1804
        %v1806 = vrot.slane %v1792, %v1805
        %v1807 = vcombine.low %v1783, %v1799
        %v1808 = vcombine.high %v1783, %v1799
        %v1809 = vcombine.low %v1790, %v1806
        %v1810 = vcombine.high %v1790, %v1806
        %v1811 = vpack.c.bf16 %v1807, %v1739
        %v1812 = vpack.c.bf16 %v1808, %v1740
        %v1813 = vpack.c.bf16 %v1809, %v1741
        %v1814 = vpack.c.bf16 %v1810, %v1742
        %vm1815 = vcmask 261120
        %v1817 = vsel %vm1815, %v1219, 0
        %v1820 = vsel %vm1815, %v1515, 0
        %1822 = vmatprep.subr.bf16.mxu0 0
        %1823 = vmatpush1.bf16.xpose.msra.mxu0 0
        %1824 = vmatprep.subr.bf16.mxu0 0
        %1825 = vmatpush1.bf16.xpose.msra.mxu0 0
        %1826 = vmatprep.subr.bf16.mxu0 0
        %1827 = vmatpush1.bf16.xpose.msra.mxu0 0
        %1828 = vmatprep.subr.bf16.mxu0 0
        %1829 = vmatpush1.bf16.xpose.msra.mxu0 0
        %1830 = vmatprep.subr.bf16.mxu0 0
        %1831 = vmatpush1.bf16.xpose.msra.mxu0 0
        %1832 = vmatprep.subr.bf16.mxu0 0
        %1833 = vmatpush1.bf16.xpose.msra.mxu0 0
        %1834 = vmatprep.subr.bf16.mxu0 0
        %1835 = vmatpush1.bf16.xpose.msra.mxu0 0
        %1836 = vmatprep.subr.bf16.mxu0 0
        %1837 = vmatpush1.bf16.xpose.msra.mxu0 %v1820
        %1838 = vmatprep.subr.bf16.mxu0 0
        %1839 = vmatpush2.bf16.xpose.msra.mxu0 0
        %1840 = vmatprep.subr.bf16.mxu0 0
        %1841 = vmatpush2.bf16.xpose.msra.mxu0 0
        %1842 = vmatprep.subr.bf16.mxu0 0
        %1843 = vmatpush2.bf16.xpose.msra.mxu0 0
        %1844 = vmatprep.subr.bf16.mxu0 0
        %1845 = vmatpush2.bf16.xpose.msra.mxu0 0
        %1846 = vmatprep.subr.bf16.mxu0 0
        %1847 = vmatpush2.bf16.xpose.msra.mxu0 0
        %1848 = vmatprep.subr.bf16.mxu0 0
        %1849 = vmatpush2.bf16.xpose.msra.mxu0 0
        %1850 = vmatprep.subr.bf16.mxu0 0
        %1851 = vmatpush2.bf16.xpose.msra.mxu0 0
        %1852 = vmatprep.subr.bf16.mxu0 0
        %1853 = vmatpush2.bf16.xpose.msra.mxu0 0
        %1854 = vmatprep.mubr.bf16.mxu0 0
        %1855 = vmatmul.mubr.bf16.gmra.mxu0 %v1817
        %v1856 = vpop.f32.mrf.mxu0
        %v1857 = vadd.f32 0.0, %v1856
        %v1858 = vpop.f32.mrf.mxu0
        %v1859 = vpop.f32.mrf.mxu0
        %v1860 = vadd.f32 0.0, %v1859
        %v1861 = vpop.f32.mrf.mxu0
        %1862 = vdwg.mxu0
        %v1864 = vsel %vm1815, %v1220, 0
        %v1867 = vsel %vm1815, %v1516, 0
        %1869 = vmatprep.subr.bf16.mxu0 0
        %1870 = vmatpush1.bf16.xpose.msra.mxu0 0
        %1871 = vmatprep.subr.bf16.mxu0 0
        %1872 = vmatpush1.bf16.xpose.msra.mxu0 0
        %1873 = vmatprep.subr.bf16.mxu0 0
        %1874 = vmatpush1.bf16.xpose.msra.mxu0 0
        %1875 = vmatprep.subr.bf16.mxu0 0
        %1876 = vmatpush1.bf16.xpose.msra.mxu0 0
        %1877 = vmatprep.subr.bf16.mxu0 0
        %1878 = vmatpush1.bf16.xpose.msra.mxu0 0
        %1879 = vmatprep.subr.bf16.mxu0 0
        %1880 = vmatpush1.bf16.xpose.msra.mxu0 0
        %1881 = vmatprep.subr.bf16.mxu0 0
        %1882 = vmatpush1.bf16.xpose.msra.mxu0 0
        %1883 = vmatprep.subr.bf16.mxu0 0
        %1884 = vmatpush1.bf16.xpose.msra.mxu0 %v1867
        %1885 = vmatprep.subr.bf16.mxu0 0
        %1886 = vmatpush2.bf16.xpose.msra.mxu0 0
        %1887 = vmatprep.subr.bf16.mxu0 0
        %1888 = vmatpush2.bf16.xpose.msra.mxu0 0
        %1889 = vmatprep.subr.bf16.mxu0 0
        %1890 = vmatpush2.bf16.xpose.msra.mxu0 0
        %1891 = vmatprep.subr.bf16.mxu0 0
        %1892 = vmatpush2.bf16.xpose.msra.mxu0 0
        %1893 = vmatprep.subr.bf16.mxu0 0
        %1894 = vmatpush2.bf16.xpose.msra.mxu0 0
        %1895 = vmatprep.subr.bf16.mxu0 0
        %1896 = vmatpush2.bf16.xpose.msra.mxu0 0
        %1897 = vmatprep.subr.bf16.mxu0 0
        %1898 = vmatpush2.bf16.xpose.msra.mxu0 0
        %1899 = vmatprep.subr.bf16.mxu0 0
        %1900 = vmatpush2.bf16.xpose.msra.mxu0 0
        %1901 = vmatprep.mubr.bf16.mxu0 0
        %1902 = vmatmul.mubr.bf16.gmra.mxu0 %v1864
        %v1903 = vpop.f32.mrf.mxu0
        %v1904 = vadd.f32 0.0, %v1903
        %v1905 = vpop.f32.mrf.mxu0
        %v1906 = vpop.f32.mrf.mxu0
        %v1907 = vadd.f32 0.0, %v1906
        %v1908 = vpop.f32.mrf.mxu0
        %1909 = vdwg.mxu0
        %v1911 = vsel %vm1815, %v1221, 0
        %v1914 = vsel %vm1815, %v1517, 0
        %1916 = vmatprep.subr.bf16.mxu0 0
        %1917 = vmatpush1.bf16.xpose.msra.mxu0 0
        %1918 = vmatprep.subr.bf16.mxu0 0
        %1919 = vmatpush1.bf16.xpose.msra.mxu0 0
        %1920 = vmatprep.subr.bf16.mxu0 0
        %1921 = vmatpush1.bf16.xpose.msra.mxu0 0
        %1922 = vmatprep.subr.bf16.mxu0 0
        %1923 = vmatpush1.bf16.xpose.msra.mxu0 0
        %1924 = vmatprep.subr.bf16.mxu0 0
        %1925 = vmatpush1.bf16.xpose.msra.mxu0 0
        %1926 = vmatprep.subr.bf16.mxu0 0
        %1927 = vmatpush1.bf16.xpose.msra.mxu0 0
        %1928 = vmatprep.subr.bf16.mxu0 0
        %1929 = vmatpush1.bf16.xpose.msra.mxu0 0
        %1930 = vmatprep.subr.bf16.mxu0 0
        %1931 = vmatpush1.bf16.xpose.msra.mxu0 %v1914
        %1932 = vmatprep.subr.bf16.mxu0 0
        %1933 = vmatpush2.bf16.xpose.msra.mxu0 0
        %1934 = vmatprep.subr.bf16.mxu0 0
        %1935 = vmatpush2.bf16.xpose.msra.mxu0 0
        %1936 = vmatprep.subr.bf16.mxu0 0
        %1937 = vmatpush2.bf16.xpose.msra.mxu0 0
        %1938 = vmatprep.subr.bf16.mxu0 0
        %1939 = vmatpush2.bf16.xpose.msra.mxu0 0
        %1940 = vmatprep.subr.bf16.mxu0 0
        %1941 = vmatpush2.bf16.xpose.msra.mxu0 0
        %1942 = vmatprep.subr.bf16.mxu0 0
        %1943 = vmatpush2.bf16.xpose.msra.mxu0 0
        %1944 = vmatprep.subr.bf16.mxu0 0
        %1945 = vmatpush2.bf16.xpose.msra.mxu0 0
        %1946 = vmatprep.subr.bf16.mxu0 0
        %1947 = vmatpush2.bf16.xpose.msra.mxu0 0
        %1948 = vmatprep.mubr.bf16.mxu0 0
        %1949 = vmatmul.mubr.bf16.gmra.mxu0 %v1911
        %v1950 = vpop.f32.mrf.mxu0
        %v1951 = vadd.f32 0.0, %v1950
        %v1952 = vpop.f32.mrf.mxu0
        %v1953 = vpop.f32.mrf.mxu0
        %v1954 = vadd.f32 0.0, %v1953
        %v1955 = vpop.f32.mrf.mxu0
        %1956 = vdwg.mxu0
        %v1958 = vsel %vm1815, %v1222, 0
        %v1961 = vsel %vm1815, %v1518, 0
        %1963 = vmatprep.subr.bf16.mxu0 0
        %1964 = vmatpush1.bf16.xpose.msra.mxu0 0
        %1965 = vmatprep.subr.bf16.mxu0 0
        %1966 = vmatpush1.bf16.xpose.msra.mxu0 0
        %1967 = vmatprep.subr.bf16.mxu0 0
        %1968 = vmatpush1.bf16.xpose.msra.mxu0 0
        %1969 = vmatprep.subr.bf16.mxu0 0
        %1970 = vmatpush1.bf16.xpose.msra.mxu0 0
        %1971 = vmatprep.subr.bf16.mxu0 0
        %1972 = vmatpush1.bf16.xpose.msra.mxu0 0
        %1973 = vmatprep.subr.bf16.mxu0 0
        %1974 = vmatpush1.bf16.xpose.msra.mxu0 0
        %1975 = vmatprep.subr.bf16.mxu0 0
        %1976 = vmatpush1.bf16.xpose.msra.mxu0 0
        %1977 = vmatprep.subr.bf16.mxu0 0
        %1978 = vmatpush1.bf16.xpose.msra.mxu0 %v1961
        %1979 = vmatprep.subr.bf16.mxu0 0
        %1980 = vmatpush2.bf16.xpose.msra.mxu0 0
        %1981 = vmatprep.subr.bf16.mxu0 0
        %1982 = vmatpush2.bf16.xpose.msra.mxu0 0
        %1983 = vmatprep.subr.bf16.mxu0 0
        %1984 = vmatpush2.bf16.xpose.msra.mxu0 0
        %1985 = vmatprep.subr.bf16.mxu0 0
        %1986 = vmatpush2.bf16.xpose.msra.mxu0 0
        %1987 = vmatprep.subr.bf16.mxu0 0
        %1988 = vmatpush2.bf16.xpose.msra.mxu0 0
        %1989 = vmatprep.subr.bf16.mxu0 0
        %1990 = vmatpush2.bf16.xpose.msra.mxu0 0
        %1991 = vmatprep.subr.bf16.mxu0 0
        %1992 = vmatpush2.bf16.xpose.msra.mxu0 0
        %1993 = vmatprep.subr.bf16.mxu0 0
        %1994 = vmatpush2.bf16.xpose.msra.mxu0 0
        %1995 = vmatprep.mubr.bf16.mxu0 0
        %1996 = vmatmul.mubr.bf16.gmra.mxu0 %v1958
        %v1997 = vpop.f32.mrf.mxu0
        %v1998 = vadd.f32 0.0, %v1997
        %v1999 = vpop.f32.mrf.mxu0
        %v2000 = vpop.f32.mrf.mxu0
        %v2001 = vadd.f32 0.0, %v2000
        %v2002 = vpop.f32.mrf.mxu0
        %2003 = vdwg.mxu0
        %vm2004 = vcmask 130048
        %v2005 = vsel %vm2004, %v1857, -inf
        %2006 = vmax.xlane.f32.xlu0 %v2005
        %v2007 = vpop.xlane.xlu0 %2006
        %v2008 = vsel %vm2004, %v1860, -inf
        %2009 = vmax.xlane.f32.xlu0 %v2008
        %v2010 = vpop.xlane.xlu0 %2009
        %v2011 = vsel %vm2004, %v1904, -inf
        %2012 = vmax.xlane.f32.xlu0 %v2011
        %v2013 = vpop.xlane.xlu0 %2012
        %v2014 = vsel %vm2004, %v1907, -inf
        %2015 = vmax.xlane.f32.xlu0 %v2014
        %v2016 = vpop.xlane.xlu0 %2015
        %v2017 = vsel %vm2004, %v1951, -inf
        %2018 = vmax.xlane.f32.xlu0 %v2017
        %v2019 = vpop.xlane.xlu0 %2018
        %v2020 = vsel %vm2004, %v1954, -inf
        %2021 = vmax.xlane.f32.xlu0 %v2020
        %v2022 = vpop.xlane.xlu0 %2021
        %v2023 = vsel %vm2004, %v1998, -inf
        %2024 = vmax.xlane.f32.xlu0 %v2023
        %v2025 = vpop.xlane.xlu0 %2024
        %v2026 = vsel %vm2004, %v2001, -inf
        %2027 = vmax.xlane.f32.xlu0 %v2026
        %v2028 = vpop.xlane.xlu0 %2027
        %v2029 = vsub.f32 %v1857, %v2007
        %v2030 = vsub.f32 %v1860, %v2010
        %v2031 = vsub.f32 %v1904, %v2013
        %v2032 = vsub.f32 %v1907, %v2016
        %v2033 = vsub.f32 %v1951, %v2019
        %v2034 = vsub.f32 %v1954, %v2022
        %v2035 = vsub.f32 %v1998, %v2025
        %v2036 = vsub.f32 %v2001, %v2028
        %v2037 = vmul.f32 %v2029, 1.442695
        %v2038 = vpow.pop %v2037
        %v2039 = vmul.f32 %v2030, 1.442695
        %v2040 = vpow.pop %v2039
        %v2041 = vmul.f32 %v2031, 1.442695
        %v2042 = vpow.pop %v2041
        %v2043 = vmul.f32 %v2032, 1.442695
        %v2044 = vpow.pop %v2043
        %v2045 = vmul.f32 %v2033, 1.442695
        %v2046 = vpow.pop %v2045
        %v2047 = vmul.f32 %v2034, 1.442695
        %v2048 = vpow.pop %v2047
        %v2049 = vmul.f32 %v2035, 1.442695
        %v2050 = vpow.pop %v2049
        %v2051 = vmul.f32 %v2036, 1.442695
        %v2052 = vpow.pop %v2051
        %v2053 = vsel %vm2004, %v2038, 0.0
        %2054 = vadd.xlane.f32.xlu0 %v2053
        %v2055 = vpop.xlane.xlu0 %2054
        %v2056 = vsel %vm2004, %v2040, 0.0
        %2057 = vadd.xlane.f32.xlu0 %v2056
        %v2058 = vpop.xlane.xlu0 %2057
        %v2059 = vsel %vm2004, %v2042, 0.0
        %2060 = vadd.xlane.f32.xlu0 %v2059
        %v2061 = vpop.xlane.xlu0 %2060
        %v2062 = vsel %vm2004, %v2044, 0.0
        %2063 = vadd.xlane.f32.xlu0 %v2062
        %v2064 = vpop.xlane.xlu0 %2063
        %v2065 = vsel %vm2004, %v2046, 0.0
        %2066 = vadd.xlane.f32.xlu0 %v2065
        %v2067 = vpop.xlane.xlu0 %2066
        %v2068 = vsel %vm2004, %v2048, 0.0
        %2069 = vadd.xlane.f32.xlu0 %v2068
        %v2070 = vpop.xlane.xlu0 %2069
        %v2071 = vsel %vm2004, %v2050, 0.0
        %2072 = vadd.xlane.f32.xlu0 %v2071
        %v2073 = vpop.xlane.xlu0 %2072
        %v2074 = vsel %vm2004, %v2052, 0.0
        %2075 = vadd.xlane.f32.xlu0 %v2074
        %v2076 = vpop.xlane.xlu0 %2075
        %v2077 = vrcp.pop %v2055
        %v2078 = vrcp.pop %v2058
        %v2079 = vrcp.pop %v2061
        %v2080 = vrcp.pop %v2064
        %v2081 = vrcp.pop %v2067
        %v2082 = vrcp.pop %v2070
        %v2083 = vrcp.pop %v2073
        %v2084 = vrcp.pop %v2076
        %v2085 = vmul.f32 %v2038, %v2077
        %v2086 = vmul.f32 %v2040, %v2078
        %v2087 = vmul.f32 %v2042, %v2079
        %v2088 = vmul.f32 %v2044, %v2080
        %v2089 = vmul.f32 %v2046, %v2081
        %v2090 = vmul.f32 %v2048, %v2082
        %v2091 = vmul.f32 %v2050, %v2083
        %v2092 = vmul.f32 %v2052, %v2084
        %v2093 = vpack.c.bf16 %v2086, %v2085
        %v2094 = vpack.c.bf16 %v2088, %v2087
        %v2095 = vpack.c.bf16 %v2090, %v2089
        %v2096 = vpack.c.bf16 %v2092, %v2091
        %v2098 = vsel %vm2004, %v2093, 0
        %2100 = vmatprep.subr.bf16.mxu0 0
        %2101 = vmatpush1.bf16.msra.mxu0 0
        %2102 = vmatprep.subr.bf16.mxu0 0
        %2103 = vmatpush1.bf16.msra.mxu0 0
        %2104 = vmatprep.subr.bf16.mxu0 0
        %2105 = vmatpush1.bf16.msra.mxu0 0
        %2106 = vmatprep.subr.bf16.mxu0 0
        %2107 = vmatpush1.bf16.msra.mxu0 0
        %2108 = vmatprep.subr.bf16.mxu0 0
        %2109 = vmatpush1.bf16.msra.mxu0 0
        %2110 = vmatprep.subr.bf16.mxu0 0
        %2111 = vmatpush1.bf16.msra.mxu0 0
        %2112 = vmatprep.subr.bf16.mxu0 0
        %2113 = vmatpush1.bf16.msra.mxu0 0
        %2114 = vmatprep.subr.bf16.mxu0 0
        %2115 = vmatpush1.bf16.msra.mxu0 %v1811
        %2116 = vmatprep.subr.bf16.mxu0 0
        %2117 = vmatpush2.bf16.msra.mxu0 0
        %2118 = vmatprep.subr.bf16.mxu0 0
        %2119 = vmatpush2.bf16.msra.mxu0 0
        %2120 = vmatprep.subr.bf16.mxu0 0
        %2121 = vmatpush2.bf16.msra.mxu0 0
        %2122 = vmatprep.subr.bf16.mxu0 0
        %2123 = vmatpush2.bf16.msra.mxu0 0
        %2124 = vmatprep.subr.bf16.mxu0 0
        %2125 = vmatpush2.bf16.msra.mxu0 0
        %2126 = vmatprep.subr.bf16.mxu0 0
        %2127 = vmatpush2.bf16.msra.mxu0 0
        %2128 = vmatprep.subr.bf16.mxu0 0
        %2129 = vmatpush2.bf16.msra.mxu0 0
        %2130 = vmatprep.subr.bf16.mxu0 0
        %2131 = vmatpush2.bf16.msra.mxu0 0
        %2132 = vmatprep.mubr.bf16.mxu0 0
        %2133 = vmatmul.mubr.bf16.gmra.mxu0 %v2098
        %v2134 = vpop.f32.mrf.mxu0
        %v2135 = vadd.f32 0.0, %v2134
        %v2136 = vpop.f32.mrf.mxu0
        %v2137 = vpop.f32.mrf.mxu0
        %v2138 = vadd.f32 0.0, %v2137
        %v2139 = vpop.f32.mrf.mxu0
        %2140 = vdwg.mxu0
        %v2142 = vsel %vm2004, %v2094, 0
        %2144 = vmatprep.subr.bf16.mxu0 0
        %2145 = vmatpush1.bf16.msra.mxu0 0
        %2146 = vmatprep.subr.bf16.mxu0 0
        %2147 = vmatpush1.bf16.msra.mxu0 0
        %2148 = vmatprep.subr.bf16.mxu0 0
        %2149 = vmatpush1.bf16.msra.mxu0 0
        %2150 = vmatprep.subr.bf16.mxu0 0
        %2151 = vmatpush1.bf16.msra.mxu0 0
        %2152 = vmatprep.subr.bf16.mxu0 0
        %2153 = vmatpush1.bf16.msra.mxu0 0
        %2154 = vmatprep.subr.bf16.mxu0 0
        %2155 = vmatpush1.bf16.msra.mxu0 0
        %2156 = vmatprep.subr.bf16.mxu0 0
        %2157 = vmatpush1.bf16.msra.mxu0 0
        %2158 = vmatprep.subr.bf16.mxu0 0
        %2159 = vmatpush1.bf16.msra.mxu0 %v1812
        %2160 = vmatprep.subr.bf16.mxu0 0
        %2161 = vmatpush2.bf16.msra.mxu0 0
        %2162 = vmatprep.subr.bf16.mxu0 0
        %2163 = vmatpush2.bf16.msra.mxu0 0
        %2164 = vmatprep.subr.bf16.mxu0 0
        %2165 = vmatpush2.bf16.msra.mxu0 0
        %2166 = vmatprep.subr.bf16.mxu0 0
        %2167 = vmatpush2.bf16.msra.mxu0 0
        %2168 = vmatprep.subr.bf16.mxu0 0
        %2169 = vmatpush2.bf16.msra.mxu0 0
        %2170 = vmatprep.subr.bf16.mxu0 0
        %2171 = vmatpush2.bf16.msra.mxu0 0
        %2172 = vmatprep.subr.bf16.mxu0 0
        %2173 = vmatpush2.bf16.msra.mxu0 0
        %2174 = vmatprep.subr.bf16.mxu0 0
        %2175 = vmatpush2.bf16.msra.mxu0 0
        %2176 = vmatprep.mubr.bf16.mxu0 0
        %2177 = vmatmul.mubr.bf16.gmra.mxu0 %v2142
        %v2178 = vpop.f32.mrf.mxu0
        %v2179 = vadd.f32 0.0, %v2178
        %v2180 = vpop.f32.mrf.mxu0
        %v2181 = vpop.f32.mrf.mxu0
        %v2182 = vadd.f32 0.0, %v2181
        %v2183 = vpop.f32.mrf.mxu0
        %2184 = vdwg.mxu0
        %v2186 = vsel %vm2004, %v2095, 0
        %2188 = vmatprep.subr.bf16.mxu0 0
        %2189 = vmatpush1.bf16.msra.mxu0 0
        %2190 = vmatprep.subr.bf16.mxu0 0
        %2191 = vmatpush1.bf16.msra.mxu0 0
        %2192 = vmatprep.subr.bf16.mxu0 0
        %2193 = vmatpush1.bf16.msra.mxu0 0
        %2194 = vmatprep.subr.bf16.mxu0 0
        %2195 = vmatpush1.bf16.msra.mxu0 0
        %2196 = vmatprep.subr.bf16.mxu0 0
        %2197 = vmatpush1.bf16.msra.mxu0 0
        %2198 = vmatprep.subr.bf16.mxu0 0
        %2199 = vmatpush1.bf16.msra.mxu0 0
        %2200 = vmatprep.subr.bf16.mxu0 0
        %2201 = vmatpush1.bf16.msra.mxu0 0
        %2202 = vmatprep.subr.bf16.mxu0 0
        %2203 = vmatpush1.bf16.msra.mxu0 %v1813
        %2204 = vmatprep.subr.bf16.mxu0 0
        %2205 = vmatpush2.bf16.msra.mxu0 0
        %2206 = vmatprep.subr.bf16.mxu0 0
        %2207 = vmatpush2.bf16.msra.mxu0 0
        %2208 = vmatprep.subr.bf16.mxu0 0
        %2209 = vmatpush2.bf16.msra.mxu0 0
        %2210 = vmatprep.subr.bf16.mxu0 0
        %2211 = vmatpush2.bf16.msra.mxu0 0
        %2212 = vmatprep.subr.bf16.mxu0 0
        %2213 = vmatpush2.bf16.msra.mxu0 0
        %2214 = vmatprep.subr.bf16.mxu0 0
        %2215 = vmatpush2.bf16.msra.mxu0 0
        %2216 = vmatprep.subr.bf16.mxu0 0
        %2217 = vmatpush2.bf16.msra.mxu0 0
        %2218 = vmatprep.subr.bf16.mxu0 0
        %2219 = vmatpush2.bf16.msra.mxu0 0
        %2220 = vmatprep.mubr.bf16.mxu0 0
        %2221 = vmatmul.mubr.bf16.gmra.mxu0 %v2186
        %v2222 = vpop.f32.mrf.mxu0
        %v2223 = vadd.f32 0.0, %v2222
        %v2224 = vpop.f32.mrf.mxu0
        %v2225 = vpop.f32.mrf.mxu0
        %v2226 = vadd.f32 0.0, %v2225
        %v2227 = vpop.f32.mrf.mxu0
        %2228 = vdwg.mxu0
        %v2230 = vsel %vm2004, %v2096, 0
        %2232 = vmatprep.subr.bf16.mxu0 0
        %2233 = vmatpush1.bf16.msra.mxu0 0
        %2234 = vmatprep.subr.bf16.mxu0 0
        %2235 = vmatpush1.bf16.msra.mxu0 0
        %2236 = vmatprep.subr.bf16.mxu0 0
        %2237 = vmatpush1.bf16.msra.mxu0 0
        %2238 = vmatprep.subr.bf16.mxu0 0
        %2239 = vmatpush1.bf16.msra.mxu0 0
        %2240 = vmatprep.subr.bf16.mxu0 0
        %2241 = vmatpush1.bf16.msra.mxu0 0
        %2242 = vmatprep.subr.bf16.mxu0 0
        %2243 = vmatpush1.bf16.msra.mxu0 0
        %2244 = vmatprep.subr.bf16.mxu0 0
        %2245 = vmatpush1.bf16.msra.mxu0 0
        %2246 = vmatprep.subr.bf16.mxu0 0
        %2247 = vmatpush1.bf16.msra.mxu0 %v1814
        %2248 = vmatprep.subr.bf16.mxu0 0
        %2249 = vmatpush2.bf16.msra.mxu0 0
        %2250 = vmatprep.subr.bf16.mxu0 0
        %2251 = vmatpush2.bf16.msra.mxu0 0
        %2252 = vmatprep.subr.bf16.mxu0 0
        %2253 = vmatpush2.bf16.msra.mxu0 0
        %2254 = vmatprep.subr.bf16.mxu0 0
        %2255 = vmatpush2.bf16.msra.mxu0 0
        %2256 = vmatprep.subr.bf16.mxu0 0
        %2257 = vmatpush2.bf16.msra.mxu0 0
        %2258 = vmatprep.subr.bf16.mxu0 0
        %2259 = vmatpush2.bf16.msra.mxu0 0
        %2260 = vmatprep.subr.bf16.mxu0 0
        %2261 = vmatpush2.bf16.msra.mxu0 0
        %2262 = vmatprep.subr.bf16.mxu0 0
        %2263 = vmatpush2.bf16.msra.mxu0 0
        %2264 = vmatprep.mubr.bf16.mxu0 0
        %2265 = vmatmul.mubr.bf16.gmra.mxu0 %v2230
        %v2266 = vpop.f32.mrf.mxu0
        %v2267 = vadd.f32 0.0, %v2266
        %v2268 = vpop.f32.mrf.mxu0
        %v2269 = vpop.f32.mrf.mxu0
        %v2270 = vadd.f32 0.0, %v2269
        %v2271 = vpop.f32.mrf.mxu0
        %2272 = vdwg.mxu0
        %v2273 = vcombine.low %v2135, %v2223
        %v2274 = vcombine.high %v2135, %v2223
        %v2276 = vunpack.c.l.s4 1983009808
        %v2277 = vunpack.c.0.s8 %v2276
        %v2278 = vlaneseq
        %v2279 = vshrl.u32 %v2278, 7
        %v2280 = vsub.s32 %v2277, %v2279
        %v2281 = vrot.slane %v2273, %v2280
        %v2283 = vunpack.c.l.s4 1983009808
        %v2284 = vunpack.c.0.s8 %v2283
        %v2285 = vlaneseq
        %v2286 = vshrl.u32 %v2285, 7
        %v2287 = vsub.s32 %v2284, %v2286
        %v2288 = vrot.slane %v2274, %v2287
        %v2289 = vcombine.low %v2179, %v2267
        %v2290 = vcombine.high %v2179, %v2267
        %v2292 = vunpack.c.l.s4 1983009808
        %v2293 = vunpack.c.0.s8 %v2292
        %v2294 = vlaneseq
        %v2295 = vshrl.u32 %v2294, 7
        %v2296 = vsub.s32 %v2293, %v2295
        %v2297 = vrot.slane %v2289, %v2296
        %v2299 = vunpack.c.l.s4 1983009808
        %v2300 = vunpack.c.0.s8 %v2299
        %v2301 = vlaneseq
        %v2302 = vshrl.u32 %v2301, 7
        %v2303 = vsub.s32 %v2300, %v2302
        %v2304 = vrot.slane %v2290, %v2303
        %v2305 = vcombine.low %v2281, %v2297
        %v2306 = vcombine.high %v2281, %v2297
        %v2308 = vunpack.c.l.s4 1934713408
        %v2309 = vunpack.c.0.s8 %v2308
        %v2310 = vlaneseq
        %v2311 = vshrl.u32 %v2310, 7
        %v2312 = vsub.s32 %v2309, %v2311
        %v2313 = vrot.slane %v2305, %v2312
        %v2315 = vunpack.c.l.s4 1934713408
        %v2316 = vunpack.c.0.s8 %v2315
        %v2317 = vlaneseq
        %v2318 = vshrl.u32 %v2317, 7
        %v2319 = vsub.s32 %v2316, %v2318
        %v2320 = vrot.slane %v2306, %v2319
        %v2321 = vcombine.low %v2288, %v2304
        %v2322 = vcombine.high %v2288, %v2304
        %v2324 = vunpack.c.l.s4 1934713408
        %v2325 = vunpack.c.0.s8 %v2324
        %v2326 = vlaneseq
        %v2327 = vshrl.u32 %v2326, 7
        %v2328 = vsub.s32 %v2325, %v2327
        %v2329 = vrot.slane %v2321, %v2328
        %v2331 = vunpack.c.l.s4 1934713408
        %v2332 = vunpack.c.0.s8 %v2331
        %v2333 = vlaneseq
        %v2334 = vshrl.u32 %v2333, 7
        %v2335 = vsub.s32 %v2332, %v2334
        %v2336 = vrot.slane %v2322, %v2335
        %v2337 = vcombine.high %v2313, 0.0
        %v2338 = vcombine.high %v2320, 0.0
        %v2339 = vcombine.high %v2329, 0.0
        %v2340 = vcombine.high %v2336, 0.0
        %v2341 = vcombine.low %v2138, %v2226
        %v2342 = vcombine.high %v2138, %v2226
        %v2344 = vunpack.c.l.s4 1983009808
        %v2345 = vunpack.c.0.s8 %v2344
        %v2346 = vlaneseq
        %v2347 = vshrl.u32 %v2346, 7
        %v2348 = vsub.s32 %v2345, %v2347
        %v2349 = vrot.slane %v2341, %v2348
        %v2351 = vunpack.c.l.s4 1983009808
        %v2352 = vunpack.c.0.s8 %v2351
        %v2353 = vlaneseq
        %v2354 = vshrl.u32 %v2353, 7
        %v2355 = vsub.s32 %v2352, %v2354
        %v2356 = vrot.slane %v2342, %v2355
        %v2357 = vcombine.low %v2182, %v2270
        %v2358 = vcombine.high %v2182, %v2270
        %v2360 = vunpack.c.l.s4 1983009808
        %v2361 = vunpack.c.0.s8 %v2360
        %v2362 = vlaneseq
        %v2363 = vshrl.u32 %v2362, 7
        %v2364 = vsub.s32 %v2361, %v2363
        %v2365 = vrot.slane %v2357, %v2364
        %v2367 = vunpack.c.l.s4 1983009808
        %v2368 = vunpack.c.0.s8 %v2367
        %v2369 = vlaneseq
        %v2370 = vshrl.u32 %v2369, 7
        %v2371 = vsub.s32 %v2368, %v2370
        %v2372 = vrot.slane %v2358, %v2371
        %v2373 = vcombine.low %v2349, %v2365
        %v2374 = vcombine.high %v2349, %v2365
        %v2376 = vunpack.c.l.s4 1934713408
        %v2377 = vunpack.c.0.s8 %v2376
        %v2378 = vlaneseq
        %v2379 = vshrl.u32 %v2378, 7
        %v2380 = vsub.s32 %v2377, %v2379
        %v2381 = vrot.slane %v2373, %v2380
        %v2383 = vunpack.c.l.s4 1934713408
        %v2384 = vunpack.c.0.s8 %v2383
        %v2385 = vlaneseq
        %v2386 = vshrl.u32 %v2385, 7
        %v2387 = vsub.s32 %v2384, %v2386
        %v2388 = vrot.slane %v2374, %v2387
        %v2389 = vcombine.low %v2356, %v2372
        %v2390 = vcombine.high %v2356, %v2372
        %v2392 = vunpack.c.l.s4 1934713408
        %v2393 = vunpack.c.0.s8 %v2392
        %v2394 = vlaneseq
        %v2395 = vshrl.u32 %v2394, 7
        %v2396 = vsub.s32 %v2393, %v2395
        %v2397 = vrot.slane %v2389, %v2396
        %v2399 = vunpack.c.l.s4 1934713408
        %v2400 = vunpack.c.0.s8 %v2399
        %v2401 = vlaneseq
        %v2402 = vshrl.u32 %v2401, 7
        %v2403 = vsub.s32 %v2400, %v2402
        %v2404 = vrot.slane %v2390, %v2403
        %v2405 = vcombine.high %v2381, 0.0
        %v2406 = vcombine.high %v2388, 0.0
        %v2407 = vcombine.high %v2397, 0.0
        %v2408 = vcombine.high %v2404, 0.0
        %v2409 = vcombine.low %v2313, %v2320
        %v2411 = vunpack.c.l.s4 1983009808
        %v2412 = vunpack.c.0.s8 %v2411
        %v2413 = vlaneseq
        %v2414 = vshrl.u32 %v2413, 7
        %v2415 = vsub.s32 %v2412, %v2414
        %v2416 = vrot.slane %v2409, %v2415
        %v2417 = vcombine.low %v2337, %v2338
        %v2419 = vunpack.c.l.s4 1983009808
        %v2420 = vunpack.c.0.s8 %v2419
        %v2421 = vlaneseq
        %v2422 = vshrl.u32 %v2421, 7
        %v2423 = vsub.s32 %v2420, %v2422
        %v2424 = vrot.slane %v2417, %v2423
        %v2425 = vcombine.low %v2329, %v2336
        %v2427 = vunpack.c.l.s4 1983009808
        %v2428 = vunpack.c.0.s8 %v2427
        %v2429 = vlaneseq
        %v2430 = vshrl.u32 %v2429, 7
        %v2431 = vsub.s32 %v2428, %v2430
        %v2432 = vrot.slane %v2425, %v2431
        %v2433 = vcombine.low %v2339, %v2340
        %v2435 = vunpack.c.l.s4 1983009808
        %v2436 = vunpack.c.0.s8 %v2435
        %v2437 = vlaneseq
        %v2438 = vshrl.u32 %v2437, 7
        %v2439 = vsub.s32 %v2436, %v2438
        %v2440 = vrot.slane %v2433, %v2439
        %v2441 = vcombine.low %v2416, %v2424
        %v2442 = vcombine.high %v2416, %v2424
        %v2444 = vunpack.c.l.s4 1934713408
        %v2445 = vunpack.c.0.s8 %v2444
        %v2446 = vlaneseq
        %v2447 = vshrl.u32 %v2446, 7
        %v2448 = vsub.s32 %v2445, %v2447
        %v2449 = vrot.slane %v2441, %v2448
        %v2451 = vunpack.c.l.s4 1934713408
        %v2452 = vunpack.c.0.s8 %v2451
        %v2453 = vlaneseq
        %v2454 = vshrl.u32 %v2453, 7
        %v2455 = vsub.s32 %v2452, %v2454
        %v2456 = vrot.slane %v2442, %v2455
        %v2457 = vcombine.low %v2432, %v2440
        %v2458 = vcombine.high %v2432, %v2440
        %v2460 = vunpack.c.l.s4 1934713408
        %v2461 = vunpack.c.0.s8 %v2460
        %v2462 = vlaneseq
        %v2463 = vshrl.u32 %v2462, 7
        %v2464 = vsub.s32 %v2461, %v2463
        %v2465 = vrot.slane %v2457, %v2464
        %v2467 = vunpack.c.l.s4 1934713408
        %v2468 = vunpack.c.0.s8 %v2467
        %v2469 = vlaneseq
        %v2470 = vshrl.u32 %v2469, 7
        %v2471 = vsub.s32 %v2468, %v2470
        %v2472 = vrot.slane %v2458, %v2471
        %v2473 = vcombine.low %v2449, %v2465
        %v2474 = vcombine.high %v2449, %v2465
        %v2475 = vcombine.low %v2456, %v2472
        %v2476 = vcombine.high %v2456, %v2472
        %v2477 = vcombine.low %v2381, %v2388
        %v2479 = vunpack.c.l.s4 1983009808
        %v2480 = vunpack.c.0.s8 %v2479
        %v2481 = vlaneseq
        %v2482 = vshrl.u32 %v2481, 7
        %v2483 = vsub.s32 %v2480, %v2482
        %v2484 = vrot.slane %v2477, %v2483
        %v2485 = vcombine.low %v2405, %v2406
        %v2487 = vunpack.c.l.s4 1983009808
        %v2488 = vunpack.c.0.s8 %v2487
        %v2489 = vlaneseq
        %v2490 = vshrl.u32 %v2489, 7
        %v2491 = vsub.s32 %v2488, %v2490
        %v2492 = vrot.slane %v2485, %v2491
        %v2493 = vcombine.low %v2397, %v2404
        %v2495 = vunpack.c.l.s4 1983009808
        %v2496 = vunpack.c.0.s8 %v2495
        %v2497 = vlaneseq
        %v2498 = vshrl.u32 %v2497, 7
        %v2499 = vsub.s32 %v2496, %v2498
        %v2500 = vrot.slane %v2493, %v2499
        %v2501 = vcombine.low %v2407, %v2408
        %v2503 = vunpack.c.l.s4 1983009808
        %v2504 = vunpack.c.0.s8 %v2503
        %v2505 = vlaneseq
        %v2506 = vshrl.u32 %v2505, 7
        %v2507 = vsub.s32 %v2504, %v2506
        %v2508 = vrot.slane %v2501, %v2507
        %v2509 = vcombine.low %v2484, %v2492
        %v2510 = vcombine.high %v2484, %v2492
        %v2512 = vunpack.c.l.s4 1934713408
        %v2513 = vunpack.c.0.s8 %v2512
        %v2514 = vlaneseq
        %v2515 = vshrl.u32 %v2514, 7
        %v2516 = vsub.s32 %v2513, %v2515
        %v2517 = vrot.slane %v2509, %v2516
        %v2519 = vunpack.c.l.s4 1934713408
        %v2520 = vunpack.c.0.s8 %v2519
        %v2521 = vlaneseq
        %v2522 = vshrl.u32 %v2521, 7
        %v2523 = vsub.s32 %v2520, %v2522
        %v2524 = vrot.slane %v2510, %v2523
        %v2525 = vcombine.low %v2500, %v2508
        %v2526 = vcombine.high %v2500, %v2508
        %v2528 = vunpack.c.l.s4 1934713408
        %v2529 = vunpack.c.0.s8 %v2528
        %v2530 = vlaneseq
        %v2531 = vshrl.u32 %v2530, 7
        %v2532 = vsub.s32 %v2529, %v2531
        %v2533 = vrot.slane %v2525, %v2532
        %v2535 = vunpack.c.l.s4 1934713408
        %v2536 = vunpack.c.0.s8 %v2535
        %v2537 = vlaneseq
        %v2538 = vshrl.u32 %v2537, 7
        %v2539 = vsub.s32 %v2536, %v2538
        %v2540 = vrot.slane %v2526, %v2539
        %v2541 = vcombine.low %v2517, %v2533
        %v2542 = vcombine.high %v2517, %v2533
        %v2543 = vcombine.low %v2524, %v2540
        %v2544 = vcombine.high %v2524, %v2540
        %2547 = vrot.lane.b32.xlu0 %v2474, 32
        %v2548 = vpop.permute.xlu0 %2547
        %2549 = vrot.lane.b32.xlu0 %v2542, 32
        %v2550 = vpop.permute.xlu0 %2549
        %2555 = vrot.lane.b32.xlu0 %v2475, 64
        %v2556 = vpop.permute.xlu0 %2555
        %2557 = vrot.lane.b32.xlu0 %v2543, 64
        %v2558 = vpop.permute.xlu0 %2557
        %2563 = vrot.lane.b32.xlu0 %v2476, 96
        %v2564 = vpop.permute.xlu0 %2563
        %2565 = vrot.lane.b32.xlu0 %v2544, 96
        %v2566 = vpop.permute.xlu0 %2565
        %v2569 = vsel %vm1815, %v2473, %v2548
        %v2570 = vsel %vm1815, %v2541, %v2550
        %vm2571 = vcmask 523264
        %v2572 = vsel %vm2571, %v2569, %v2556
        %v2573 = vsel %vm2571, %v2570, %v2558
        %vm2574 = vcmask 785408
        %v2575 = vsel %vm2574, %v2572, %v2564
        %v2576 = vsel %vm2574, %v2573, %v2566
        %2579 = vrot.lane.b32.xlu0 %v870, 96
        %v2580 = vpop.permute.xlu0 %2579
        %2581 = vrot.lane.b32.xlu0 %v874, 96
        %v2582 = vpop.permute.xlu0 %2581
        %2585 = vrot.lane.b32.xlu0 %v870, 64
        %v2586 = vpop.permute.xlu0 %2585
        %2587 = vrot.lane.b32.xlu0 %v874, 64
        %v2588 = vpop.permute.xlu0 %2587
        %2591 = vrot.lane.b32.xlu0 %v870, 32
        %v2592 = vpop.permute.xlu0 %2591
        %2593 = vrot.lane.b32.xlu0 %v874, 32
        %v2594 = vpop.permute.xlu0 %2593
        %v2597 = vcombine.low %v870, %v2586
        %v2598 = vcombine.high %v870, %v2586
        %v2600 = vunpack.c.l.s4 1983009808
        %v2601 = vunpack.c.0.s8 %v2600
        %v2602 = vlaneseq
        %v2603 = vshrl.u32 %v2602, 7
        %v2604 = vsub.s32 %v2601, %v2603
        %v2605 = vrot.slane %v2597, %v2604
        %v2607 = vunpack.c.l.s4 1983009808
        %v2608 = vunpack.c.0.s8 %v2607
        %v2609 = vlaneseq
        %v2610 = vshrl.u32 %v2609, 7
        %v2611 = vsub.s32 %v2608, %v2610
        %v2612 = vrot.slane %v2598, %v2611
        %v2613 = vcombine.low %v2580, %v2592
        %v2614 = vcombine.high %v2580, %v2592
        %v2616 = vunpack.c.l.s4 1983009808
        %v2617 = vunpack.c.0.s8 %v2616
        %v2618 = vlaneseq
        %v2619 = vshrl.u32 %v2618, 7
        %v2620 = vsub.s32 %v2617, %v2619
        %v2621 = vrot.slane %v2613, %v2620
        %v2623 = vunpack.c.l.s4 1983009808
        %v2624 = vunpack.c.0.s8 %v2623
        %v2625 = vlaneseq
        %v2626 = vshrl.u32 %v2625, 7
        %v2627 = vsub.s32 %v2624, %v2626
        %v2628 = vrot.slane %v2614, %v2627
        %v2629 = vcombine.low %v2605, %v2621
        %v2630 = vcombine.high %v2605, %v2621
        %v2632 = vunpack.c.l.s4 1934713408
        %v2633 = vunpack.c.0.s8 %v2632
        %v2634 = vlaneseq
        %v2635 = vshrl.u32 %v2634, 7
        %v2636 = vsub.s32 %v2633, %v2635
        %v2637 = vrot.slane %v2629, %v2636
        %v2639 = vunpack.c.l.s4 1934713408
        %v2640 = vunpack.c.0.s8 %v2639
        %v2641 = vlaneseq
        %v2642 = vshrl.u32 %v2641, 7
        %v2643 = vsub.s32 %v2640, %v2642
        %v2644 = vrot.slane %v2630, %v2643
        %v2645 = vcombine.low %v2612, %v2628
        %v2646 = vcombine.high %v2612, %v2628
        %v2648 = vunpack.c.l.s4 1934713408
        %v2649 = vunpack.c.0.s8 %v2648
        %v2650 = vlaneseq
        %v2651 = vshrl.u32 %v2650, 7
        %v2652 = vsub.s32 %v2649, %v2651
        %v2653 = vrot.slane %v2645, %v2652
        %v2655 = vunpack.c.l.s4 1934713408
        %v2656 = vunpack.c.0.s8 %v2655
        %v2657 = vlaneseq
        %v2658 = vshrl.u32 %v2657, 7
        %v2659 = vsub.s32 %v2656, %v2658
        %v2660 = vrot.slane %v2646, %v2659
        %v2661 = vcombine.high %v2637, 0.0
        %v2662 = vcombine.high %v2644, 0.0
        %v2663 = vcombine.high %v2653, 0.0
        %v2664 = vcombine.high %v2660, 0.0
        %v2665 = vcombine.low %v874, %v2588
        %v2666 = vcombine.high %v874, %v2588
        %v2668 = vunpack.c.l.s4 1983009808
        %v2669 = vunpack.c.0.s8 %v2668
        %v2670 = vlaneseq
        %v2671 = vshrl.u32 %v2670, 7
        %v2672 = vsub.s32 %v2669, %v2671
        %v2673 = vrot.slane %v2665, %v2672
        %v2675 = vunpack.c.l.s4 1983009808
        %v2676 = vunpack.c.0.s8 %v2675
        %v2677 = vlaneseq
        %v2678 = vshrl.u32 %v2677, 7
        %v2679 = vsub.s32 %v2676, %v2678
        %v2680 = vrot.slane %v2666, %v2679
        %v2681 = vcombine.low %v2582, %v2594
        %v2682 = vcombine.high %v2582, %v2594
        %v2684 = vunpack.c.l.s4 1983009808
        %v2685 = vunpack.c.0.s8 %v2684
        %v2686 = vlaneseq
        %v2687 = vshrl.u32 %v2686, 7
        %v2688 = vsub.s32 %v2685, %v2687
        %v2689 = vrot.slane %v2681, %v2688
        %v2691 = vunpack.c.l.s4 1983009808
        %v2692 = vunpack.c.0.s8 %v2691
        %v2693 = vlaneseq
        %v2694 = vshrl.u32 %v2693, 7
        %v2695 = vsub.s32 %v2692, %v2694
        %v2696 = vrot.slane %v2682, %v2695
        %v2697 = vcombine.low %v2673, %v2689
        %v2698 = vcombine.high %v2673, %v2689
        %v2700 = vunpack.c.l.s4 1934713408
        %v2701 = vunpack.c.0.s8 %v2700
        %v2702 = vlaneseq
        %v2703 = vshrl.u32 %v2702, 7
        %v2704 = vsub.s32 %v2701, %v2703
        %v2705 = vrot.slane %v2697, %v2704
        %v2707 = vunpack.c.l.s4 1934713408
        %v2708 = vunpack.c.0.s8 %v2707
        %v2709 = vlaneseq
        %v2710 = vshrl.u32 %v2709, 7
        %v2711 = vsub.s32 %v2708, %v2710
        %v2712 = vrot.slane %v2698, %v2711
        %v2713 = vcombine.low %v2680, %v2696
        %v2714 = vcombine.high %v2680, %v2696
        %v2716 = vunpack.c.l.s4 1934713408
        %v2717 = vunpack.c.0.s8 %v2716
        %v2718 = vlaneseq
        %v2719 = vshrl.u32 %v2718, 7
        %v2720 = vsub.s32 %v2717, %v2719
        %v2721 = vrot.slane %v2713, %v2720
        %v2723 = vunpack.c.l.s4 1934713408
        %v2724 = vunpack.c.0.s8 %v2723
        %v2725 = vlaneseq
        %v2726 = vshrl.u32 %v2725, 7
        %v2727 = vsub.s32 %v2724, %v2726
        %v2728 = vrot.slane %v2714, %v2727
        %v2729 = vcombine.high %v2705, 0.0
        %v2730 = vcombine.high %v2712, 0.0
        %v2731 = vcombine.high %v2721, 0.0
        %v2732 = vcombine.high %v2728, 0.0
        %v2733 = vcombine.low %v2637, %v2644
        %v2735 = vunpack.c.l.s4 1983009808
        %v2736 = vunpack.c.0.s8 %v2735
        %v2737 = vlaneseq
        %v2738 = vshrl.u32 %v2737, 7
        %v2739 = vsub.s32 %v2736, %v2738
        %v2740 = vrot.slane %v2733, %v2739
        %v2741 = vcombine.low %v2661, %v2662
        %v2743 = vunpack.c.l.s4 1983009808
        %v2744 = vunpack.c.0.s8 %v2743
        %v2745 = vlaneseq
        %v2746 = vshrl.u32 %v2745, 7
        %v2747 = vsub.s32 %v2744, %v2746
        %v2748 = vrot.slane %v2741, %v2747
        %v2749 = vcombine.low %v2653, %v2660
        %v2751 = vunpack.c.l.s4 1983009808
        %v2752 = vunpack.c.0.s8 %v2751
        %v2753 = vlaneseq
        %v2754 = vshrl.u32 %v2753, 7
        %v2755 = vsub.s32 %v2752, %v2754
        %v2756 = vrot.slane %v2749, %v2755
        %v2757 = vcombine.low %v2663, %v2664
        %v2759 = vunpack.c.l.s4 1983009808
        %v2760 = vunpack.c.0.s8 %v2759
        %v2761 = vlaneseq
        %v2762 = vshrl.u32 %v2761, 7
        %v2763 = vsub.s32 %v2760, %v2762
        %v2764 = vrot.slane %v2757, %v2763
        %v2765 = vcombine.low %v2740, %v2748
        %v2766 = vcombine.high %v2740, %v2748
        %v2768 = vunpack.c.l.s4 1934713408
        %v2769 = vunpack.c.0.s8 %v2768
        %v2770 = vlaneseq
        %v2771 = vshrl.u32 %v2770, 7
        %v2772 = vsub.s32 %v2769, %v2771
        %v2773 = vrot.slane %v2765, %v2772
        %v2775 = vunpack.c.l.s4 1934713408
        %v2776 = vunpack.c.0.s8 %v2775
        %v2777 = vlaneseq
        %v2778 = vshrl.u32 %v2777, 7
        %v2779 = vsub.s32 %v2776, %v2778
        %v2780 = vrot.slane %v2766, %v2779
        %v2781 = vcombine.low %v2756, %v2764
        %v2782 = vcombine.high %v2756, %v2764
        %v2784 = vunpack.c.l.s4 1934713408
        %v2785 = vunpack.c.0.s8 %v2784
        %v2786 = vlaneseq
        %v2787 = vshrl.u32 %v2786, 7
        %v2788 = vsub.s32 %v2785, %v2787
        %v2789 = vrot.slane %v2781, %v2788
        %v2791 = vunpack.c.l.s4 1934713408
        %v2792 = vunpack.c.0.s8 %v2791
        %v2793 = vlaneseq
        %v2794 = vshrl.u32 %v2793, 7
        %v2795 = vsub.s32 %v2792, %v2794
        %v2796 = vrot.slane %v2782, %v2795
        %v2797 = vcombine.low %v2773, %v2789
        %v2798 = vcombine.high %v2773, %v2789
        %v2799 = vcombine.low %v2780, %v2796
        %v2800 = vcombine.high %v2780, %v2796
        %v2801 = vcombine.low %v2705, %v2712
        %v2803 = vunpack.c.l.s4 1983009808
        %v2804 = vunpack.c.0.s8 %v2803
        %v2805 = vlaneseq
        %v2806 = vshrl.u32 %v2805, 7
        %v2807 = vsub.s32 %v2804, %v2806
        %v2808 = vrot.slane %v2801, %v2807
        %v2809 = vcombine.low %v2729, %v2730
        %v2811 = vunpack.c.l.s4 1983009808
        %v2812 = vunpack.c.0.s8 %v2811
        %v2813 = vlaneseq
        %v2814 = vshrl.u32 %v2813, 7
        %v2815 = vsub.s32 %v2812, %v2814
        %v2816 = vrot.slane %v2809, %v2815
        %v2817 = vcombine.low %v2721, %v2728
        %v2819 = vunpack.c.l.s4 1983009808
        %v2820 = vunpack.c.0.s8 %v2819
        %v2821 = vlaneseq
        %v2822 = vshrl.u32 %v2821, 7
        %v2823 = vsub.s32 %v2820, %v2822
        %v2824 = vrot.slane %v2817, %v2823
        %v2825 = vcombine.low %v2731, %v2732
        %v2827 = vunpack.c.l.s4 1983009808
        %v2828 = vunpack.c.0.s8 %v2827
        %v2829 = vlaneseq
        %v2830 = vshrl.u32 %v2829, 7
        %v2831 = vsub.s32 %v2828, %v2830
        %v2832 = vrot.slane %v2825, %v2831
        %v2833 = vcombine.low %v2808, %v2816
        %v2834 = vcombine.high %v2808, %v2816
        %v2836 = vunpack.c.l.s4 1934713408
        %v2837 = vunpack.c.0.s8 %v2836
        %v2838 = vlaneseq
        %v2839 = vshrl.u32 %v2838, 7
        %v2840 = vsub.s32 %v2837, %v2839
        %v2841 = vrot.slane %v2833, %v2840
        %v2843 = vunpack.c.l.s4 1934713408
        %v2844 = vunpack.c.0.s8 %v2843
        %v2845 = vlaneseq
        %v2846 = vshrl.u32 %v2845, 7
        %v2847 = vsub.s32 %v2844, %v2846
        %v2848 = vrot.slane %v2834, %v2847
        %v2849 = vcombine.low %v2824, %v2832
        %v2850 = vcombine.high %v2824, %v2832
        %v2852 = vunpack.c.l.s4 1934713408
        %v2853 = vunpack.c.0.s8 %v2852
        %v2854 = vlaneseq
        %v2855 = vshrl.u32 %v2854, 7
        %v2856 = vsub.s32 %v2853, %v2855
        %v2857 = vrot.slane %v2849, %v2856
        %v2859 = vunpack.c.l.s4 1934713408
        %v2860 = vunpack.c.0.s8 %v2859
        %v2861 = vlaneseq
        %v2862 = vshrl.u32 %v2861, 7
        %v2863 = vsub.s32 %v2860, %v2862
        %v2864 = vrot.slane %v2850, %v2863
        %v2865 = vcombine.low %v2841, %v2857
        %v2866 = vcombine.high %v2841, %v2857
        %v2867 = vcombine.low %v2848, %v2864
        %v2868 = vcombine.high %v2848, %v2864
        %v2869 = vpack.c.bf16 %v2865, %v2797
        %v2870 = vpack.c.bf16 %v2866, %v2798
        %v2871 = vpack.c.bf16 %v2867, %v2799
        %v2872 = vpack.c.bf16 %v2868, %v2800
        %2875 = vrot.lane.b32.xlu0 %v872, 96
        %v2876 = vpop.permute.xlu0 %2875
        %2877 = vrot.lane.b32.xlu0 %v876, 96
        %v2878 = vpop.permute.xlu0 %2877
        %2881 = vrot.lane.b32.xlu0 %v872, 64
        %v2882 = vpop.permute.xlu0 %2881
        %2883 = vrot.lane.b32.xlu0 %v876, 64
        %v2884 = vpop.permute.xlu0 %2883
        %2887 = vrot.lane.b32.xlu0 %v872, 32
        %v2888 = vpop.permute.xlu0 %2887
        %2889 = vrot.lane.b32.xlu0 %v876, 32
        %v2890 = vpop.permute.xlu0 %2889
        %v2893 = vcombine.low %v872, %v2882
        %v2894 = vcombine.high %v872, %v2882
        %v2896 = vunpack.c.l.s4 1983009808
        %v2897 = vunpack.c.0.s8 %v2896
        %v2898 = vlaneseq
        %v2899 = vshrl.u32 %v2898, 7
        %v2900 = vsub.s32 %v2897, %v2899
        %v2901 = vrot.slane %v2893, %v2900
        %v2903 = vunpack.c.l.s4 1983009808
        %v2904 = vunpack.c.0.s8 %v2903
        %v2905 = vlaneseq
        %v2906 = vshrl.u32 %v2905, 7
        %v2907 = vsub.s32 %v2904, %v2906
        %v2908 = vrot.slane %v2894, %v2907
        %v2909 = vcombine.low %v2876, %v2888
        %v2910 = vcombine.high %v2876, %v2888
        %v2912 = vunpack.c.l.s4 1983009808
        %v2913 = vunpack.c.0.s8 %v2912
        %v2914 = vlaneseq
        %v2915 = vshrl.u32 %v2914, 7
        %v2916 = vsub.s32 %v2913, %v2915
        %v2917 = vrot.slane %v2909, %v2916
        %v2919 = vunpack.c.l.s4 1983009808
        %v2920 = vunpack.c.0.s8 %v2919
        %v2921 = vlaneseq
        %v2922 = vshrl.u32 %v2921, 7
        %v2923 = vsub.s32 %v2920, %v2922
        %v2924 = vrot.slane %v2910, %v2923
        %v2925 = vcombine.low %v2901, %v2917
        %v2926 = vcombine.high %v2901, %v2917
        %v2928 = vunpack.c.l.s4 1934713408
        %v2929 = vunpack.c.0.s8 %v2928
        %v2930 = vlaneseq
        %v2931 = vshrl.u32 %v2930, 7
        %v2932 = vsub.s32 %v2929, %v2931
        %v2933 = vrot.slane %v2925, %v2932
        %v2935 = vunpack.c.l.s4 1934713408
        %v2936 = vunpack.c.0.s8 %v2935
        %v2937 = vlaneseq
        %v2938 = vshrl.u32 %v2937, 7
        %v2939 = vsub.s32 %v2936, %v2938
        %v2940 = vrot.slane %v2926, %v2939
        %v2941 = vcombine.low %v2908, %v2924
        %v2942 = vcombine.high %v2908, %v2924
        %v2944 = vunpack.c.l.s4 1934713408
        %v2945 = vunpack.c.0.s8 %v2944
        %v2946 = vlaneseq
        %v2947 = vshrl.u32 %v2946, 7
        %v2948 = vsub.s32 %v2945, %v2947
        %v2949 = vrot.slane %v2941, %v2948
        %v2951 = vunpack.c.l.s4 1934713408
        %v2952 = vunpack.c.0.s8 %v2951
        %v2953 = vlaneseq
        %v2954 = vshrl.u32 %v2953, 7
        %v2955 = vsub.s32 %v2952, %v2954
        %v2956 = vrot.slane %v2942, %v2955
        %v2957 = vcombine.high %v2933, 0.0
        %v2958 = vcombine.high %v2940, 0.0
        %v2959 = vcombine.high %v2949, 0.0
        %v2960 = vcombine.high %v2956, 0.0
        %v2961 = vcombine.low %v876, %v2884
        %v2962 = vcombine.high %v876, %v2884
        %v2964 = vunpack.c.l.s4 1983009808
        %v2965 = vunpack.c.0.s8 %v2964
        %v2966 = vlaneseq
        %v2967 = vshrl.u32 %v2966, 7
        %v2968 = vsub.s32 %v2965, %v2967
        %v2969 = vrot.slane %v2961, %v2968
        %v2971 = vunpack.c.l.s4 1983009808
        %v2972 = vunpack.c.0.s8 %v2971
        %v2973 = vlaneseq
        %v2974 = vshrl.u32 %v2973, 7
        %v2975 = vsub.s32 %v2972, %v2974
        %v2976 = vrot.slane %v2962, %v2975
        %v2977 = vcombine.low %v2878, %v2890
        %v2978 = vcombine.high %v2878, %v2890
        %v2980 = vunpack.c.l.s4 1983009808
        %v2981 = vunpack.c.0.s8 %v2980
        %v2982 = vlaneseq
        %v2983 = vshrl.u32 %v2982, 7
        %v2984 = vsub.s32 %v2981, %v2983
        %v2985 = vrot.slane %v2977, %v2984
        %v2987 = vunpack.c.l.s4 1983009808
        %v2988 = vunpack.c.0.s8 %v2987
        %v2989 = vlaneseq
        %v2990 = vshrl.u32 %v2989, 7
        %v2991 = vsub.s32 %v2988, %v2990
        %v2992 = vrot.slane %v2978, %v2991
        %v2993 = vcombine.low %v2969, %v2985
        %v2994 = vcombine.high %v2969, %v2985
        %v2996 = vunpack.c.l.s4 1934713408
        %v2997 = vunpack.c.0.s8 %v2996
        %v2998 = vlaneseq
        %v2999 = vshrl.u32 %v2998, 7
        %v3000 = vsub.s32 %v2997, %v2999
        %v3001 = vrot.slane %v2993, %v3000
        %v3003 = vunpack.c.l.s4 1934713408
        %v3004 = vunpack.c.0.s8 %v3003
        %v3005 = vlaneseq
        %v3006 = vshrl.u32 %v3005, 7
        %v3007 = vsub.s32 %v3004, %v3006
        %v3008 = vrot.slane %v2994, %v3007
        %v3009 = vcombine.low %v2976, %v2992
        %v3010 = vcombine.high %v2976, %v2992
        %v3012 = vunpack.c.l.s4 1934713408
        %v3013 = vunpack.c.0.s8 %v3012
        %v3014 = vlaneseq
        %v3015 = vshrl.u32 %v3014, 7
        %v3016 = vsub.s32 %v3013, %v3015
        %v3017 = vrot.slane %v3009, %v3016
        %v3019 = vunpack.c.l.s4 1934713408
        %v3020 = vunpack.c.0.s8 %v3019
        %v3021 = vlaneseq
        %v3022 = vshrl.u32 %v3021, 7
        %v3023 = vsub.s32 %v3020, %v3022
        %v3024 = vrot.slane %v3010, %v3023
        %v3025 = vcombine.high %v3001, 0.0
        %v3026 = vcombine.high %v3008, 0.0
        %v3027 = vcombine.high %v3017, 0.0
        %v3028 = vcombine.high %v3024, 0.0
        %v3029 = vcombine.low %v2933, %v2940
        %v3031 = vunpack.c.l.s4 1983009808
        %v3032 = vunpack.c.0.s8 %v3031
        %v3033 = vlaneseq
        %v3034 = vshrl.u32 %v3033, 7
        %v3035 = vsub.s32 %v3032, %v3034
        %v3036 = vrot.slane %v3029, %v3035
        %v3037 = vcombine.low %v2957, %v2958
        %v3039 = vunpack.c.l.s4 1983009808
        %v3040 = vunpack.c.0.s8 %v3039
        %v3041 = vlaneseq
        %v3042 = vshrl.u32 %v3041, 7
        %v3043 = vsub.s32 %v3040, %v3042
        %v3044 = vrot.slane %v3037, %v3043
        %v3045 = vcombine.low %v2949, %v2956
        %v3047 = vunpack.c.l.s4 1983009808
        %v3048 = vunpack.c.0.s8 %v3047
        %v3049 = vlaneseq
        %v3050 = vshrl.u32 %v3049, 7
        %v3051 = vsub.s32 %v3048, %v3050
        %v3052 = vrot.slane %v3045, %v3051
        %v3053 = vcombine.low %v2959, %v2960
        %v3055 = vunpack.c.l.s4 1983009808
        %v3056 = vunpack.c.0.s8 %v3055
        %v3057 = vlaneseq
        %v3058 = vshrl.u32 %v3057, 7
        %v3059 = vsub.s32 %v3056, %v3058
        %v3060 = vrot.slane %v3053, %v3059
        %v3061 = vcombine.low %v3036, %v3044
        %v3062 = vcombine.high %v3036, %v3044
        %v3064 = vunpack.c.l.s4 1934713408
        %v3065 = vunpack.c.0.s8 %v3064
        %v3066 = vlaneseq
        %v3067 = vshrl.u32 %v3066, 7
        %v3068 = vsub.s32 %v3065, %v3067
        %v3069 = vrot.slane %v3061, %v3068
        %v3071 = vunpack.c.l.s4 1934713408
        %v3072 = vunpack.c.0.s8 %v3071
        %v3073 = vlaneseq
        %v3074 = vshrl.u32 %v3073, 7
        %v3075 = vsub.s32 %v3072, %v3074
        %v3076 = vrot.slane %v3062, %v3075
        %v3077 = vcombine.low %v3052, %v3060
        %v3078 = vcombine.high %v3052, %v3060
        %v3080 = vunpack.c.l.s4 1934713408
        %v3081 = vunpack.c.0.s8 %v3080
        %v3082 = vlaneseq
        %v3083 = vshrl.u32 %v3082, 7
        %v3084 = vsub.s32 %v3081, %v3083
        %v3085 = vrot.slane %v3077, %v3084
        %v3087 = vunpack.c.l.s4 1934713408
        %v3088 = vunpack.c.0.s8 %v3087
        %v3089 = vlaneseq
        %v3090 = vshrl.u32 %v3089, 7
        %v3091 = vsub.s32 %v3088, %v3090
        %v3092 = vrot.slane %v3078, %v3091
        %v3093 = vcombine.low %v3069, %v3085
        %v3094 = vcombine.high %v3069, %v3085
        %v3095 = vcombine.low %v3076, %v3092
        %v3096 = vcombine.high %v3076, %v3092
        %v3097 = vcombine.low %v3001, %v3008
        %v3099 = vunpack.c.l.s4 1983009808
        %v3100 = vunpack.c.0.s8 %v3099
        %v3101 = vlaneseq
        %v3102 = vshrl.u32 %v3101, 7
        %v3103 = vsub.s32 %v3100, %v3102
        %v3104 = vrot.slane %v3097, %v3103
        %v3105 = vcombine.low %v3025, %v3026
        %v3107 = vunpack.c.l.s4 1983009808
        %v3108 = vunpack.c.0.s8 %v3107
        %v3109 = vlaneseq
        %v3110 = vshrl.u32 %v3109, 7
        %v3111 = vsub.s32 %v3108, %v3110
        %v3112 = vrot.slane %v3105, %v3111
        %v3113 = vcombine.low %v3017, %v3024
        %v3115 = vunpack.c.l.s4 1983009808
        %v3116 = vunpack.c.0.s8 %v3115
        %v3117 = vlaneseq
        %v3118 = vshrl.u32 %v3117, 7
        %v3119 = vsub.s32 %v3116, %v3118
        %v3120 = vrot.slane %v3113, %v3119
        %v3121 = vcombine.low %v3027, %v3028
        %v3123 = vunpack.c.l.s4 1983009808
        %v3124 = vunpack.c.0.s8 %v3123
        %v3125 = vlaneseq
        %v3126 = vshrl.u32 %v3125, 7
        %v3127 = vsub.s32 %v3124, %v3126
        %v3128 = vrot.slane %v3121, %v3127
        %v3129 = vcombine.low %v3104, %v3112
        %v3130 = vcombine.high %v3104, %v3112
        %v3132 = vunpack.c.l.s4 1934713408
        %v3133 = vunpack.c.0.s8 %v3132
        %v3134 = vlaneseq
        %v3135 = vshrl.u32 %v3134, 7
        %v3136 = vsub.s32 %v3133, %v3135
        %v3137 = vrot.slane %v3129, %v3136
        %v3139 = vunpack.c.l.s4 1934713408
        %v3140 = vunpack.c.0.s8 %v3139
        %v3141 = vlaneseq
        %v3142 = vshrl.u32 %v3141, 7
        %v3143 = vsub.s32 %v3140, %v3142
        %v3144 = vrot.slane %v3130, %v3143
        %v3145 = vcombine.low %v3120, %v3128
        %v3146 = vcombine.high %v3120, %v3128
        %v3148 = vunpack.c.l.s4 1934713408
        %v3149 = vunpack.c.0.s8 %v3148
        %v3150 = vlaneseq
        %v3151 = vshrl.u32 %v3150, 7
        %v3152 = vsub.s32 %v3149, %v3151
        %v3153 = vrot.slane %v3145, %v3152
        %v3155 = vunpack.c.l.s4 1934713408
        %v3156 = vunpack.c.0.s8 %v3155
        %v3157 = vlaneseq
        %v3158 = vshrl.u32 %v3157, 7
        %v3159 = vsub.s32 %v3156, %v3158
        %v3160 = vrot.slane %v3146, %v3159
        %v3161 = vcombine.low %v3137, %v3153
        %v3162 = vcombine.high %v3137, %v3153
        %v3163 = vcombine.low %v3144, %v3160
        %v3164 = vcombine.high %v3144, %v3160
        %v3165 = vpack.c.bf16 %v3161, %v3093
        %v3166 = vpack.c.bf16 %v3162, %v3094
        %v3167 = vpack.c.bf16 %v3163, %v3095
        %v3168 = vpack.c.bf16 %v3164, %v3096
        %3171 = vrot.lane.b32.xlu0 %v921, 96
        %v3172 = vpop.permute.xlu0 %3171
        %3173 = vrot.lane.b32.xlu0 %v924, 96
        %v3174 = vpop.permute.xlu0 %3173
        %3177 = vrot.lane.b32.xlu0 %v921, 64
        %v3178 = vpop.permute.xlu0 %3177
        %3179 = vrot.lane.b32.xlu0 %v924, 64
        %v3180 = vpop.permute.xlu0 %3179
        %3183 = vrot.lane.b32.xlu0 %v921, 32
        %v3184 = vpop.permute.xlu0 %3183
        %3185 = vrot.lane.b32.xlu0 %v924, 32
        %v3186 = vpop.permute.xlu0 %3185
        %v3189 = vcombine.low %v921, %v3178
        %v3190 = vcombine.high %v921, %v3178
        %v3192 = vunpack.c.l.s4 1983009808
        %v3193 = vunpack.c.0.s8 %v3192
        %v3194 = vlaneseq
        %v3195 = vshrl.u32 %v3194, 7
        %v3196 = vsub.s32 %v3193, %v3195
        %v3197 = vrot.slane %v3189, %v3196
        %v3199 = vunpack.c.l.s4 1983009808
        %v3200 = vunpack.c.0.s8 %v3199
        %v3201 = vlaneseq
        %v3202 = vshrl.u32 %v3201, 7
        %v3203 = vsub.s32 %v3200, %v3202
        %v3204 = vrot.slane %v3190, %v3203
        %v3205 = vcombine.low %v3172, %v3184
        %v3206 = vcombine.high %v3172, %v3184
        %v3208 = vunpack.c.l.s4 1983009808
        %v3209 = vunpack.c.0.s8 %v3208
        %v3210 = vlaneseq
        %v3211 = vshrl.u32 %v3210, 7
        %v3212 = vsub.s32 %v3209, %v3211
        %v3213 = vrot.slane %v3205, %v3212
        %v3215 = vunpack.c.l.s4 1983009808
        %v3216 = vunpack.c.0.s8 %v3215
        %v3217 = vlaneseq
        %v3218 = vshrl.u32 %v3217, 7
        %v3219 = vsub.s32 %v3216, %v3218
        %v3220 = vrot.slane %v3206, %v3219
        %v3221 = vcombine.low %v3197, %v3213
        %v3222 = vcombine.high %v3197, %v3213
        %v3224 = vunpack.c.l.s4 1934713408
        %v3225 = vunpack.c.0.s8 %v3224
        %v3226 = vlaneseq
        %v3227 = vshrl.u32 %v3226, 7
        %v3228 = vsub.s32 %v3225, %v3227
        %v3229 = vrot.slane %v3221, %v3228
        %v3231 = vunpack.c.l.s4 1934713408
        %v3232 = vunpack.c.0.s8 %v3231
        %v3233 = vlaneseq
        %v3234 = vshrl.u32 %v3233, 7
        %v3235 = vsub.s32 %v3232, %v3234
        %v3236 = vrot.slane %v3222, %v3235
        %v3237 = vcombine.low %v3204, %v3220
        %v3238 = vcombine.high %v3204, %v3220
        %v3240 = vunpack.c.l.s4 1934713408
        %v3241 = vunpack.c.0.s8 %v3240
        %v3242 = vlaneseq
        %v3243 = vshrl.u32 %v3242, 7
        %v3244 = vsub.s32 %v3241, %v3243
        %v3245 = vrot.slane %v3237, %v3244
        %v3247 = vunpack.c.l.s4 1934713408
        %v3248 = vunpack.c.0.s8 %v3247
        %v3249 = vlaneseq
        %v3250 = vshrl.u32 %v3249, 7
        %v3251 = vsub.s32 %v3248, %v3250
        %v3252 = vrot.slane %v3238, %v3251
        %v3253 = vcombine.high %v3229, 0.0
        %v3254 = vcombine.high %v3236, 0.0
        %v3255 = vcombine.high %v3245, 0.0
        %v3256 = vcombine.high %v3252, 0.0
        %v3257 = vcombine.low %v924, %v3180
        %v3258 = vcombine.high %v924, %v3180
        %v3260 = vunpack.c.l.s4 1983009808
        %v3261 = vunpack.c.0.s8 %v3260
        %v3262 = vlaneseq
        %v3263 = vshrl.u32 %v3262, 7
        %v3264 = vsub.s32 %v3261, %v3263
        %v3265 = vrot.slane %v3257, %v3264
        %v3267 = vunpack.c.l.s4 1983009808
        %v3268 = vunpack.c.0.s8 %v3267
        %v3269 = vlaneseq
        %v3270 = vshrl.u32 %v3269, 7
        %v3271 = vsub.s32 %v3268, %v3270
        %v3272 = vrot.slane %v3258, %v3271
        %v3273 = vcombine.low %v3174, %v3186
        %v3274 = vcombine.high %v3174, %v3186
        %v3276 = vunpack.c.l.s4 1983009808
        %v3277 = vunpack.c.0.s8 %v3276
        %v3278 = vlaneseq
        %v3279 = vshrl.u32 %v3278, 7
        %v3280 = vsub.s32 %v3277, %v3279
        %v3281 = vrot.slane %v3273, %v3280
        %v3283 = vunpack.c.l.s4 1983009808
        %v3284 = vunpack.c.0.s8 %v3283
        %v3285 = vlaneseq
        %v3286 = vshrl.u32 %v3285, 7
        %v3287 = vsub.s32 %v3284, %v3286
        %v3288 = vrot.slane %v3274, %v3287
        %v3289 = vcombine.low %v3265, %v3281
        %v3290 = vcombine.high %v3265, %v3281
        %v3292 = vunpack.c.l.s4 1934713408
        %v3293 = vunpack.c.0.s8 %v3292
        %v3294 = vlaneseq
        %v3295 = vshrl.u32 %v3294, 7
        %v3296 = vsub.s32 %v3293, %v3295
        %v3297 = vrot.slane %v3289, %v3296
        %v3299 = vunpack.c.l.s4 1934713408
        %v3300 = vunpack.c.0.s8 %v3299
        %v3301 = vlaneseq
        %v3302 = vshrl.u32 %v3301, 7
        %v3303 = vsub.s32 %v3300, %v3302
        %v3304 = vrot.slane %v3290, %v3303
        %v3305 = vcombine.low %v3272, %v3288
        %v3306 = vcombine.high %v3272, %v3288
        %v3308 = vunpack.c.l.s4 1934713408
        %v3309 = vunpack.c.0.s8 %v3308
        %v3310 = vlaneseq
        %v3311 = vshrl.u32 %v3310, 7
        %v3312 = vsub.s32 %v3309, %v3311
        %v3313 = vrot.slane %v3305, %v3312
        %v3315 = vunpack.c.l.s4 1934713408
        %v3316 = vunpack.c.0.s8 %v3315
        %v3317 = vlaneseq
        %v3318 = vshrl.u32 %v3317, 7
        %v3319 = vsub.s32 %v3316, %v3318
        %v3320 = vrot.slane %v3306, %v3319
        %v3321 = vcombine.high %v3297, 0.0
        %v3322 = vcombine.high %v3304, 0.0
        %v3323 = vcombine.high %v3313, 0.0
        %v3324 = vcombine.high %v3320, 0.0
        %v3325 = vcombine.low %v3229, %v3236
        %v3327 = vunpack.c.l.s4 1983009808
        %v3328 = vunpack.c.0.s8 %v3327
        %v3329 = vlaneseq
        %v3330 = vshrl.u32 %v3329, 7
        %v3331 = vsub.s32 %v3328, %v3330
        %v3332 = vrot.slane %v3325, %v3331
        %v3333 = vcombine.low %v3253, %v3254
        %v3335 = vunpack.c.l.s4 1983009808
        %v3336 = vunpack.c.0.s8 %v3335
        %v3337 = vlaneseq
        %v3338 = vshrl.u32 %v3337, 7
        %v3339 = vsub.s32 %v3336, %v3338
        %v3340 = vrot.slane %v3333, %v3339
        %v3341 = vcombine.low %v3245, %v3252
        %v3343 = vunpack.c.l.s4 1983009808
        %v3344 = vunpack.c.0.s8 %v3343
        %v3345 = vlaneseq
        %v3346 = vshrl.u32 %v3345, 7
        %v3347 = vsub.s32 %v3344, %v3346
        %v3348 = vrot.slane %v3341, %v3347
        %v3349 = vcombine.low %v3255, %v3256
        %v3351 = vunpack.c.l.s4 1983009808
        %v3352 = vunpack.c.0.s8 %v3351
        %v3353 = vlaneseq
        %v3354 = vshrl.u32 %v3353, 7
        %v3355 = vsub.s32 %v3352, %v3354
        %v3356 = vrot.slane %v3349, %v3355
        %v3357 = vcombine.low %v3332, %v3340
        %v3358 = vcombine.high %v3332, %v3340
        %v3360 = vunpack.c.l.s4 1934713408
        %v3361 = vunpack.c.0.s8 %v3360
        %v3362 = vlaneseq
        %v3363 = vshrl.u32 %v3362, 7
        %v3364 = vsub.s32 %v3361, %v3363
        %v3365 = vrot.slane %v3357, %v3364
        %v3367 = vunpack.c.l.s4 1934713408
        %v3368 = vunpack.c.0.s8 %v3367
        %v3369 = vlaneseq
        %v3370 = vshrl.u32 %v3369, 7
        %v3371 = vsub.s32 %v3368, %v3370
        %v3372 = vrot.slane %v3358, %v3371
        %v3373 = vcombine.low %v3348, %v3356
        %v3374 = vcombine.high %v3348, %v3356
        %v3376 = vunpack.c.l.s4 1934713408
        %v3377 = vunpack.c.0.s8 %v3376
        %v3378 = vlaneseq
        %v3379 = vshrl.u32 %v3378, 7
        %v3380 = vsub.s32 %v3377, %v3379
        %v3381 = vrot.slane %v3373, %v3380
        %v3383 = vunpack.c.l.s4 1934713408
        %v3384 = vunpack.c.0.s8 %v3383
        %v3385 = vlaneseq
        %v3386 = vshrl.u32 %v3385, 7
        %v3387 = vsub.s32 %v3384, %v3386
        %v3388 = vrot.slane %v3374, %v3387
        %v3389 = vcombine.low %v3365, %v3381
        %v3390 = vcombine.high %v3365, %v3381
        %v3391 = vcombine.low %v3372, %v3388
        %v3392 = vcombine.high %v3372, %v3388
        %v3393 = vcombine.low %v3297, %v3304
        %v3395 = vunpack.c.l.s4 1983009808
        %v3396 = vunpack.c.0.s8 %v3395
        %v3397 = vlaneseq
        %v3398 = vshrl.u32 %v3397, 7
        %v3399 = vsub.s32 %v3396, %v3398
        %v3400 = vrot.slane %v3393, %v3399
        %v3401 = vcombine.low %v3321, %v3322
        %v3403 = vunpack.c.l.s4 1983009808
        %v3404 = vunpack.c.0.s8 %v3403
        %v3405 = vlaneseq
        %v3406 = vshrl.u32 %v3405, 7
        %v3407 = vsub.s32 %v3404, %v3406
        %v3408 = vrot.slane %v3401, %v3407
        %v3409 = vcombine.low %v3313, %v3320
        %v3411 = vunpack.c.l.s4 1983009808
        %v3412 = vunpack.c.0.s8 %v3411
        %v3413 = vlaneseq
        %v3414 = vshrl.u32 %v3413, 7
        %v3415 = vsub.s32 %v3412, %v3414
        %v3416 = vrot.slane %v3409, %v3415
        %v3417 = vcombine.low %v3323, %v3324
        %v3419 = vunpack.c.l.s4 1983009808
        %v3420 = vunpack.c.0.s8 %v3419
        %v3421 = vlaneseq
        %v3422 = vshrl.u32 %v3421, 7
        %v3423 = vsub.s32 %v3420, %v3422
        %v3424 = vrot.slane %v3417, %v3423
        %v3425 = vcombine.low %v3400, %v3408
        %v3426 = vcombine.high %v3400, %v3408
        %v3428 = vunpack.c.l.s4 1934713408
        %v3429 = vunpack.c.0.s8 %v3428
        %v3430 = vlaneseq
        %v3431 = vshrl.u32 %v3430, 7
        %v3432 = vsub.s32 %v3429, %v3431
        %v3433 = vrot.slane %v3425, %v3432
        %v3435 = vunpack.c.l.s4 1934713408
        %v3436 = vunpack.c.0.s8 %v3435
        %v3437 = vlaneseq
        %v3438 = vshrl.u32 %v3437, 7
        %v3439 = vsub.s32 %v3436, %v3438
        %v3440 = vrot.slane %v3426, %v3439
        %v3441 = vcombine.low %v3416, %v3424
        %v3442 = vcombine.high %v3416, %v3424
        %v3444 = vunpack.c.l.s4 1934713408
        %v3445 = vunpack.c.0.s8 %v3444
        %v3446 = vlaneseq
        %v3447 = vshrl.u32 %v3446, 7
        %v3448 = vsub.s32 %v3445, %v3447
        %v3449 = vrot.slane %v3441, %v3448
        %v3451 = vunpack.c.l.s4 1934713408
        %v3452 = vunpack.c.0.s8 %v3451
        %v3453 = vlaneseq
        %v3454 = vshrl.u32 %v3453, 7
        %v3455 = vsub.s32 %v3452, %v3454
        %v3456 = vrot.slane %v3442, %v3455
        %v3457 = vcombine.low %v3433, %v3449
        %v3458 = vcombine.high %v3433, %v3449
        %v3459 = vcombine.low %v3440, %v3456
        %v3460 = vcombine.high %v3440, %v3456
        %v3461 = vpack.c.bf16 %v3457, %v3389
        %v3462 = vpack.c.bf16 %v3458, %v3390
        %v3463 = vpack.c.bf16 %v3459, %v3391
        %v3464 = vpack.c.bf16 %v3460, %v3392
        %v3466 = vsel %vm1815, %v2869, 0
        %v3469 = vsel %vm1815, %v3165, 0
        %3471 = vmatprep.subr.bf16.mxu0 0
        %3472 = vmatpush1.bf16.xpose.msra.mxu0 0
        %3473 = vmatprep.subr.bf16.mxu0 0
        %3474 = vmatpush1.bf16.xpose.msra.mxu0 0
        %3475 = vmatprep.subr.bf16.mxu0 0
        %3476 = vmatpush1.bf16.xpose.msra.mxu0 0
        %3477 = vmatprep.subr.bf16.mxu0 0
        %3478 = vmatpush1.bf16.xpose.msra.mxu0 0
        %3479 = vmatprep.subr.bf16.mxu0 0
        %3480 = vmatpush1.bf16.xpose.msra.mxu0 0
        %3481 = vmatprep.subr.bf16.mxu0 0
        %3482 = vmatpush1.bf16.xpose.msra.mxu0 0
        %3483 = vmatprep.subr.bf16.mxu0 0
        %3484 = vmatpush1.bf16.xpose.msra.mxu0 0
        %3485 = vmatprep.subr.bf16.mxu0 0
        %3486 = vmatpush1.bf16.xpose.msra.mxu0 %v3469
        %3487 = vmatprep.subr.bf16.mxu0 0
        %3488 = vmatpush2.bf16.xpose.msra.mxu0 0
        %3489 = vmatprep.subr.bf16.mxu0 0
        %3490 = vmatpush2.bf16.xpose.msra.mxu0 0
        %3491 = vmatprep.subr.bf16.mxu0 0
        %3492 = vmatpush2.bf16.xpose.msra.mxu0 0
        %3493 = vmatprep.subr.bf16.mxu0 0
        %3494 = vmatpush2.bf16.xpose.msra.mxu0 0
        %3495 = vmatprep.subr.bf16.mxu0 0
        %3496 = vmatpush2.bf16.xpose.msra.mxu0 0
        %3497 = vmatprep.subr.bf16.mxu0 0
        %3498 = vmatpush2.bf16.xpose.msra.mxu0 0
        %3499 = vmatprep.subr.bf16.mxu0 0
        %3500 = vmatpush2.bf16.xpose.msra.mxu0 0
        %3501 = vmatprep.subr.bf16.mxu0 0
        %3502 = vmatpush2.bf16.xpose.msra.mxu0 0
        %3503 = vmatprep.mubr.bf16.mxu0 0
        %3504 = vmatmul.mubr.bf16.gmra.mxu0 %v3466
        %v3505 = vpop.f32.mrf.mxu0
        %v3506 = vadd.f32 0.0, %v3505
        %v3507 = vpop.f32.mrf.mxu0
        %v3508 = vpop.f32.mrf.mxu0
        %v3509 = vadd.f32 0.0, %v3508
        %v3510 = vpop.f32.mrf.mxu0
        %3511 = vdwg.mxu0
        %v3513 = vsel %vm1815, %v2870, 0
        %v3516 = vsel %vm1815, %v3166, 0
        %3518 = vmatprep.subr.bf16.mxu0 0
        %3519 = vmatpush1.bf16.xpose.msra.mxu0 0
        %3520 = vmatprep.subr.bf16.mxu0 0
        %3521 = vmatpush1.bf16.xpose.msra.mxu0 0
        %3522 = vmatprep.subr.bf16.mxu0 0
        %3523 = vmatpush1.bf16.xpose.msra.mxu0 0
        %3524 = vmatprep.subr.bf16.mxu0 0
        %3525 = vmatpush1.bf16.xpose.msra.mxu0 0
        %3526 = vmatprep.subr.bf16.mxu0 0
        %3527 = vmatpush1.bf16.xpose.msra.mxu0 0
        %3528 = vmatprep.subr.bf16.mxu0 0
        %3529 = vmatpush1.bf16.xpose.msra.mxu0 0
        %3530 = vmatprep.subr.bf16.mxu0 0
        %3531 = vmatpush1.bf16.xpose.msra.mxu0 0
        %3532 = vmatprep.subr.bf16.mxu0 0
        %3533 = vmatpush1.bf16.xpose.msra.mxu0 %v3516
        %3534 = vmatprep.subr.bf16.mxu0 0
        %3535 = vmatpush2.bf16.xpose.msra.mxu0 0
        %3536 = vmatprep.subr.bf16.mxu0 0
        %3537 = vmatpush2.bf16.xpose.msra.mxu0 0
        %3538 = vmatprep.subr.bf16.mxu0 0
        %3539 = vmatpush2.bf16.xpose.msra.mxu0 0
        %3540 = vmatprep.subr.bf16.mxu0 0
        %3541 = vmatpush2.bf16.xpose.msra.mxu0 0
        %3542 = vmatprep.subr.bf16.mxu0 0
        %3543 = vmatpush2.bf16.xpose.msra.mxu0 0
        %3544 = vmatprep.subr.bf16.mxu0 0
        %3545 = vmatpush2.bf16.xpose.msra.mxu0 0
        %3546 = vmatprep.subr.bf16.mxu0 0
        %3547 = vmatpush2.bf16.xpose.msra.mxu0 0
        %3548 = vmatprep.subr.bf16.mxu0 0
        %3549 = vmatpush2.bf16.xpose.msra.mxu0 0
        %3550 = vmatprep.mubr.bf16.mxu0 0
        %3551 = vmatmul.mubr.bf16.gmra.mxu0 %v3513
        %v3552 = vpop.f32.mrf.mxu0
        %v3553 = vadd.f32 0.0, %v3552
        %v3554 = vpop.f32.mrf.mxu0
        %v3555 = vpop.f32.mrf.mxu0
        %v3556 = vadd.f32 0.0, %v3555
        %v3557 = vpop.f32.mrf.mxu0
        %3558 = vdwg.mxu0
        %v3560 = vsel %vm1815, %v2871, 0
        %v3563 = vsel %vm1815, %v3167, 0
        %3565 = vmatprep.subr.bf16.mxu0 0
        %3566 = vmatpush1.bf16.xpose.msra.mxu0 0
        %3567 = vmatprep.subr.bf16.mxu0 0
        %3568 = vmatpush1.bf16.xpose.msra.mxu0 0
        %3569 = vmatprep.subr.bf16.mxu0 0
        %3570 = vmatpush1.bf16.xpose.msra.mxu0 0
        %3571 = vmatprep.subr.bf16.mxu0 0
        %3572 = vmatpush1.bf16.xpose.msra.mxu0 0
        %3573 = vmatprep.subr.bf16.mxu0 0
        %3574 = vmatpush1.bf16.xpose.msra.mxu0 0
        %3575 = vmatprep.subr.bf16.mxu0 0
        %3576 = vmatpush1.bf16.xpose.msra.mxu0 0
        %3577 = vmatprep.subr.bf16.mxu0 0
        %3578 = vmatpush1.bf16.xpose.msra.mxu0 0
        %3579 = vmatprep.subr.bf16.mxu0 0
        %3580 = vmatpush1.bf16.xpose.msra.mxu0 %v3563
        %3581 = vmatprep.subr.bf16.mxu0 0
        %3582 = vmatpush2.bf16.xpose.msra.mxu0 0
        %3583 = vmatprep.subr.bf16.mxu0 0
        %3584 = vmatpush2.bf16.xpose.msra.mxu0 0
        %3585 = vmatprep.subr.bf16.mxu0 0
        %3586 = vmatpush2.bf16.xpose.msra.mxu0 0
        %3587 = vmatprep.subr.bf16.mxu0 0
        %3588 = vmatpush2.bf16.xpose.msra.mxu0 0
        %3589 = vmatprep.subr.bf16.mxu0 0
        %3590 = vmatpush2.bf16.xpose.msra.mxu0 0
        %3591 = vmatprep.subr.bf16.mxu0 0
        %3592 = vmatpush2.bf16.xpose.msra.mxu0 0
        %3593 = vmatprep.subr.bf16.mxu0 0
        %3594 = vmatpush2.bf16.xpose.msra.mxu0 0
        %3595 = vmatprep.subr.bf16.mxu0 0
        %3596 = vmatpush2.bf16.xpose.msra.mxu0 0
        %3597 = vmatprep.mubr.bf16.mxu0 0
        %3598 = vmatmul.mubr.bf16.gmra.mxu0 %v3560
        %v3599 = vpop.f32.mrf.mxu0
        %v3600 = vadd.f32 0.0, %v3599
        %v3601 = vpop.f32.mrf.mxu0
        %v3602 = vpop.f32.mrf.mxu0
        %v3603 = vadd.f32 0.0, %v3602
        %v3604 = vpop.f32.mrf.mxu0
        %3605 = vdwg.mxu0
        %v3607 = vsel %vm1815, %v2872, 0
        %v3610 = vsel %vm1815, %v3168, 0
        %3612 = vmatprep.subr.bf16.mxu0 0
        %3613 = vmatpush1.bf16.xpose.msra.mxu0 0
        %3614 = vmatprep.subr.bf16.mxu0 0
        %3615 = vmatpush1.bf16.xpose.msra.mxu0 0
        %3616 = vmatprep.subr.bf16.mxu0 0
        %3617 = vmatpush1.bf16.xpose.msra.mxu0 0
        %3618 = vmatprep.subr.bf16.mxu0 0
        %3619 = vmatpush1.bf16.xpose.msra.mxu0 0
        %3620 = vmatprep.subr.bf16.mxu0 0
        %3621 = vmatpush1.bf16.xpose.msra.mxu0 0
        %3622 = vmatprep.subr.bf16.mxu0 0
        %3623 = vmatpush1.bf16.xpose.msra.mxu0 0
        %3624 = vmatprep.subr.bf16.mxu0 0
        %3625 = vmatpush1.bf16.xpose.msra.mxu0 0
        %3626 = vmatprep.subr.bf16.mxu0 0
        %3627 = vmatpush1.bf16.xpose.msra.mxu0 %v3610
        %3628 = vmatprep.subr.bf16.mxu0 0
        %3629 = vmatpush2.bf16.xpose.msra.mxu0 0
        %3630 = vmatprep.subr.bf16.mxu0 0
        %3631 = vmatpush2.bf16.xpose.msra.mxu0 0
        %3632 = vmatprep.subr.bf16.mxu0 0
        %3633 = vmatpush2.bf16.xpose.msra.mxu0 0
        %3634 = vmatprep.subr.bf16.mxu0 0
        %3635 = vmatpush2.bf16.xpose.msra.mxu0 0
        %3636 = vmatprep.subr.bf16.mxu0 0
        %3637 = vmatpush2.bf16.xpose.msra.mxu0 0
        %3638 = vmatprep.subr.bf16.mxu0 0
        %3639 = vmatpush2.bf16.xpose.msra.mxu0 0
        %3640 = vmatprep.subr.bf16.mxu0 0
        %3641 = vmatpush2.bf16.xpose.msra.mxu0 0
        %3642 = vmatprep.subr.bf16.mxu0 0
        %3643 = vmatpush2.bf16.xpose.msra.mxu0 0
        %3644 = vmatprep.mubr.bf16.mxu0 0
        %3645 = vmatmul.mubr.bf16.gmra.mxu0 %v3607
        %v3646 = vpop.f32.mrf.mxu0
        %v3647 = vadd.f32 0.0, %v3646
        %v3648 = vpop.f32.mrf.mxu0
        %v3649 = vpop.f32.mrf.mxu0
        %v3650 = vadd.f32 0.0, %v3649
        %v3651 = vpop.f32.mrf.mxu0
        %3652 = vdwg.mxu0
        %v3653 = vsel %vm2004, %v3506, -inf
        %3654 = vmax.xlane.f32.xlu0 %v3653
        %v3655 = vpop.xlane.xlu0 %3654
        %v3656 = vsel %vm2004, %v3509, -inf
        %3657 = vmax.xlane.f32.xlu0 %v3656
        %v3658 = vpop.xlane.xlu0 %3657
        %v3659 = vsel %vm2004, %v3553, -inf
        %3660 = vmax.xlane.f32.xlu0 %v3659
        %v3661 = vpop.xlane.xlu0 %3660
        %v3662 = vsel %vm2004, %v3556, -inf
        %3663 = vmax.xlane.f32.xlu0 %v3662
        %v3664 = vpop.xlane.xlu0 %3663
        %v3665 = vsel %vm2004, %v3600, -inf
        %3666 = vmax.xlane.f32.xlu0 %v3665
        %v3667 = vpop.xlane.xlu0 %3666
        %v3668 = vsel %vm2004, %v3603, -inf
        %3669 = vmax.xlane.f32.xlu0 %v3668
        %v3670 = vpop.xlane.xlu0 %3669
        %v3671 = vsel %vm2004, %v3647, -inf
        %3672 = vmax.xlane.f32.xlu0 %v3671
        %v3673 = vpop.xlane.xlu0 %3672
        %v3674 = vsel %vm2004, %v3650, -inf
        %3675 = vmax.xlane.f32.xlu0 %v3674
        %v3676 = vpop.xlane.xlu0 %3675
        %v3677 = vsub.f32 %v3506, %v3655
        %v3678 = vsub.f32 %v3509, %v3658
        %v3679 = vsub.f32 %v3553, %v3661
        %v3680 = vsub.f32 %v3556, %v3664
        %v3681 = vsub.f32 %v3600, %v3667
        %v3682 = vsub.f32 %v3603, %v3670
        %v3683 = vsub.f32 %v3647, %v3673
        %v3684 = vsub.f32 %v3650, %v3676
        %v3685 = vmul.f32 %v3677, 1.442695
        %v3686 = vpow.pop %v3685
        %v3687 = vmul.f32 %v3678, 1.442695
        %v3688 = vpow.pop %v3687
        %v3689 = vmul.f32 %v3679, 1.442695
        %v3690 = vpow.pop %v3689
        %v3691 = vmul.f32 %v3680, 1.442695
        %v3692 = vpow.pop %v3691
        %v3693 = vmul.f32 %v3681, 1.442695
        %v3694 = vpow.pop %v3693
        %v3695 = vmul.f32 %v3682, 1.442695
        %v3696 = vpow.pop %v3695
        %v3697 = vmul.f32 %v3683, 1.442695
        %v3698 = vpow.pop %v3697
        %v3699 = vmul.f32 %v3684, 1.442695
        %v3700 = vpow.pop %v3699
        %v3701 = vsel %vm2004, %v3686, 0.0
        %3702 = vadd.xlane.f32.xlu0 %v3701
        %v3703 = vpop.xlane.xlu0 %3702
        %v3704 = vsel %vm2004, %v3688, 0.0
        %3705 = vadd.xlane.f32.xlu0 %v3704
        %v3706 = vpop.xlane.xlu0 %3705
        %v3707 = vsel %vm2004, %v3690, 0.0
        %3708 = vadd.xlane.f32.xlu0 %v3707
        %v3709 = vpop.xlane.xlu0 %3708
        %v3710 = vsel %vm2004, %v3692, 0.0
        %3711 = vadd.xlane.f32.xlu0 %v3710
        %v3712 = vpop.xlane.xlu0 %3711
        %v3713 = vsel %vm2004, %v3694, 0.0
        %3714 = vadd.xlane.f32.xlu0 %v3713
        %v3715 = vpop.xlane.xlu0 %3714
        %v3716 = vsel %vm2004, %v3696, 0.0
        %3717 = vadd.xlane.f32.xlu0 %v3716
        %v3718 = vpop.xlane.xlu0 %3717
        %v3719 = vsel %vm2004, %v3698, 0.0
        %3720 = vadd.xlane.f32.xlu0 %v3719
        %v3721 = vpop.xlane.xlu0 %3720
        %v3722 = vsel %vm2004, %v3700, 0.0
        %3723 = vadd.xlane.f32.xlu0 %v3722
        %v3724 = vpop.xlane.xlu0 %3723
        %v3725 = vrcp.pop %v3703
        %v3726 = vrcp.pop %v3706
        %v3727 = vrcp.pop %v3709
        %v3728 = vrcp.pop %v3712
        %v3729 = vrcp.pop %v3715
        %v3730 = vrcp.pop %v3718
        %v3731 = vrcp.pop %v3721
        %v3732 = vrcp.pop %v3724
        %v3733 = vmul.f32 %v3686, %v3725
        %v3734 = vmul.f32 %v3688, %v3726
        %v3735 = vmul.f32 %v3690, %v3727
        %v3736 = vmul.f32 %v3692, %v3728
        %v3737 = vmul.f32 %v3694, %v3729
        %v3738 = vmul.f32 %v3696, %v3730
        %v3739 = vmul.f32 %v3698, %v3731
        %v3740 = vmul.f32 %v3700, %v3732
        %v3741 = vpack.c.bf16 %v3734, %v3733
        %v3742 = vpack.c.bf16 %v3736, %v3735
        %v3743 = vpack.c.bf16 %v3738, %v3737
        %v3744 = vpack.c.bf16 %v3740, %v3739
        %v3746 = vsel %vm2004, %v3741, 0
        %3748 = vmatprep.subr.bf16.mxu0 0
        %3749 = vmatpush1.bf16.msra.mxu0 0
        %3750 = vmatprep.subr.bf16.mxu0 0
        %3751 = vmatpush1.bf16.msra.mxu0 0
        %3752 = vmatprep.subr.bf16.mxu0 0
        %3753 = vmatpush1.bf16.msra.mxu0 0
        %3754 = vmatprep.subr.bf16.mxu0 0
        %3755 = vmatpush1.bf16.msra.mxu0 0
        %3756 = vmatprep.subr.bf16.mxu0 0
        %3757 = vmatpush1.bf16.msra.mxu0 0
        %3758 = vmatprep.subr.bf16.mxu0 0
        %3759 = vmatpush1.bf16.msra.mxu0 0
        %3760 = vmatprep.subr.bf16.mxu0 0
        %3761 = vmatpush1.bf16.msra.mxu0 0
        %3762 = vmatprep.subr.bf16.mxu0 0
        %3763 = vmatpush1.bf16.msra.mxu0 %v3461
        %3764 = vmatprep.subr.bf16.mxu0 0
        %3765 = vmatpush2.bf16.msra.mxu0 0
        %3766 = vmatprep.subr.bf16.mxu0 0
        %3767 = vmatpush2.bf16.msra.mxu0 0
        %3768 = vmatprep.subr.bf16.mxu0 0
        %3769 = vmatpush2.bf16.msra.mxu0 0
        %3770 = vmatprep.subr.bf16.mxu0 0
        %3771 = vmatpush2.bf16.msra.mxu0 0
        %3772 = vmatprep.subr.bf16.mxu0 0
        %3773 = vmatpush2.bf16.msra.mxu0 0
        %3774 = vmatprep.subr.bf16.mxu0 0
        %3775 = vmatpush2.bf16.msra.mxu0 0
        %3776 = vmatprep.subr.bf16.mxu0 0
        %3777 = vmatpush2.bf16.msra.mxu0 0
        %3778 = vmatprep.subr.bf16.mxu0 0
        %3779 = vmatpush2.bf16.msra.mxu0 0
        %3780 = vmatprep.mubr.bf16.mxu0 0
        %3781 = vmatmul.mubr.bf16.gmra.mxu0 %v3746
        %v3782 = vpop.f32.mrf.mxu0
        %v3783 = vadd.f32 0.0, %v3782
        %v3784 = vpop.f32.mrf.mxu0
        %v3785 = vpop.f32.mrf.mxu0
        %v3786 = vadd.f32 0.0, %v3785
        %v3787 = vpop.f32.mrf.mxu0
        %3788 = vdwg.mxu0
        %v3790 = vsel %vm2004, %v3742, 0
        %3792 = vmatprep.subr.bf16.mxu0 0
        %3793 = vmatpush1.bf16.msra.mxu0 0
        %3794 = vmatprep.subr.bf16.mxu0 0
        %3795 = vmatpush1.bf16.msra.mxu0 0
        %3796 = vmatprep.subr.bf16.mxu0 0
        %3797 = vmatpush1.bf16.msra.mxu0 0
        %3798 = vmatprep.subr.bf16.mxu0 0
        %3799 = vmatpush1.bf16.msra.mxu0 0
        %3800 = vmatprep.subr.bf16.mxu0 0
        %3801 = vmatpush1.bf16.msra.mxu0 0
        %3802 = vmatprep.subr.bf16.mxu0 0
        %3803 = vmatpush1.bf16.msra.mxu0 0
        %3804 = vmatprep.subr.bf16.mxu0 0
        %3805 = vmatpush1.bf16.msra.mxu0 0
        %3806 = vmatprep.subr.bf16.mxu0 0
        %3807 = vmatpush1.bf16.msra.mxu0 %v3462
        %3808 = vmatprep.subr.bf16.mxu0 0
        %3809 = vmatpush2.bf16.msra.mxu0 0
        %3810 = vmatprep.subr.bf16.mxu0 0
        %3811 = vmatpush2.bf16.msra.mxu0 0
        %3812 = vmatprep.subr.bf16.mxu0 0
        %3813 = vmatpush2.bf16.msra.mxu0 0
        %3814 = vmatprep.subr.bf16.mxu0 0
        %3815 = vmatpush2.bf16.msra.mxu0 0
        %3816 = vmatprep.subr.bf16.mxu0 0
        %3817 = vmatpush2.bf16.msra.mxu0 0
        %3818 = vmatprep.subr.bf16.mxu0 0
        %3819 = vmatpush2.bf16.msra.mxu0 0
        %3820 = vmatprep.subr.bf16.mxu0 0
        %3821 = vmatpush2.bf16.msra.mxu0 0
        %3822 = vmatprep.subr.bf16.mxu0 0
        %3823 = vmatpush2.bf16.msra.mxu0 0
        %3824 = vmatprep.mubr.bf16.mxu0 0
        %3825 = vmatmul.mubr.bf16.gmra.mxu0 %v3790
        %v3826 = vpop.f32.mrf.mxu0
        %v3827 = vadd.f32 0.0, %v3826
        %v3828 = vpop.f32.mrf.mxu0
        %v3829 = vpop.f32.mrf.mxu0
        %v3830 = vadd.f32 0.0, %v3829
        %v3831 = vpop.f32.mrf.mxu0
        %3832 = vdwg.mxu0
        %v3834 = vsel %vm2004, %v3743, 0
        %3836 = vmatprep.subr.bf16.mxu0 0
        %3837 = vmatpush1.bf16.msra.mxu0 0
        %3838 = vmatprep.subr.bf16.mxu0 0
        %3839 = vmatpush1.bf16.msra.mxu0 0
        %3840 = vmatprep.subr.bf16.mxu0 0
        %3841 = vmatpush1.bf16.msra.mxu0 0
        %3842 = vmatprep.subr.bf16.mxu0 0
        %3843 = vmatpush1.bf16.msra.mxu0 0
        %3844 = vmatprep.subr.bf16.mxu0 0
        %3845 = vmatpush1.bf16.msra.mxu0 0
        %3846 = vmatprep.subr.bf16.mxu0 0
        %3847 = vmatpush1.bf16.msra.mxu0 0
        %3848 = vmatprep.subr.bf16.mxu0 0
        %3849 = vmatpush1.bf16.msra.mxu0 0
        %3850 = vmatprep.subr.bf16.mxu0 0
        %3851 = vmatpush1.bf16.msra.mxu0 %v3463
        %3852 = vmatprep.subr.bf16.mxu0 0
        %3853 = vmatpush2.bf16.msra.mxu0 0
        %3854 = vmatprep.subr.bf16.mxu0 0
        %3855 = vmatpush2.bf16.msra.mxu0 0
        %3856 = vmatprep.subr.bf16.mxu0 0
        %3857 = vmatpush2.bf16.msra.mxu0 0
        %3858 = vmatprep.subr.bf16.mxu0 0
        %3859 = vmatpush2.bf16.msra.mxu0 0
        %3860 = vmatprep.subr.bf16.mxu0 0
        %3861 = vmatpush2.bf16.msra.mxu0 0
        %3862 = vmatprep.subr.bf16.mxu0 0
        %3863 = vmatpush2.bf16.msra.mxu0 0
        %3864 = vmatprep.subr.bf16.mxu0 0
        %3865 = vmatpush2.bf16.msra.mxu0 0
        %3866 = vmatprep.subr.bf16.mxu0 0
        %3867 = vmatpush2.bf16.msra.mxu0 0
        %3868 = vmatprep.mubr.bf16.mxu0 0
        %3869 = vmatmul.mubr.bf16.gmra.mxu0 %v3834
        %v3870 = vpop.f32.mrf.mxu0
        %v3871 = vadd.f32 0.0, %v3870
        %v3872 = vpop.f32.mrf.mxu0
        %v3873 = vpop.f32.mrf.mxu0
        %v3874 = vadd.f32 0.0, %v3873
        %v3875 = vpop.f32.mrf.mxu0
        %3876 = vdwg.mxu0
        %v3878 = vsel %vm2004, %v3744, 0
        %3880 = vmatprep.subr.bf16.mxu0 0
        %3881 = vmatpush1.bf16.msra.mxu0 0
        %3882 = vmatprep.subr.bf16.mxu0 0
        %3883 = vmatpush1.bf16.msra.mxu0 0
        %3884 = vmatprep.subr.bf16.mxu0 0
        %3885 = vmatpush1.bf16.msra.mxu0 0
        %3886 = vmatprep.subr.bf16.mxu0 0
        %3887 = vmatpush1.bf16.msra.mxu0 0
        %3888 = vmatprep.subr.bf16.mxu0 0
        %3889 = vmatpush1.bf16.msra.mxu0 0
        %3890 = vmatprep.subr.bf16.mxu0 0
        %3891 = vmatpush1.bf16.msra.mxu0 0
        %3892 = vmatprep.subr.bf16.mxu0 0
        %3893 = vmatpush1.bf16.msra.mxu0 0
        %3894 = vmatprep.subr.bf16.mxu0 0
        %3895 = vmatpush1.bf16.msra.mxu0 %v3464
        %3896 = vmatprep.subr.bf16.mxu0 0
        %3897 = vmatpush2.bf16.msra.mxu0 0
        %3898 = vmatprep.subr.bf16.mxu0 0
        %3899 = vmatpush2.bf16.msra.mxu0 0
        %3900 = vmatprep.subr.bf16.mxu0 0
        %3901 = vmatpush2.bf16.msra.mxu0 0
        %3902 = vmatprep.subr.bf16.mxu0 0
        %3903 = vmatpush2.bf16.msra.mxu0 0
        %3904 = vmatprep.subr.bf16.mxu0 0
        %3905 = vmatpush2.bf16.msra.mxu0 0
        %3906 = vmatprep.subr.bf16.mxu0 0
        %3907 = vmatpush2.bf16.msra.mxu0 0
        %3908 = vmatprep.subr.bf16.mxu0 0
        %3909 = vmatpush2.bf16.msra.mxu0 0
        %3910 = vmatprep.subr.bf16.mxu0 0
        %3911 = vmatpush2.bf16.msra.mxu0 0
        %3912 = vmatprep.mubr.bf16.mxu0 0
        %3913 = vmatmul.mubr.bf16.gmra.mxu0 %v3878
        %v3914 = vpop.f32.mrf.mxu0
        %v3915 = vadd.f32 0.0, %v3914
        %v3916 = vpop.f32.mrf.mxu0
        %v3917 = vpop.f32.mrf.mxu0
        %v3918 = vadd.f32 0.0, %v3917
        %v3919 = vpop.f32.mrf.mxu0
        %3920 = vdwg.mxu0
        %v3921 = vcombine.low %v3783, %v3871
        %v3922 = vcombine.high %v3783, %v3871
        %v3924 = vunpack.c.l.s4 1983009808
        %v3925 = vunpack.c.0.s8 %v3924
        %v3926 = vlaneseq
        %v3927 = vshrl.u32 %v3926, 7
        %v3928 = vsub.s32 %v3925, %v3927
        %v3929 = vrot.slane %v3921, %v3928
        %v3931 = vunpack.c.l.s4 1983009808
        %v3932 = vunpack.c.0.s8 %v3931
        %v3933 = vlaneseq
        %v3934 = vshrl.u32 %v3933, 7
        %v3935 = vsub.s32 %v3932, %v3934
        %v3936 = vrot.slane %v3922, %v3935
        %v3937 = vcombine.low %v3827, %v3915
        %v3938 = vcombine.high %v3827, %v3915
        %v3940 = vunpack.c.l.s4 1983009808
        %v3941 = vunpack.c.0.s8 %v3940
        %v3942 = vlaneseq
        %v3943 = vshrl.u32 %v3942, 7
        %v3944 = vsub.s32 %v3941, %v3943
        %v3945 = vrot.slane %v3937, %v3944
        %v3947 = vunpack.c.l.s4 1983009808
        %v3948 = vunpack.c.0.s8 %v3947
        %v3949 = vlaneseq
        %v3950 = vshrl.u32 %v3949, 7
        %v3951 = vsub.s32 %v3948, %v3950
        %v3952 = vrot.slane %v3938, %v3951
        %v3953 = vcombine.low %v3929, %v3945
        %v3954 = vcombine.high %v3929, %v3945
        %v3956 = vunpack.c.l.s4 1934713408
        %v3957 = vunpack.c.0.s8 %v3956
        %v3958 = vlaneseq
        %v3959 = vshrl.u32 %v3958, 7
        %v3960 = vsub.s32 %v3957, %v3959
        %v3961 = vrot.slane %v3953, %v3960
        %v3963 = vunpack.c.l.s4 1934713408
        %v3964 = vunpack.c.0.s8 %v3963
        %v3965 = vlaneseq
        %v3966 = vshrl.u32 %v3965, 7
        %v3967 = vsub.s32 %v3964, %v3966
        %v3968 = vrot.slane %v3954, %v3967
        %v3969 = vcombine.low %v3936, %v3952
        %v3970 = vcombine.high %v3936, %v3952
        %v3972 = vunpack.c.l.s4 1934713408
        %v3973 = vunpack.c.0.s8 %v3972
        %v3974 = vlaneseq
        %v3975 = vshrl.u32 %v3974, 7
        %v3976 = vsub.s32 %v3973, %v3975
        %v3977 = vrot.slane %v3969, %v3976
        %v3979 = vunpack.c.l.s4 1934713408
        %v3980 = vunpack.c.0.s8 %v3979
        %v3981 = vlaneseq
        %v3982 = vshrl.u32 %v3981, 7
        %v3983 = vsub.s32 %v3980, %v3982
        %v3984 = vrot.slane %v3970, %v3983
        %v3985 = vcombine.high %v3961, 0.0
        %v3986 = vcombine.high %v3968, 0.0
        %v3987 = vcombine.high %v3977, 0.0
        %v3988 = vcombine.high %v3984, 0.0
        %v3989 = vcombine.low %v3786, %v3874
        %v3990 = vcombine.high %v3786, %v3874
        %v3992 = vunpack.c.l.s4 1983009808
        %v3993 = vunpack.c.0.s8 %v3992
        %v3994 = vlaneseq
        %v3995 = vshrl.u32 %v3994, 7
        %v3996 = vsub.s32 %v3993, %v3995
        %v3997 = vrot.slane %v3989, %v3996
        %v3999 = vunpack.c.l.s4 1983009808
        %v4000 = vunpack.c.0.s8 %v3999
        %v4001 = vlaneseq
        %v4002 = vshrl.u32 %v4001, 7
        %v4003 = vsub.s32 %v4000, %v4002
        %v4004 = vrot.slane %v3990, %v4003
        %v4005 = vcombine.low %v3830, %v3918
        %v4006 = vcombine.high %v3830, %v3918
        %v4008 = vunpack.c.l.s4 1983009808
        %v4009 = vunpack.c.0.s8 %v4008
        %v4010 = vlaneseq
        %v4011 = vshrl.u32 %v4010, 7
        %v4012 = vsub.s32 %v4009, %v4011
        %v4013 = vrot.slane %v4005, %v4012
        %v4015 = vunpack.c.l.s4 1983009808
        %v4016 = vunpack.c.0.s8 %v4015
        %v4017 = vlaneseq
        %v4018 = vshrl.u32 %v4017, 7
        %v4019 = vsub.s32 %v4016, %v4018
        %v4020 = vrot.slane %v4006, %v4019
        %v4021 = vcombine.low %v3997, %v4013
        %v4022 = vcombine.high %v3997, %v4013
        %v4024 = vunpack.c.l.s4 1934713408
        %v4025 = vunpack.c.0.s8 %v4024
        %v4026 = vlaneseq
        %v4027 = vshrl.u32 %v4026, 7
        %v4028 = vsub.s32 %v4025, %v4027
        %v4029 = vrot.slane %v4021, %v4028
        %v4031 = vunpack.c.l.s4 1934713408
        %v4032 = vunpack.c.0.s8 %v4031
        %v4033 = vlaneseq
        %v4034 = vshrl.u32 %v4033, 7
        %v4035 = vsub.s32 %v4032, %v4034
        %v4036 = vrot.slane %v4022, %v4035
        %v4037 = vcombine.low %v4004, %v4020
        %v4038 = vcombine.high %v4004, %v4020
        %v4040 = vunpack.c.l.s4 1934713408
        %v4041 = vunpack.c.0.s8 %v4040
        %v4042 = vlaneseq
        %v4043 = vshrl.u32 %v4042, 7
        %v4044 = vsub.s32 %v4041, %v4043
        %v4045 = vrot.slane %v4037, %v4044
        %v4047 = vunpack.c.l.s4 1934713408
        %v4048 = vunpack.c.0.s8 %v4047
        %v4049 = vlaneseq
        %v4050 = vshrl.u32 %v4049, 7
        %v4051 = vsub.s32 %v4048, %v4050
        %v4052 = vrot.slane %v4038, %v4051
        %v4053 = vcombine.high %v4029, 0.0
        %v4054 = vcombine.high %v4036, 0.0
        %v4055 = vcombine.high %v4045, 0.0
        %v4056 = vcombine.high %v4052, 0.0
        %v4057 = vcombine.low %v3961, %v3968
        %v4059 = vunpack.c.l.s4 1983009808
        %v4060 = vunpack.c.0.s8 %v4059
        %v4061 = vlaneseq
        %v4062 = vshrl.u32 %v4061, 7
        %v4063 = vsub.s32 %v4060, %v4062
        %v4064 = vrot.slane %v4057, %v4063
        %v4065 = vcombine.low %v3985, %v3986
        %v4067 = vunpack.c.l.s4 1983009808
        %v4068 = vunpack.c.0.s8 %v4067
        %v4069 = vlaneseq
        %v4070 = vshrl.u32 %v4069, 7
        %v4071 = vsub.s32 %v4068, %v4070
        %v4072 = vrot.slane %v4065, %v4071
        %v4073 = vcombine.low %v3977, %v3984
        %v4075 = vunpack.c.l.s4 1983009808
        %v4076 = vunpack.c.0.s8 %v4075
        %v4077 = vlaneseq
        %v4078 = vshrl.u32 %v4077, 7
        %v4079 = vsub.s32 %v4076, %v4078
        %v4080 = vrot.slane %v4073, %v4079
        %v4081 = vcombine.low %v3987, %v3988
        %v4083 = vunpack.c.l.s4 1983009808
        %v4084 = vunpack.c.0.s8 %v4083
        %v4085 = vlaneseq
        %v4086 = vshrl.u32 %v4085, 7
        %v4087 = vsub.s32 %v4084, %v4086
        %v4088 = vrot.slane %v4081, %v4087
        %v4089 = vcombine.low %v4064, %v4072
        %v4090 = vcombine.high %v4064, %v4072
        %v4092 = vunpack.c.l.s4 1934713408
        %v4093 = vunpack.c.0.s8 %v4092
        %v4094 = vlaneseq
        %v4095 = vshrl.u32 %v4094, 7
        %v4096 = vsub.s32 %v4093, %v4095
        %v4097 = vrot.slane %v4089, %v4096
        %v4099 = vunpack.c.l.s4 1934713408
        %v4100 = vunpack.c.0.s8 %v4099
        %v4101 = vlaneseq
        %v4102 = vshrl.u32 %v4101, 7
        %v4103 = vsub.s32 %v4100, %v4102
        %v4104 = vrot.slane %v4090, %v4103
        %v4105 = vcombine.low %v4080, %v4088
        %v4106 = vcombine.high %v4080, %v4088
        %v4108 = vunpack.c.l.s4 1934713408
        %v4109 = vunpack.c.0.s8 %v4108
        %v4110 = vlaneseq
        %v4111 = vshrl.u32 %v4110, 7
        %v4112 = vsub.s32 %v4109, %v4111
        %v4113 = vrot.slane %v4105, %v4112
        %v4115 = vunpack.c.l.s4 1934713408
        %v4116 = vunpack.c.0.s8 %v4115
        %v4117 = vlaneseq
        %v4118 = vshrl.u32 %v4117, 7
        %v4119 = vsub.s32 %v4116, %v4118
        %v4120 = vrot.slane %v4106, %v4119
        %v4121 = vcombine.low %v4097, %v4113
        %v4122 = vcombine.high %v4097, %v4113
        %v4123 = vcombine.low %v4104, %v4120
        %v4124 = vcombine.high %v4104, %v4120
        %v4125 = vcombine.low %v4029, %v4036
        %v4127 = vunpack.c.l.s4 1983009808
        %v4128 = vunpack.c.0.s8 %v4127
        %v4129 = vlaneseq
        %v4130 = vshrl.u32 %v4129, 7
        %v4131 = vsub.s32 %v4128, %v4130
        %v4132 = vrot.slane %v4125, %v4131
        %v4133 = vcombine.low %v4053, %v4054
        %v4135 = vunpack.c.l.s4 1983009808
        %v4136 = vunpack.c.0.s8 %v4135
        %v4137 = vlaneseq
        %v4138 = vshrl.u32 %v4137, 7
        %v4139 = vsub.s32 %v4136, %v4138
        %v4140 = vrot.slane %v4133, %v4139
        %v4141 = vcombine.low %v4045, %v4052
        %v4143 = vunpack.c.l.s4 1983009808
        %v4144 = vunpack.c.0.s8 %v4143
        %v4145 = vlaneseq
        %v4146 = vshrl.u32 %v4145, 7
        %v4147 = vsub.s32 %v4144, %v4146
        %v4148 = vrot.slane %v4141, %v4147
        %v4149 = vcombine.low %v4055, %v4056
        %v4151 = vunpack.c.l.s4 1983009808
        %v4152 = vunpack.c.0.s8 %v4151
        %v4153 = vlaneseq
        %v4154 = vshrl.u32 %v4153, 7
        %v4155 = vsub.s32 %v4152, %v4154
        %v4156 = vrot.slane %v4149, %v4155
        %v4157 = vcombine.low %v4132, %v4140
        %v4158 = vcombine.high %v4132, %v4140
        %v4160 = vunpack.c.l.s4 1934713408
        %v4161 = vunpack.c.0.s8 %v4160
        %v4162 = vlaneseq
        %v4163 = vshrl.u32 %v4162, 7
        %v4164 = vsub.s32 %v4161, %v4163
        %v4165 = vrot.slane %v4157, %v4164
        %v4167 = vunpack.c.l.s4 1934713408
        %v4168 = vunpack.c.0.s8 %v4167
        %v4169 = vlaneseq
        %v4170 = vshrl.u32 %v4169, 7
        %v4171 = vsub.s32 %v4168, %v4170
        %v4172 = vrot.slane %v4158, %v4171
        %v4173 = vcombine.low %v4148, %v4156
        %v4174 = vcombine.high %v4148, %v4156
        %v4176 = vunpack.c.l.s4 1934713408
        %v4177 = vunpack.c.0.s8 %v4176
        %v4178 = vlaneseq
        %v4179 = vshrl.u32 %v4178, 7
        %v4180 = vsub.s32 %v4177, %v4179
        %v4181 = vrot.slane %v4173, %v4180
        %v4183 = vunpack.c.l.s4 1934713408
        %v4184 = vunpack.c.0.s8 %v4183
        %v4185 = vlaneseq
        %v4186 = vshrl.u32 %v4185, 7
        %v4187 = vsub.s32 %v4184, %v4186
        %v4188 = vrot.slane %v4174, %v4187
        %v4189 = vcombine.low %v4165, %v4181
        %v4190 = vcombine.high %v4165, %v4181
        %v4191 = vcombine.low %v4172, %v4188
        %v4192 = vcombine.high %v4172, %v4188
        %4195 = vrot.lane.b32.xlu0 %v4122, 32
        %v4196 = vpop.permute.xlu0 %4195
        %4197 = vrot.lane.b32.xlu0 %v4190, 32
        %v4198 = vpop.permute.xlu0 %4197
        %4203 = vrot.lane.b32.xlu0 %v4123, 64
        %v4204 = vpop.permute.xlu0 %4203
        %4205 = vrot.lane.b32.xlu0 %v4191, 64
        %v4206 = vpop.permute.xlu0 %4205
        %4211 = vrot.lane.b32.xlu0 %v4124, 96
        %v4212 = vpop.permute.xlu0 %4211
        %4213 = vrot.lane.b32.xlu0 %v4192, 96
        %v4214 = vpop.permute.xlu0 %4213
        %v4217 = vsel %vm1815, %v4121, %v4196
        %v4218 = vsel %vm1815, %v4189, %v4198
        %v4219 = vsel %vm2571, %v4217, %v4204
        %v4220 = vsel %vm2571, %v4218, %v4206
        %v4221 = vsel %vm2574, %v4219, %v4212
        %v4222 = vsel %vm2574, %v4220, %v4214
        %v4223 = vpack.c.bf16 %v2576, %v2575
        %v4224 = vpack.c.bf16 %v4222, %v4221
        %v4225 = vld [vmem:[%s472] sm:$0xf]
        %v4226 = vld [vmem:[%s472 + $0x4] sm:$0xf]
        %v4227 = vld [vmem:[%s472 + $0x8] sm:$0xf]
        %v4228 = vld [vmem:[%s472 + $0xc] sm:$0xf]
        %v4229 = vld [vmem:[%s472 + $0x10] sm:$0xf]
        %v4230 = vld [vmem:[%s472 + $0x14] sm:$0xf]
        %v4231 = vld [vmem:[%s472 + $0x18] sm:$0xf]
        %v4232 = vld [vmem:[%s472 + $0x1c] sm:$0xf]
        %v4233 = vld [vmem:[%s472 + $0x20] sm:$0xf]
        %v4234 = vld [vmem:[%s472 + $0x24] sm:$0xf]
        %v4235 = vld [vmem:[%s472 + $0x28] sm:$0xf]
        %v4236 = vld [vmem:[%s472 + $0x2c] sm:$0xf]
        %v4237 = vld [vmem:[%s472 + $0x30] sm:$0xf]
        %v4238 = vld [vmem:[%s472 + $0x34] sm:$0xf]
        %v4239 = vld [vmem:[%s472 + $0x38] sm:$0xf]
        %v4240 = vld [vmem:[%s472 + $0x3c] sm:$0xf]
        %v4241 = vlaneseq
        %v4242 = vshrl.u32 %v4241, 7
        %v4243 = vsub.s32 4, %v4242
        %v4244 = vrot.slane %v584, %v4243
        %v4261 = vunpack.c.l.b16 %v4225
        %v4262 = vunpack.c.l.b16 %v4226
        %v4263 = vunpack.c.l.b16 %v4227
        %v4264 = vunpack.c.l.b16 %v4228
        %v4265 = vunpack.c.l.b16 %v4229
        %v4266 = vunpack.c.l.b16 %v4230
        %v4267 = vunpack.c.l.b16 %v4231
        %v4268 = vunpack.c.l.b16 %v4232
        %v4269 = vunpack.c.l.b16 %v4233
        %v4270 = vunpack.c.l.b16 %v4234
        %v4271 = vunpack.c.l.b16 %v4235
        %v4272 = vunpack.c.l.b16 %v4236
        %v4273 = vunpack.c.l.b16 %v4237
        %v4274 = vunpack.c.l.b16 %v4238
        %v4275 = vunpack.c.l.b16 %v4239
        %v4276 = vunpack.c.l.b16 %v4240
        %v4277 = vpack.c.b16 %v4262, %v4261
        %v4278 = vpack.c.b16 %v4264, %v4263
        %v4279 = vpack.c.b16 %v4266, %v4265
        %v4280 = vpack.c.b16 %v4268, %v4267
        %v4281 = vpack.c.b16 %v4270, %v4269
        %v4282 = vpack.c.b16 %v4272, %v4271
        %v4283 = vpack.c.b16 %v4274, %v4273
        %v4284 = vpack.c.b16 %v4276, %v4275
        %4293 = vmatprep.subr.bf16.mxu0 0
        %4294 = vmatpush1.bf16.msra.mxu0 %v4284
        %4295 = vmatprep.subr.bf16.mxu0 0
        %4296 = vmatpush1.bf16.msra.mxu0 %v4283
        %4297 = vmatprep.subr.bf16.mxu0 0
        %4298 = vmatpush1.bf16.msra.mxu0 %v4282
        %4299 = vmatprep.subr.bf16.mxu0 0
        %4300 = vmatpush1.bf16.msra.mxu0 %v4281
        %4301 = vmatprep.subr.bf16.mxu0 0
        %4302 = vmatpush1.bf16.msra.mxu0 %v4280
        %4303 = vmatprep.subr.bf16.mxu0 0
        %4304 = vmatpush1.bf16.msra.mxu0 %v4279
        %4305 = vmatprep.subr.bf16.mxu0 0
        %4306 = vmatpush1.bf16.msra.mxu0 %v4278
        %4307 = vmatprep.subr.bf16.mxu0 0
        %4308 = vmatpush1.bf16.msra.mxu0 %v4277
        %4309 = vmatprep.subr.bf16.mxu0 0
        %4310 = vmatpush2.bf16.msra.mxu0 0
        %4311 = vmatprep.subr.bf16.mxu0 0
        %4312 = vmatpush2.bf16.msra.mxu0 0
        %4313 = vmatprep.subr.bf16.mxu0 0
        %4314 = vmatpush2.bf16.msra.mxu0 0
        %4315 = vmatprep.subr.bf16.mxu0 0
        %4316 = vmatpush2.bf16.msra.mxu0 0
        %4317 = vmatprep.subr.bf16.mxu0 0
        %4318 = vmatpush2.bf16.msra.mxu0 0
        %4319 = vmatprep.subr.bf16.mxu0 0
        %4320 = vmatpush2.bf16.msra.mxu0 0
        %4321 = vmatprep.subr.bf16.mxu0 0
        %4322 = vmatpush2.bf16.msra.mxu0 0
        %4323 = vmatprep.subr.bf16.mxu0 0
        %4324 = vmatpush2.bf16.msra.mxu0 0
        %4325 = vmatprep.mubr.bf16.mxu0 0
        %4326 = vmatmul.mubr.bf16.gmra.mxu0 %v4223
        %v4327 = vpop.f32.mrf.mxu0
        %v4328 = vadd.f32 %v4244, %v4327
        %v4329 = vpop.f32.mrf.mxu0
        %v4330 = vpop.f32.mrf.mxu0
        %v4331 = vadd.f32 %v4244, %v4330
        %v4332 = vpop.f32.mrf.mxu0
        %4333 = vmatprep.mubr.bf16.mxu0 0
        %4334 = vmatmul.mubr.bf16.gmra.mxu0 %v4224
        %v4335 = vpop.f32.mrf.mxu0
        %v4336 = vadd.f32 %v4244, %v4335
        %v4337 = vpop.f32.mrf.mxu0
        %v4338 = vpop.f32.mrf.mxu0
        %v4339 = vadd.f32 %v4244, %v4338
        %v4340 = vpop.f32.mrf.mxu0
        %4341 = vdwg.mxu0
        %v4342 = vadd.f32 %v580, %v4328
        %v4343 = vadd.f32 %v581, %v4331
        %v4344 = vadd.f32 %v582, %v4336
        %v4345 = vadd.f32 %v583, %v4339
        %4346 = vadd.xlane.f32.xlu0 %v4342
        %v4347 = vpop.xlane.xlu0 %4346
        %4348 = vadd.xlane.f32.xlu0 %v4343
        %v4349 = vpop.xlane.xlu0 %4348
        %4350 = vadd.xlane.f32.xlu0 %v4344
        %v4351 = vpop.xlane.xlu0 %4350
        %4352 = vadd.xlane.f32.xlu0 %v4345
        %v4353 = vpop.xlane.xlu0 %4352
        %v4354 = vmul.f32 %v4347, %v593
        %v4355 = vmul.f32 %v4349, %v593
        %v4356 = vmul.f32 %v4351, %v593
        %v4357 = vmul.f32 %v4353, %v593
        %v4358 = vsub.f32 %v4342, %v4354
        %v4359 = vsub.f32 %v4343, %v4355
        %v4360 = vsub.f32 %v4344, %v4356
        %v4361 = vsub.f32 %v4345, %v4357
        %v4362 = vmul.f32 %v4358, %v4358
        %v4363 = vmul.f32 %v4359, %v4359
        %v4364 = vmul.f32 %v4360, %v4360
        %v4365 = vmul.f32 %v4361, %v4361
        %4366 = vadd.xlane.f32.xlu0 %v4362
        %v4367 = vpop.xlane.xlu0 %4366
        %4368 = vadd.xlane.f32.xlu0 %v4363
        %v4369 = vpop.xlane.xlu0 %4368
        %4370 = vadd.xlane.f32.xlu0 %v4364
        %v4371 = vpop.xlane.xlu0 %4370
        %4372 = vadd.xlane.f32.xlu0 %v4365
        %v4373 = vpop.xlane.xlu0 %4372
        %v4374 = vmul.f32 %v4367, %v593
        %v4375 = vmul.f32 %v4369, %v593
        %v4376 = vmul.f32 %v4371, %v593
        %v4377 = vmul.f32 %v4373, %v593
        %v4378 = vadd.f32 %v4374, 1e-05
        %v4379 = vadd.f32 %v4375, 1e-05
        %v4380 = vadd.f32 %v4376, 1e-05
        %v4381 = vadd.f32 %v4377, 1e-05
        %v4382 = vrsqrt.pop %v4378
        %v4383 = vrsqrt.pop %v4379
        %v4384 = vrsqrt.pop %v4380
        %v4385 = vrsqrt.pop %v4381
        %v4386 = vmul.f32 %v4358, %v4382
        %v4387 = vmul.f32 %v4359, %v4383
        %v4388 = vmul.f32 %v4360, %v4384
        %v4389 = vmul.f32 %v4361, %v4385
        %v4390 = vlaneseq
        %v4391 = vshrl.u32 %v4390, 7
        %v4392 = vsub.s32 2, %v4391
        %v4393 = vrot.slane %v584, %v4392
        %v4394 = vmul.f32 %v4386, %v4393
        %v4395 = vmul.f32 %v4387, %v4393
        %v4396 = vmul.f32 %v4388, %v4393
        %v4397 = vmul.f32 %v4389, %v4393
        %v4398 = vlaneseq
        %v4399 = vshrl.u32 %v4398, 7
        %v4400 = vsub.s32 3, %v4399
        %v4401 = vrot.slane %v584, %v4400
        %v4402 = vadd.f32 %v4394, %v4401
        %v4403 = vadd.f32 %v4395, %v4401
        %v4404 = vadd.f32 %v4396, %v4401
        %v4405 = vadd.f32 %v4397, %v4401
        %v4406 = vpack.c.bf16 %v4403, %v4402
        %v4407 = vpack.c.bf16 %v4405, %v4404
        %v4408 = vld [vmem:[%s481] sm:$0xff]
        %v4409 = vld [vmem:[%s481 + $0x8] sm:$0xff]
        %v4410 = vld [vmem:[%s481 + $0x10] sm:$0xff]
        %v4411 = vld [vmem:[%s481 + $0x18] sm:$0xff]
        %v4412 = vld [vmem:[%s481 + $0x20] sm:$0xff]
        %v4413 = vld [vmem:[%s481 + $0x28] sm:$0xff]
        %v4414 = vld [vmem:[%s481 + $0x30] sm:$0xff]
        %v4415 = vld [vmem:[%s481 + $0x38] sm:$0xff]
        %v4416 = vld [vmem:[%s481 + $0x40] sm:$0xff]
        %v4417 = vld [vmem:[%s481 + $0x48] sm:$0xff]
        %v4418 = vld [vmem:[%s481 + $0x50] sm:$0xff]
        %v4419 = vld [vmem:[%s481 + $0x58] sm:$0xff]
        %v4420 = vld [vmem:[%s481 + $0x60] sm:$0xff]
        %v4421 = vld [vmem:[%s481 + $0x68] sm:$0xff]
        %v4422 = vld [vmem:[%s481 + $0x70] sm:$0xff]
        %v4423 = vld [vmem:[%s481 + $0x78] sm:$0xff]
        %v4424 = vld [vmem:[%s565] sm:$0x3]
        %v4426 = vlaneseq
        %v4427 = vshrl.u32 %v4426, 7
        %v4428 = vsub.s32 0, %v4427
        %v4429 = vrot.slane %v4424, %v4428
        %v4430 = vlaneseq
        %v4431 = vshrl.u32 %v4430, 7
        %v4432 = vsub.s32 1, %v4431
        %v4433 = vrot.slane %v4424, %v4432
        %v4452 = vunpack.c.l.b16 %v4408
        %v4453 = vunpack.c.h.b16 %v4408
        %v4454 = vunpack.c.l.b16 %v4409
        %v4455 = vunpack.c.h.b16 %v4409
        %v4456 = vunpack.c.l.b16 %v4410
        %v4457 = vunpack.c.h.b16 %v4410
        %v4458 = vunpack.c.l.b16 %v4411
        %v4459 = vunpack.c.h.b16 %v4411
        %v4460 = vunpack.c.l.b16 %v4412
        %v4461 = vunpack.c.h.b16 %v4412
        %v4462 = vunpack.c.l.b16 %v4413
        %v4463 = vunpack.c.h.b16 %v4413
        %v4464 = vunpack.c.l.b16 %v4414
        %v4465 = vunpack.c.h.b16 %v4414
        %v4466 = vunpack.c.l.b16 %v4415
        %v4467 = vunpack.c.h.b16 %v4415
        %v4468 = vunpack.c.l.b16 %v4416
        %v4469 = vunpack.c.h.b16 %v4416
        %v4470 = vunpack.c.l.b16 %v4417
        %v4471 = vunpack.c.h.b16 %v4417
        %v4472 = vunpack.c.l.b16 %v4418
        %v4473 = vunpack.c.h.b16 %v4418
        %v4474 = vunpack.c.l.b16 %v4419
        %v4475 = vunpack.c.h.b16 %v4419
        %v4476 = vunpack.c.l.b16 %v4420
        %v4477 = vunpack.c.h.b16 %v4420
        %v4478 = vunpack.c.l.b16 %v4421
        %v4479 = vunpack.c.h.b16 %v4421
        %v4480 = vunpack.c.l.b16 %v4422
        %v4481 = vunpack.c.h.b16 %v4422
        %v4482 = vunpack.c.l.b16 %v4423
        %v4483 = vunpack.c.h.b16 %v4423
        %v4484 = vpack.c.b16 %v4454, %v4452
        %v4485 = vpack.c.b16 %v4455, %v4453
        %v4486 = vpack.c.b16 %v4458, %v4456
        %v4487 = vpack.c.b16 %v4459, %v4457
        %v4488 = vpack.c.b16 %v4462, %v4460
        %v4489 = vpack.c.b16 %v4463, %v4461
        %v4490 = vpack.c.b16 %v4466, %v4464
        %v4491 = vpack.c.b16 %v4467, %v4465
        %v4492 = vpack.c.b16 %v4470, %v4468
        %v4493 = vpack.c.b16 %v4471, %v4469
        %v4494 = vpack.c.b16 %v4474, %v4472
        %v4495 = vpack.c.b16 %v4475, %v4473
        %v4496 = vpack.c.b16 %v4478, %v4476
        %v4497 = vpack.c.b16 %v4479, %v4477
        %v4498 = vpack.c.b16 %v4482, %v4480
        %v4499 = vpack.c.b16 %v4483, %v4481
        %4516 = vmatprep.subr.bf16.mxu0 %v4499
        %4517 = vmatpush1.bf16.msra.mxu0 %v4498
        %4518 = vmatprep.subr.bf16.mxu0 %v4497
        %4519 = vmatpush1.bf16.msra.mxu0 %v4496
        %4520 = vmatprep.subr.bf16.mxu0 %v4495
        %4521 = vmatpush1.bf16.msra.mxu0 %v4494
        %4522 = vmatprep.subr.bf16.mxu0 %v4493
        %4523 = vmatpush1.bf16.msra.mxu0 %v4492
        %4524 = vmatprep.subr.bf16.mxu0 %v4491
        %4525 = vmatpush1.bf16.msra.mxu0 %v4490
        %4526 = vmatprep.subr.bf16.mxu0 %v4489
        %4527 = vmatpush1.bf16.msra.mxu0 %v4488
        %4528 = vmatprep.subr.bf16.mxu0 %v4487
        %4529 = vmatpush1.bf16.msra.mxu0 %v4486
        %4530 = vmatprep.subr.bf16.mxu0 %v4485
        %4531 = vmatpush1.bf16.msra.mxu0 %v4484
        %4532 = vmatprep.subr.bf16.mxu0 0
        %4533 = vmatpush2.bf16.msra.mxu0 0
        %4534 = vmatprep.subr.bf16.mxu0 0
        %4535 = vmatpush2.bf16.msra.mxu0 0
        %4536 = vmatprep.subr.bf16.mxu0 0
        %4537 = vmatpush2.bf16.msra.mxu0 0
        %4538 = vmatprep.subr.bf16.mxu0 0
        %4539 = vmatpush2.bf16.msra.mxu0 0
        %4540 = vmatprep.subr.bf16.mxu0 0
        %4541 = vmatpush2.bf16.msra.mxu0 0
        %4542 = vmatprep.subr.bf16.mxu0 0
        %4543 = vmatpush2.bf16.msra.mxu0 0
        %4544 = vmatprep.subr.bf16.mxu0 0
        %4545 = vmatpush2.bf16.msra.mxu0 0
        %4546 = vmatprep.subr.bf16.mxu0 0
        %4547 = vmatpush2.bf16.msra.mxu0 0
        %4548 = vmatprep.mubr.bf16.mxu0 0
        %4549 = vmatmul.mubr.bf16.gmra.mxu0 %v4406
        %v4550 = vpop.f32.mrf.mxu0
        %v4551 = vadd.f32 %v4429, %v4550
        %v4552 = vpop.f32.mrf.mxu0
        %v4553 = vadd.f32 %v4433, %v4552
        %v4554 = vpop.f32.mrf.mxu0
        %v4555 = vadd.f32 %v4429, %v4554
        %v4556 = vpop.f32.mrf.mxu0
        %v4557 = vadd.f32 %v4433, %v4556
        %4558 = vmatprep.mubr.bf16.mxu0 0
        %4559 = vmatmul.mubr.bf16.gmra.mxu0 %v4407
        %v4560 = vpop.f32.mrf.mxu0
        %v4561 = vadd.f32 %v4429, %v4560
        %v4562 = vpop.f32.mrf.mxu0
        %v4563 = vadd.f32 %v4433, %v4562
        %v4564 = vpop.f32.mrf.mxu0
        %v4565 = vadd.f32 %v4429, %v4564
        %v4566 = vpop.f32.mrf.mxu0
        %v4567 = vadd.f32 %v4433, %v4566
        %4568 = vdwg.mxu0
        %v4569 = vmul.f32 %v4551, 1.702
        %v4570 = vmul.f32 %v4553, 1.702
        %v4571 = vmul.f32 %v4555, 1.702
        %v4572 = vmul.f32 %v4557, 1.702
        %v4573 = vmul.f32 %v4561, 1.702
        %v4574 = vmul.f32 %v4563, 1.702
        %v4575 = vmul.f32 %v4565, 1.702
        %v4576 = vmul.f32 %v4567, 1.702
        %v4577 = vxor.u32 %v4569, 2147483648
        %v4578 = vxor.u32 %v4570, 2147483648
        %v4579 = vxor.u32 %v4571, 2147483648
        %v4580 = vxor.u32 %v4572, 2147483648
        %v4581 = vxor.u32 %v4573, 2147483648
        %v4582 = vxor.u32 %v4574, 2147483648
        %v4583 = vxor.u32 %v4575, 2147483648
        %v4584 = vxor.u32 %v4576, 2147483648
        %v4585 = vmul.f32 %v4577, 1.442695
        %v4586 = vpow.pop %v4585
        %v4587 = vmul.f32 %v4578, 1.442695
        %v4588 = vpow.pop %v4587
        %v4589 = vmul.f32 %v4579, 1.442695
        %v4590 = vpow.pop %v4589
        %v4591 = vmul.f32 %v4580, 1.442695
        %v4592 = vpow.pop %v4591
        %v4593 = vmul.f32 %v4581, 1.442695
        %v4594 = vpow.pop %v4593
        %v4595 = vmul.f32 %v4582, 1.442695
        %v4596 = vpow.pop %v4595
        %v4597 = vmul.f32 %v4583, 1.442695
        %v4598 = vpow.pop %v4597
        %v4599 = vmul.f32 %v4584, 1.442695
        %v4600 = vpow.pop %v4599
        %v4601 = vadd.f32 %v4586, 1.0
        %v4602 = vadd.f32 %v4588, 1.0
        %v4603 = vadd.f32 %v4590, 1.0
        %v4604 = vadd.f32 %v4592, 1.0
        %v4605 = vadd.f32 %v4594, 1.0
        %v4606 = vadd.f32 %v4596, 1.0
        %v4607 = vadd.f32 %v4598, 1.0
        %v4608 = vadd.f32 %v4600, 1.0
        %v4609 = vrcp.pop %v4601
        %v4610 = vmul.f32 1.0, %v4609
        %v4611 = vrcp.pop %v4602
        %v4612 = vmul.f32 1.0, %v4611
        %v4613 = vrcp.pop %v4603
        %v4614 = vmul.f32 1.0, %v4613
        %v4615 = vrcp.pop %v4604
        %v4616 = vmul.f32 1.0, %v4615
        %v4617 = vrcp.pop %v4605
        %v4618 = vmul.f32 1.0, %v4617
        %v4619 = vrcp.pop %v4606
        %v4620 = vmul.f32 1.0, %v4619
        %v4621 = vrcp.pop %v4607
        %v4622 = vmul.f32 1.0, %v4621
        %v4623 = vrcp.pop %v4608
        %v4624 = vmul.f32 1.0, %v4623
        %v4625 = vmul.f32 %v4551, %v4610
        %v4626 = vmul.f32 %v4553, %v4612
        %v4627 = vmul.f32 %v4555, %v4614
        %v4628 = vmul.f32 %v4557, %v4616
        %v4629 = vmul.f32 %v4561, %v4618
        %v4630 = vmul.f32 %v4563, %v4620
        %v4631 = vmul.f32 %v4565, %v4622
        %v4632 = vmul.f32 %v4567, %v4624
        %v4633 = vpack.c.bf16 %v4627, %v4625
        %v4634 = vpack.c.bf16 %v4628, %v4626
        %v4635 = vpack.c.bf16 %v4631, %v4629
        %v4636 = vpack.c.bf16 %v4632, %v4630
        %v4637 = vld [vmem:[%s490] sm:$0xf]
        %v4638 = vld [vmem:[%s490 + $0x4] sm:$0xf]
        %v4639 = vld [vmem:[%s490 + $0x8] sm:$0xf]
        %v4640 = vld [vmem:[%s490 + $0xc] sm:$0xf]
        %v4641 = vld [vmem:[%s490 + $0x10] sm:$0xf]
        %v4642 = vld [vmem:[%s490 + $0x14] sm:$0xf]
        %v4643 = vld [vmem:[%s490 + $0x18] sm:$0xf]
        %v4644 = vld [vmem:[%s490 + $0x1c] sm:$0xf]
        %v4645 = vld [vmem:[%s490 + $0x20] sm:$0xf]
        %v4646 = vld [vmem:[%s490 + $0x24] sm:$0xf]
        %v4647 = vld [vmem:[%s490 + $0x28] sm:$0xf]
        %v4648 = vld [vmem:[%s490 + $0x2c] sm:$0xf]
        %v4649 = vld [vmem:[%s490 + $0x30] sm:$0xf]
        %v4650 = vld [vmem:[%s490 + $0x34] sm:$0xf]
        %v4651 = vld [vmem:[%s490 + $0x38] sm:$0xf]
        %v4652 = vld [vmem:[%s490 + $0x3c] sm:$0xf]
        %v4653 = vld [vmem:[%s490 + $0x40] sm:$0xf]
        %v4654 = vld [vmem:[%s490 + $0x44] sm:$0xf]
        %v4655 = vld [vmem:[%s490 + $0x48] sm:$0xf]
        %v4656 = vld [vmem:[%s490 + $0x4c] sm:$0xf]
        %v4657 = vld [vmem:[%s490 + $0x50] sm:$0xf]
        %v4658 = vld [vmem:[%s490 + $0x54] sm:$0xf]
        %v4659 = vld [vmem:[%s490 + $0x58] sm:$0xf]
        %v4660 = vld [vmem:[%s490 + $0x5c] sm:$0xf]
        %v4661 = vld [vmem:[%s490 + $0x60] sm:$0xf]
        %v4662 = vld [vmem:[%s490 + $0x64] sm:$0xf]
        %v4663 = vld [vmem:[%s490 + $0x68] sm:$0xf]
        %v4664 = vld [vmem:[%s490 + $0x6c] sm:$0xf]
        %v4665 = vld [vmem:[%s490 + $0x70] sm:$0xf]
        %v4666 = vld [vmem:[%s490 + $0x74] sm:$0xf]
        %v4667 = vld [vmem:[%s490 + $0x78] sm:$0xf]
        %v4668 = vld [vmem:[%s490 + $0x7c] sm:$0xf]
        %v4701 = vunpack.c.l.b16 %v4637
        %v4702 = vunpack.c.l.b16 %v4638
        %v4703 = vunpack.c.l.b16 %v4639
        %v4704 = vunpack.c.l.b16 %v4640
        %v4705 = vunpack.c.l.b16 %v4641
        %v4706 = vunpack.c.l.b16 %v4642
        %v4707 = vunpack.c.l.b16 %v4643
        %v4708 = vunpack.c.l.b16 %v4644
        %v4709 = vunpack.c.l.b16 %v4645
        %v4710 = vunpack.c.l.b16 %v4646
        %v4711 = vunpack.c.l.b16 %v4647
        %v4712 = vunpack.c.l.b16 %v4648
        %v4713 = vunpack.c.l.b16 %v4649
        %v4714 = vunpack.c.l.b16 %v4650
        %v4715 = vunpack.c.l.b16 %v4651
        %v4716 = vunpack.c.l.b16 %v4652
        %v4717 = vunpack.c.l.b16 %v4653
        %v4718 = vunpack.c.l.b16 %v4654
        %v4719 = vunpack.c.l.b16 %v4655
        %v4720 = vunpack.c.l.b16 %v4656
        %v4721 = vunpack.c.l.b16 %v4657
        %v4722 = vunpack.c.l.b16 %v4658
        %v4723 = vunpack.c.l.b16 %v4659
        %v4724 = vunpack.c.l.b16 %v4660
        %v4725 = vunpack.c.l.b16 %v4661
        %v4726 = vunpack.c.l.b16 %v4662
        %v4727 = vunpack.c.l.b16 %v4663
        %v4728 = vunpack.c.l.b16 %v4664
        %v4729 = vunpack.c.l.b16 %v4665
        %v4730 = vunpack.c.l.b16 %v4666
        %v4731 = vunpack.c.l.b16 %v4667
        %v4732 = vunpack.c.l.b16 %v4668
        %v4733 = vpack.c.b16 %v4702, %v4701
        %v4734 = vpack.c.b16 %v4704, %v4703
        %v4735 = vpack.c.b16 %v4706, %v4705
        %v4736 = vpack.c.b16 %v4708, %v4707
        %v4737 = vpack.c.b16 %v4710, %v4709
        %v4738 = vpack.c.b16 %v4712, %v4711
        %v4739 = vpack.c.b16 %v4714, %v4713
        %v4740 = vpack.c.b16 %v4716, %v4715
        %v4741 = vpack.c.b16 %v4718, %v4717
        %v4742 = vpack.c.b16 %v4720, %v4719
        %v4743 = vpack.c.b16 %v4722, %v4721
        %v4744 = vpack.c.b16 %v4724, %v4723
        %v4745 = vpack.c.b16 %v4726, %v4725
        %v4746 = vpack.c.b16 %v4728, %v4727
        %v4747 = vpack.c.b16 %v4730, %v4729
        %v4748 = vpack.c.b16 %v4732, %v4731
        %4765 = vmatprep.subr.bf16.mxu0 0
        %4766 = vmatpush1.bf16.msra.mxu0 %v4740
        %4767 = vmatprep.subr.bf16.mxu0 0
        %4768 = vmatpush1.bf16.msra.mxu0 %v4739
        %4769 = vmatprep.subr.bf16.mxu0 0
        %4770 = vmatpush1.bf16.msra.mxu0 %v4738
        %4771 = vmatprep.subr.bf16.mxu0 0
        %4772 = vmatpush1.bf16.msra.mxu0 %v4737
        %4773 = vmatprep.subr.bf16.mxu0 0
        %4774 = vmatpush1.bf16.msra.mxu0 %v4736
        %4775 = vmatprep.subr.bf16.mxu0 0
        %4776 = vmatpush1.bf16.msra.mxu0 %v4735
        %4777 = vmatprep.subr.bf16.mxu0 0
        %4778 = vmatpush1.bf16.msra.mxu0 %v4734
        %4779 = vmatprep.subr.bf16.mxu0 0
        %4780 = vmatpush1.bf16.msra.mxu0 %v4733
        %4781 = vmatprep.subr.bf16.mxu0 0
        %4782 = vmatpush2.bf16.msra.mxu0 %v4748
        %4783 = vmatprep.subr.bf16.mxu0 0
        %4784 = vmatpush2.bf16.msra.mxu0 %v4747
        %4785 = vmatprep.subr.bf16.mxu0 0
        %4786 = vmatpush2.bf16.msra.mxu0 %v4746
        %4787 = vmatprep.subr.bf16.mxu0 0
        %4788 = vmatpush2.bf16.msra.mxu0 %v4745
        %4789 = vmatprep.subr.bf16.mxu0 0
        %4790 = vmatpush2.bf16.msra.mxu0 %v4744
        %4791 = vmatprep.subr.bf16.mxu0 0
        %4792 = vmatpush2.bf16.msra.mxu0 %v4743
        %4793 = vmatprep.subr.bf16.mxu0 0
        %4794 = vmatpush2.bf16.msra.mxu0 %v4742
        %4795 = vmatprep.subr.bf16.mxu0 0
        %4796 = vmatpush2.bf16.msra.mxu0 %v4741
        %4797 = vmatprep.mubr.bf16.mxu0 %v4634
        %4798 = vmatmul.mubr.bf16.gmra.mxu0 %v4633
        %v4799 = vpop.f32.mrf.mxu0
        %v4800 = vadd.f32 0.0, %v4799
        %v4801 = vpop.f32.mrf.mxu0
        %v4802 = vpop.f32.mrf.mxu0
        %v4803 = vadd.f32 0.0, %v4802
        %v4804 = vpop.f32.mrf.mxu0
        %4805 = vmatprep.mubr.bf16.mxu0 %v4636
        %4806 = vmatmul.mubr.bf16.gmra.mxu0 %v4635
        %v4807 = vpop.f32.mrf.mxu0
        %v4808 = vadd.f32 0.0, %v4807
        %v4809 = vpop.f32.mrf.mxu0
        %v4810 = vpop.f32.mrf.mxu0
        %v4811 = vadd.f32 0.0, %v4810
        %v4812 = vpop.f32.mrf.mxu0
        %4813 = vdwg.mxu0
        %v4814 = vadd.f32 %v4342, %v4800
        %v4815 = vadd.f32 %v4343, %v4803
        %v4816 = vadd.f32 %v4344, %v4808
        %v4817 = vadd.f32 %v4345, %v4811
        %v4818 = vlaneseq
        %v4819 = vshrl.u32 %v4818, 7
        %v4820 = vsub.s32 5, %v4819
        %v4821 = vrot.slane %v584, %v4820
        %v4822 = vadd.f32 %v4814, %v4821
        %v4823 = vadd.f32 %v4815, %v4821
        %v4824 = vadd.f32 %v4816, %v4821
        %v4825 = vadd.f32 %v4817, %v4821
        %4826 = vst [vmem:[#allocation2] sm:$0xff] %v4822
        %4827 = vst [vmem:[#allocation2 + $0x8] sm:$0xff] %v4823
        %4828 = vst [vmem:[#allocation2 + $0x10] sm:$0xff] %v4824
        %4829 = vst [vmem:[#allocation2 + $0x18] sm:$0xff] %v4825
        %4830 = vst [vmem:[%s560] sm:$0xff] %v4822
        %4831 = vst [vmem:[%s560 + $0x8] sm:$0xff] %v4823
        %4832 = vst [vmem:[%s560 + $0x10] sm:$0xff] %v4824
        %4833 = vst [vmem:[%s560 + $0x18] sm:$0xff] %v4825
        %s4834 = sand.u32 %s262, 1
        %s4835 = scalar_lea.sflag [#allocation5], %s4834
        %s4836 = sand.u32 %s262, 1
        %s4837 = smul.addr %s4836, 32
        %s4838 = scalar_lea.vmem [#allocation15], %s4837
        // Predicated region
        $region85: #{tpu_custom_call.1} parent=51 // pred_check
          %p4839 = pneg %p272
        $region86: #{tpu_custom_call.1} parent=51 // pred_check_branch
          %4841 = sbr.rel (%p4839) target = $region88
        $region87: #{tpu_custom_call.1} parent=51 // pred_region
          %s4842 = smul.u32 2, %s36
          %s4844 = ssub.s32 512, 512
          %4845 = vsyncadd %s4835, %s4844
          %s4846 = smul.addr %s4842, 2
          %s4847 = smul.addr %s37, 4
          %s4848 = sadd.s32 %s4846, %s4847
          %s4849 = smul.addr %s4848, 128
          %s4850 = scalar_lea.hbm %s8, %s4849
          %s4851 = sshll.u32 %s4838, 4
          %s4852 = int_to_ptr.vmem [resolvable:$true] %s4851
          %4857 = dma.vmem_to_hbm [thread:$0]  %s4852, 512, %s4850, %s4835, 128, 128, 8
        $region88: #{tpu_custom_call.1} parent=51 // pred_fallthru
          _
      $region52: #{tpu_custom_call.1} parent=5 // pred_fallthru
        _
      %p4858 = scmp.le.s32.totalorder 2, %s27
      // Predicated region
      $region89: #{tpu_custom_call.1} parent=5 // pred_check
        %p4859 = pneg %p4858
      $region90: #{tpu_custom_call.1} parent=5 // pred_check_branch
        %4861 = sbr.rel (%p4859) target = $region92
      $region91: #{tpu_custom_call.1} parent=5 // pred_region
        %s4862 = ssub.s32 %s27, 2
        // Predicated region
        $region93: #{tpu_custom_call.1} parent=91 // pred_check
          %p4863 = pneg %p278
        $region94: #{tpu_custom_call.1} parent=91 // pred_check_branch
          %4865 = sbr.rel (%p4863) target = $region96
        $region95: #{tpu_custom_call.1} parent=91 // pred_region
          %s4866 = sand.u32 %s263, 1
          %s4867 = scalar_lea.sflag [#allocation5], %s4866
          %s4868 = sand.u32 %s263, 1
          %s4869 = smul.addr %s4868, 32
          %s4870 = scalar_lea.vmem [#allocation15], %s4869
          %4871 = dma.done %s4867, 512
        $region96: #{tpu_custom_call.1} parent=91 // pred_fallthru
          _
      $region92: #{tpu_custom_call.1} parent=5 // pred_fallthru
        _
    $region6: #{tpu_custom_call.1} parent=1 // loop_footer
      %s31 = sadd.s32 1, %s27
    $region7: #{tpu_custom_call.1} parent=1 // loop_footer_branch
      %26 = sbr.rel target = $region3
    $region8: #{tpu_custom_call.1} parent=1 // loop_exit
      _
    %4872 = vsyncpa [#allocation4], 1
    %s4873 = scalar_lea.sflag [#allocation4], 1
    %4874 = vsyncpa %s4873, 1
    %4875 = vsyncpa [#allocation7], 1
    %s4876 = scalar_lea.sflag [#allocation7], 1
    %4877 = vsyncpa %s4876, 1
    %4878 = vsyncpa [#allocation10], 1
    %s4879 = scalar_lea.sflag [#allocation10], 1
    %4880 = vsyncpa %s4879, 1
    %4881 = vsyncpa [#allocation13], 1
    %s4882 = scalar_lea.sflag [#allocation13], 1
    %4883 = vsyncpa %s4882, 1
    %4884 = vsyncpa [#allocation5], 1
    %s4885 = scalar_lea.sflag [#allocation5], 1
    %4886 = vsyncpa %s4885, 1

</llo_original>
